<compile_context>
chip_gen: v6e
topology: v6e:2x2x1
jax: 0.10.0
libtpu: 0.0.40
codegen_flags: <defaults>
</compile_context>

<pallas_src>
import functools

import jax
import jax.numpy as jnp
import numpy as np
from jax.experimental import pallas as pl
from jax.experimental.pallas import tpu as pltpu


def _round_up(x, m):
    return ((x + m - 1) // m) * m


def _duet_kernel(qe_ref, de_ref,
                 wq_ref, bq_ref, wlq_ref, blq_ref,
                 wd0_ref, bd0_ref, wd1_ref, bd1_ref,
                 w0_ref, b0_ref, w1_ref, b1_ref,
                 out_ref, *, pool_q, pool_d):
    f32, bf16 = jnp.float32, jnp.bfloat16
    Lq, Bt, G = qe_ref.shape
    Ld = de_ref.shape[0]
    Hp = out_ref.shape[1]
    K = wq_ref.shape[0]
    lq_out = Lq - K + 1
    ld_out = Ld - K + 1
    n_pw = ld_out - pool_d + 1

    def conv_relu(x_ref, l_out, w_ref, b_ref):
        # Conv1d(G -> Hp, kernel K): one MXU matmul per tap, batch folded into M.
        # Tap slices are Ref slices on the leading (L) dim; (l_out, Bt, G) ->
        # (l_out*Bt, G) is a layout no-op because Bt is a multiple of 16.
        acc = jnp.dot(x_ref[0:l_out, :, :].reshape(l_out * Bt, G), w_ref[0],
                      preferred_element_type=f32)
        for k in range(1, K):
            acc = acc + jnp.dot(x_ref[k:k + l_out, :, :].reshape(l_out * Bt, G),
                                w_ref[k], preferred_element_type=f32)
        return jnp.maximum(acc + b_ref[...], 0.0).reshape(l_out, Bt, Hp)

    # ---- query branch: Conv1d + ReLU, MaxPool1d(pool_q) (-> length 1), Linear + ReLU
    q_conv = conv_relu(qe_ref, lq_out, wq_ref, bq_ref)            # (lq_out, Bt, Hp)
    q_pool = q_conv[0]
    for w in range(1, pool_q):
        q_pool = jnp.maximum(q_pool, q_conv[w])                   # (Bt, Hp)
    q_lin = jnp.maximum(
        jnp.dot(q_pool.astype(bf16), wlq_ref[...], preferred_element_type=f32)
        + blq_ref[...], 0.0)                                      # (Bt, Hp)

    # ---- doc branch: Conv1d + ReLU, MaxPool1d(pool_d, stride=1), Conv1d(k=1) + ReLU
    d_conv = conv_relu(de_ref, ld_out, wd0_ref, bd0_ref)          # (ld_out, Bt, Hp)
    d_pool = d_conv[0:n_pw]
    for w in range(1, pool_d):
        d_pool = jnp.maximum(d_pool, d_conv[w:w + n_pw])          # (n_pw, Bt, Hp)
    d1 = jnp.maximum(
        jnp.dot(d_pool.reshape(n_pw * Bt, Hp).astype(bf16), wd1_ref[...],
                preferred_element_type=f32)
        + bd1_ref[...], 0.0).reshape(n_pw, Bt, Hp)

    # ---- combine: q.unsqueeze * d, flatten, two Linear + ReLU
    # Flatten (t, h) along lanes (128-aligned pieces) so comb_linear_0 is a single
    # matmul with contraction depth n_pw * Hp.
    xcat = jnp.concatenate([q_lin * d1[t] for t in range(n_pw)], axis=1)  # (Bt, n_pw*Hp)
    y = jnp.maximum(
        jnp.dot(xcat.astype(bf16), w0_ref[...], preferred_element_type=f32)
        + b0_ref[...], 0.0)
    y = jnp.maximum(
        jnp.dot(y.astype(bf16), w1_ref[...], preferred_element_type=f32)
        + b1_ref[...], 0.0)
    out_ref[...] = y                                              # (Bt, Hp) lane-dense


def duet_v2_distributed(query_ids, doc_ids, params, *, pool_q, pool_d,
                        batch_tile=256):
    bf16, f32 = jnp.bfloat16, jnp.float32
    emb = params["embedding"]
    B, Lq = query_ids.shape
    Ld = doc_ids.shape[1]
    G = emb.shape[1]
    H = params["b_lq"].shape[1]
    K = params["w_cq"].shape[0]
    lq_out = Lq - K + 1
    assert lq_out // pool_q == 1, "query pooling must reduce to length 1"
    n_pw = (Ld - K + 1) - pool_d + 1
    assert params["w_comb0"].shape[0] == n_pw

    Hp = _round_up(H, 128)                              # lane-dense channel dim
    bt = _round_up(max(16, min(batch_tile, B)), 16)     # sublane-aligned batch tile
    B_pad = _round_up(B, bt)

    if B_pad != B:                                      # pad batch; padded rows sliced off
        query_ids = jnp.pad(query_ids, ((0, B_pad - B), (0, 0)))
        doc_ids = jnp.pad(doc_ids, ((0, B_pad - B), (0, 0)))

    # GloVe lookup (gather) + transpose to (L, B, G) bf16: the only data that streams.
    qe = jnp.transpose(emb[query_ids], (1, 0, 2)).astype(bf16)
    de = jnp.transpose(emb[doc_ids], (1, 0, 2)).astype(bf16)

    ph = Hp - H

    def pad_out(x):      # zero-pad trailing (out-channel) dim
        return jnp.pad(x, [(0, 0)] * (x.ndim - 1) + [(0, ph)])

    def pad_io(x):       # zero-pad last two (in/out channel) dims
        return jnp.pad(x, [(0, 0)] * (x.ndim - 2) + [(0, ph), (0, ph)])

    w_cq = pad_out(params["w_cq"]).astype(bf16)
    w_cd0 = pad_out(params["w_cd0"]).astype(bf16)
    w_lq = pad_io(params["w_lq"]).astype(bf16)
    w_cd1 = pad_io(params["w_cd1"]).astype(bf16)
    w_c0 = pad_io(params["w_comb0"]).reshape(n_pw * Hp, Hp).astype(bf16)
    w_c1 = pad_io(params["w_comb1"]).astype(bf16)
    b_cq = pad_out(params["b_cq"])
    b_lq = pad_out(params["b_lq"])
    b_cd0 = pad_out(params["b_cd0"])
    b_cd1 = pad_out(params["b_cd1"])
    b_c0 = pad_out(params["b_comb0"])
    b_c1 = pad_out(params["b_comb1"])

    kernel = functools.partial(_duet_kernel, pool_q=pool_q, pool_d=pool_d)

    def full(shape):
        return pl.BlockSpec(shape, lambda b, _n=len(shape): (0,) * _n)

    out = pl.pallas_call(
        kernel,
        out_shape=jax.ShapeDtypeStruct((B_pad, Hp), f32),
        grid=(B_pad // bt,),
        in_specs=[
            pl.BlockSpec((Lq, bt, G), lambda b: (0, b, 0)),
            pl.BlockSpec((Ld, bt, G), lambda b: (0, b, 0)),
            full((K, G, Hp)), full((1, Hp)),          # conv1d_query
            full((Hp, Hp)), full((1, Hp)),            # linear_query
            full((K, G, Hp)), full((1, Hp)),          # conv1d_doc_0
            full((Hp, Hp)), full((1, Hp)),            # conv1d_doc_1
            full((n_pw * Hp, Hp)), full((1, Hp)),     # comb_linear_0 (pre-flattened)
            full((Hp, Hp)), full((1, Hp)),            # comb_linear_1
        ],
        out_specs=pl.BlockSpec((bt, Hp), lambda b: (b, 0)),
        compiler_params=pltpu.CompilerParams(
            dimension_semantics=("parallel",)),
    )(qe, de, w_cq, b_cq, w_lq, b_lq, w_cd0, b_cd0, w_cd1, b_cd1,
      w_c0, b_c0, w_c1, b_c1)

    return out[:B, :H]


def duet_reference(query_ids, doc_ids, params, *, pool_q, pool_d):
    """Plain-JAX reference mirroring the PyTorch forward (eval mode), using the same
    bf16-operand / f32-accumulate matmul precision as the kernel."""
    bf16, f32 = jnp.bfloat16, jnp.float32
    emb = params["embedding"]
    qe = emb[query_ids].astype(bf16)
    de = emb[doc_ids].astype(bf16)
    K = params["w_cq"].shape[0]

    def conv(x, w, b):
        L = x.shape[1] - K + 1
        w = w.astype(bf16)
        out = sum(jnp.einsum("blg,gh->blh", x[:, k:k + L], w[k],
                             preferred_element_type=f32) for k in range(K))
        return out + b

    def lin(x, w, b):
        return jnp.einsum("...i,io->...o", x.astype(bf16), w.astype(bf16),
                          preferred_element_type=f32) + b

    q = jax.nn.relu(conv(qe, params["w_cq"], params["b_cq"]))
    q = jnp.max(q[:, :pool_q], axis=1)                           # (B, H)
    q = jax.nn.relu(lin(q, params["w_lq"], params["b_lq"]))

    d = jax.nn.relu(conv(de, params["w_cd0"], params["b_cd0"]))
    n_pw = d.shape[1] - pool_d + 1
    dp = d[:, :n_pw]
    for w in range(1, pool_d):
        dp = jnp.maximum(dp, d[:, w:w + n_pw])
    d1 = jax.nn.relu(lin(dp, params["w_cd1"], params["b_cd1"]))

    x = q[:, None, :] * d1                                       # (B, n_pw, H)
    y = jnp.einsum("bth,tho->bo", x.astype(bf16),
                   params["w_comb0"].astype(bf16),
                   preferred_element_type=f32) + params["b_comb0"]
    y = jax.nn.relu(y)
    y = jax.nn.relu(lin(y, params["w_comb1"], params["b_comb1"]))
    return y


def init_params(key, vocab_size, glove_dim, h_dim, n_pw, conv_k=3):
    keys = jax.random.split(key, 16)

    def u(k, shape, scale):
        return jax.random.uniform(k, shape, jnp.float32, -scale, scale)

    emb = u(keys[0], (vocab_size, glove_dim), 0.25)
    emb = emb.at[0].set(0.0)                       # padding_idx = 0 (GloVe pad row)
    return {
        "embedding": emb,
        "w_cq":   u(keys[1],  (conv_k, glove_dim, h_dim), 0.1),
        "b_cq":   u(keys[2],  (1, h_dim), 0.1),
        "w_lq":   u(keys[3],  (h_dim, h_dim), 0.1),
        "b_lq":   u(keys[4],  (1, h_dim), 0.1),
        "w_cd0":  u(keys[5],  (conv_k, glove_dim, h_dim), 0.1),
        "b_cd0":  u(keys[6],  (1, h_dim), 0.1),
        "w_cd1":  u(keys[7],  (h_dim, h_dim), 0.1),
        "b_cd1":  u(keys[8],  (1, h_dim), 0.1),
        "w_comb0": u(keys[9], (n_pw, h_dim, h_dim), 0.05),
        "b_comb0": u(keys[10], (1, h_dim), 0.1),
        "w_comb1": u(keys[11], (h_dim, h_dim), 0.1),
        "b_comb1": u(keys[12], (1, h_dim), 0.1),
    }


if __name__ == "__main__":
    # Small shapes consistent with the module.
    B = 32
    vocab_size = 64
    glove_dim = 16
    h_dim = 32
    max_q_len = 8
    max_d_len = 16
    pooling_size_query = max_q_len - 2          # -> pooled query length 1 (as Duet requires)
    pooling_size_doc = 3
    conv_k = 3
    n_pw = max_d_len - pooling_size_doc - 1     # = 12

    key = jax.random.PRNGKey(0)
    k_param, k_q, k_d = jax.random.split(key, 3)
    params = init_params(k_param, vocab_size, glove_dim, h_dim, n_pw, conv_k)

    query_ids = jax.random.randint(k_q, (B, max_q_len), 0, vocab_size, dtype=jnp.int32)
    doc_ids = jax.random.randint(k_d, (B, max_d_len), 0, vocab_size, dtype=jnp.int32)

    fwd = jax.jit(functools.partial(duet_v2_distributed,
                                    pool_q=pooling_size_query,
                                    pool_d=pooling_size_doc,
                                    batch_tile=16))   # 2 grid blocks of 16 examples
    out = jax.block_until_ready(fwd(query_ids, doc_ids, params))

    ref = jax.block_until_ready(
        duet_reference(query_ids, doc_ids, params,
                       pool_q=pooling_size_query, pool_d=pooling_size_doc))

    assert out.shape == (B, h_dim), out.shape
    np.testing.assert_allclose(np.asarray(out), np.asarray(ref, dtype=np.float32),
                               rtol=2e-3, atol=2e-3)
    print("KERNEL_OK")
</pallas_src>

<mosaic_0001>
module attributes {stable_mosaic.version = 11 : i64} {
  func.func @_duet_kernel(%arg0: i32, %arg1: memref<8x16x16xbf16, #tpu.memory_space<vmem>>, %arg2: memref<16x16x16xbf16, #tpu.memory_space<vmem>>, %arg3: memref<3x16x128xbf16, #tpu.memory_space<vmem>>, %arg4: memref<1x128xf32, #tpu.memory_space<vmem>>, %arg5: memref<128x128xbf16, #tpu.memory_space<vmem>>, %arg6: memref<1x128xf32, #tpu.memory_space<vmem>>, %arg7: memref<3x16x128xbf16, #tpu.memory_space<vmem>>, %arg8: memref<1x128xf32, #tpu.memory_space<vmem>>, %arg9: memref<128x128xbf16, #tpu.memory_space<vmem>>, %arg10: memref<1x128xf32, #tpu.memory_space<vmem>>, %arg11: memref<1536x128xbf16, #tpu.memory_space<vmem>>, %arg12: memref<1x128xf32, #tpu.memory_space<vmem>>, %arg13: memref<128x128xbf16, #tpu.memory_space<vmem>>, %arg14: memref<1x128xf32, #tpu.memory_space<vmem>>, %arg15: memref<16x128xf32, #tpu.memory_space<vmem>>) attributes {dimension_semantics = [#tpu.dimension_semantics<parallel>], iteration_bounds = array<i64: 2>, scalar_prefetch = 0 : i64, scratch_operands = 0 : i64, tpu.core_type = #tpu.core_type<tc>, window_params = [{transform_indices = @transform_0, window_bounds = array<i64: 8, 16, 16>}, {transform_indices = @transform_1, window_bounds = array<i64: 16, 16, 16>}, {pipeline_mode = #tpu.pipeline_mode<synchronous>, transform_indices = @transform_2, window_bounds = array<i64: 3, 16, 128>}, {pipeline_mode = #tpu.pipeline_mode<synchronous>, transform_indices = @transform_3, window_bounds = array<i64: 1, 128>}, {pipeline_mode = #tpu.pipeline_mode<synchronous>, transform_indices = @transform_4, window_bounds = array<i64: 128, 128>}, {pipeline_mode = #tpu.pipeline_mode<synchronous>, transform_indices = @transform_5, window_bounds = array<i64: 1, 128>}, {pipeline_mode = #tpu.pipeline_mode<synchronous>, transform_indices = @transform_6, window_bounds = array<i64: 3, 16, 128>}, {pipeline_mode = #tpu.pipeline_mode<synchronous>, transform_indices = @transform_7, window_bounds = array<i64: 1, 128>}, {pipeline_mode = #tpu.pipeline_mode<synchronous>, transform_indices = @transform_8, window_bounds = array<i64: 128, 128>}, {pipeline_mode = #tpu.pipeline_mode<synchronous>, transform_indices = @transform_9, window_bounds = array<i64: 1, 128>}, {pipeline_mode = #tpu.pipeline_mode<synchronous>, transform_indices = @transform_10, window_bounds = array<i64: 1536, 128>}, {pipeline_mode = #tpu.pipeline_mode<synchronous>, transform_indices = @transform_11, window_bounds = array<i64: 1, 128>}, {pipeline_mode = #tpu.pipeline_mode<synchronous>, transform_indices = @transform_12, window_bounds = array<i64: 128, 128>}, {pipeline_mode = #tpu.pipeline_mode<synchronous>, transform_indices = @transform_13, window_bounds = array<i64: 1, 128>}, {transform_indices = @transform_14, window_bounds = array<i64: 16, 128>}]} {
    %c0 = arith.constant 0 : index
    %c0_0 = arith.constant 0 : index
    %c0_1 = arith.constant 0 : index
    %0 = vector.load %arg1[%c0, %c0_0, %c0_1] : memref<8x16x16xbf16, #tpu.memory_space<vmem>>, vector<6x16x16xbf16>
    %1 = vector.shape_cast %0 : vector<6x16x16xbf16> to vector<96x16xbf16>
    %c0_2 = arith.constant 0 : index
    %c0_3 = arith.constant 0 : index
    %c0_4 = arith.constant 0 : index
    %2 = vector.load %arg3[%c0_2, %c0_3, %c0_4] : memref<3x16x128xbf16, #tpu.memory_space<vmem>>, vector<1x16x128xbf16>
    %3 = vector.shape_cast %2 : vector<1x16x128xbf16> to vector<16x128xbf16>
    %cst = arith.constant dense<0.000000e+00> : vector<96x128xf32>
    %4 = tpu.matmul %1, %3, %cst {dimension_numbers = #tpu.dot_dimension_numbers<[1], [0], [0], [1], [0, 0, 1, 1], [], []>} : vector<96x16xbf16>, vector<16x128xbf16>, vector<96x128xf32> -> vector<96x128xf32>
    %c1 = arith.constant 1 : index
    %c0_5 = arith.constant 0 : index
    %c0_6 = arith.constant 0 : index
    %5 = vector.load %arg1[%c1, %c0_5, %c0_6] : memref<8x16x16xbf16, #tpu.memory_space<vmem>>, vector<6x16x16xbf16>
    %6 = vector.shape_cast %5 : vector<6x16x16xbf16> to vector<96x16xbf16>
    %c1_7 = arith.constant 1 : index
    %c0_8 = arith.constant 0 : index
    %c0_9 = arith.constant 0 : index
    %7 = vector.load %arg3[%c1_7, %c0_8, %c0_9] : memref<3x16x128xbf16, #tpu.memory_space<vmem>>, vector<1x16x128xbf16>
    %8 = vector.shape_cast %7 : vector<1x16x128xbf16> to vector<16x128xbf16>
    %cst_10 = arith.constant dense<0.000000e+00> : vector<96x128xf32>
    %9 = tpu.matmul %6, %8, %cst_10 {dimension_numbers = #tpu.dot_dimension_numbers<[1], [0], [0], [1], [0, 0, 1, 1], [], []>} : vector<96x16xbf16>, vector<16x128xbf16>, vector<96x128xf32> -> vector<96x128xf32>
    %10 = arith.addf %4, %9 : vector<96x128xf32>
    %c2 = arith.constant 2 : index
    %c0_11 = arith.constant 0 : index
    %c0_12 = arith.constant 0 : index
    %11 = vector.load %arg1[%c2, %c0_11, %c0_12] : memref<8x16x16xbf16, #tpu.memory_space<vmem>>, vector<6x16x16xbf16>
    %12 = vector.shape_cast %11 : vector<6x16x16xbf16> to vector<96x16xbf16>
    %c2_13 = arith.constant 2 : index
    %c0_14 = arith.constant 0 : index
    %c0_15 = arith.constant 0 : index
    %13 = vector.load %arg3[%c2_13, %c0_14, %c0_15] : memref<3x16x128xbf16, #tpu.memory_space<vmem>>, vector<1x16x128xbf16>
    %14 = vector.shape_cast %13 : vector<1x16x128xbf16> to vector<16x128xbf16>
    %cst_16 = arith.constant dense<0.000000e+00> : vector<96x128xf32>
    %15 = tpu.matmul %12, %14, %cst_16 {dimension_numbers = #tpu.dot_dimension_numbers<[1], [0], [0], [1], [0, 0, 1, 1], [], []>} : vector<96x16xbf16>, vector<16x128xbf16>, vector<96x128xf32> -> vector<96x128xf32>
    %16 = arith.addf %10, %15 : vector<96x128xf32>
    %c0_17 = arith.constant 0 : index
    %c0_18 = arith.constant 0 : index
    %17 = vector.load %arg4[%c0_17, %c0_18] : memref<1x128xf32, #tpu.memory_space<vmem>>, vector<1x128xf32>
    %18 = vector.broadcast %17 : vector<1x128xf32> to vector<96x128xf32>
    %19 = arith.addf %16, %18 : vector<96x128xf32>
    %cst_19 = arith.constant 0.000000e+00 : f32
    %20 = vector.broadcast %cst_19 : f32 to vector<96x128xf32>
    %21 = arith.maximumf %19, %20 : vector<96x128xf32>
    %22 = vector.shape_cast %21 : vector<96x128xf32> to vector<6x16x128xf32>
    %23 = vector.extract_strided_slice %22 {offsets = [0, 0, 0], sizes = [1, 16, 128], strides = [1, 1, 1]} : vector<6x16x128xf32> to vector<1x16x128xf32>
    %24 = vector.shape_cast %23 : vector<1x16x128xf32> to vector<16x128xf32>
    %25 = vector.extract_strided_slice %22 {offsets = [1, 0, 0], sizes = [1, 16, 128], strides = [1, 1, 1]} : vector<6x16x128xf32> to vector<1x16x128xf32>
    %26 = vector.shape_cast %25 : vector<1x16x128xf32> to vector<16x128xf32>
    %27 = arith.maximumf %24, %26 : vector<16x128xf32>
    %28 = vector.extract_strided_slice %22 {offsets = [2, 0, 0], sizes = [1, 16, 128], strides = [1, 1, 1]} : vector<6x16x128xf32> to vector<1x16x128xf32>
    %29 = vector.shape_cast %28 : vector<1x16x128xf32> to vector<16x128xf32>
    %30 = arith.maximumf %27, %29 : vector<16x128xf32>
    %31 = vector.extract_strided_slice %22 {offsets = [3, 0, 0], sizes = [1, 16, 128], strides = [1, 1, 1]} : vector<6x16x128xf32> to vector<1x16x128xf32>
    %32 = vector.shape_cast %31 : vector<1x16x128xf32> to vector<16x128xf32>
    %33 = arith.maximumf %30, %32 : vector<16x128xf32>
    %34 = vector.extract_strided_slice %22 {offsets = [4, 0, 0], sizes = [1, 16, 128], strides = [1, 1, 1]} : vector<6x16x128xf32> to vector<1x16x128xf32>
    %35 = vector.shape_cast %34 : vector<1x16x128xf32> to vector<16x128xf32>
    %36 = arith.maximumf %33, %35 : vector<16x128xf32>
    %37 = vector.extract_strided_slice %22 {offsets = [5, 0, 0], sizes = [1, 16, 128], strides = [1, 1, 1]} : vector<6x16x128xf32> to vector<1x16x128xf32>
    %38 = vector.shape_cast %37 : vector<1x16x128xf32> to vector<16x128xf32>
    %39 = arith.maximumf %36, %38 : vector<16x128xf32>
    %40 = arith.truncf %39 : vector<16x128xf32> to vector<16x128xbf16>
    %c0_20 = arith.constant 0 : index
    %c0_21 = arith.constant 0 : index
    %41 = vector.load %arg5[%c0_20, %c0_21] : memref<128x128xbf16, #tpu.memory_space<vmem>>, vector<128x128xbf16>
    %cst_22 = arith.constant dense<0.000000e+00> : vector<16x128xf32>
    %42 = tpu.matmul %40, %41, %cst_22 {dimension_numbers = #tpu.dot_dimension_numbers<[1], [0], [0], [1], [0, 0, 1, 1], [], []>} : vector<16x128xbf16>, vector<128x128xbf16>, vector<16x128xf32> -> vector<16x128xf32>
    %c0_23 = arith.constant 0 : index
    %c0_24 = arith.constant 0 : index
    %43 = vector.load %arg6[%c0_23, %c0_24] : memref<1x128xf32, #tpu.memory_space<vmem>>, vector<1x128xf32>
    %44 = vector.broadcast %43 : vector<1x128xf32> to vector<16x128xf32>
    %45 = arith.addf %42, %44 : vector<16x128xf32>
    %cst_25 = arith.constant 0.000000e+00 : f32
    %46 = vector.broadcast %cst_25 : f32 to vector<16x128xf32>
    %47 = arith.maximumf %45, %46 : vector<16x128xf32>
    %c0_26 = arith.constant 0 : index
    %c0_27 = arith.constant 0 : index
    %c0_28 = arith.constant 0 : index
    %48 = vector.load %arg2[%c0_26, %c0_27, %c0_28] : memref<16x16x16xbf16, #tpu.memory_space<vmem>>, vector<14x16x16xbf16>
    %49 = vector.shape_cast %48 : vector<14x16x16xbf16> to vector<224x16xbf16>
    %c0_29 = arith.constant 0 : index
    %c0_30 = arith.constant 0 : index
    %c0_31 = arith.constant 0 : index
    %50 = vector.load %arg7[%c0_29, %c0_30, %c0_31] : memref<3x16x128xbf16, #tpu.memory_space<vmem>>, vector<1x16x128xbf16>
    %51 = vector.shape_cast %50 : vector<1x16x128xbf16> to vector<16x128xbf16>
    %cst_32 = arith.constant dense<0.000000e+00> : vector<224x128xf32>
    %52 = tpu.matmul %49, %51, %cst_32 {dimension_numbers = #tpu.dot_dimension_numbers<[1], [0], [0], [1], [0, 0, 1, 1], [], []>} : vector<224x16xbf16>, vector<16x128xbf16>, vector<224x128xf32> -> vector<224x128xf32>
    %c1_33 = arith.constant 1 : index
    %c0_34 = arith.constant 0 : index
    %c0_35 = arith.constant 0 : index
    %53 = vector.load %arg2[%c1_33, %c0_34, %c0_35] : memref<16x16x16xbf16, #tpu.memory_space<vmem>>, vector<14x16x16xbf16>
    %54 = vector.shape_cast %53 : vector<14x16x16xbf16> to vector<224x16xbf16>
    %c1_36 = arith.constant 1 : index
    %c0_37 = arith.constant 0 : index
    %c0_38 = arith.constant 0 : index
    %55 = vector.load %arg7[%c1_36, %c0_37, %c0_38] : memref<3x16x128xbf16, #tpu.memory_space<vmem>>, vector<1x16x128xbf16>
    %56 = vector.shape_cast %55 : vector<1x16x128xbf16> to vector<16x128xbf16>
    %cst_39 = arith.constant dense<0.000000e+00> : vector<224x128xf32>
    %57 = tpu.matmul %54, %56, %cst_39 {dimension_numbers = #tpu.dot_dimension_numbers<[1], [0], [0], [1], [0, 0, 1, 1], [], []>} : vector<224x16xbf16>, vector<16x128xbf16>, vector<224x128xf32> -> vector<224x128xf32>
    %58 = arith.addf %52, %57 : vector<224x128xf32>
    %c2_40 = arith.constant 2 : index
    %c0_41 = arith.constant 0 : index
    %c0_42 = arith.constant 0 : index
    %59 = vector.load %arg2[%c2_40, %c0_41, %c0_42] : memref<16x16x16xbf16, #tpu.memory_space<vmem>>, vector<14x16x16xbf16>
    %60 = vector.shape_cast %59 : vector<14x16x16xbf16> to vector<224x16xbf16>
    %c2_43 = arith.constant 2 : index
    %c0_44 = arith.constant 0 : index
    %c0_45 = arith.constant 0 : index
    %61 = vector.load %arg7[%c2_43, %c0_44, %c0_45] : memref<3x16x128xbf16, #tpu.memory_space<vmem>>, vector<1x16x128xbf16>
    %62 = vector.shape_cast %61 : vector<1x16x128xbf16> to vector<16x128xbf16>
    %cst_46 = arith.constant dense<0.000000e+00> : vector<224x128xf32>
    %63 = tpu.matmul %60, %62, %cst_46 {dimension_numbers = #tpu.dot_dimension_numbers<[1], [0], [0], [1], [0, 0, 1, 1], [], []>} : vector<224x16xbf16>, vector<16x128xbf16>, vector<224x128xf32> -> vector<224x128xf32>
    %64 = arith.addf %58, %63 : vector<224x128xf32>
    %c0_47 = arith.constant 0 : index
    %c0_48 = arith.constant 0 : index
    %65 = vector.load %arg8[%c0_47, %c0_48] : memref<1x128xf32, #tpu.memory_space<vmem>>, vector<1x128xf32>
    %66 = vector.broadcast %65 : vector<1x128xf32> to vector<224x128xf32>
    %67 = arith.addf %64, %66 : vector<224x128xf32>
    %cst_49 = arith.constant 0.000000e+00 : f32
    %68 = vector.broadcast %cst_49 : f32 to vector<224x128xf32>
    %69 = arith.maximumf %67, %68 : vector<224x128xf32>
    %70 = vector.shape_cast %69 : vector<224x128xf32> to vector<14x16x128xf32>
    %71 = vector.extract_strided_slice %70 {offsets = [0, 0, 0], sizes = [12, 16, 128], strides = [1, 1, 1]} : vector<14x16x128xf32> to vector<12x16x128xf32>
    %72 = vector.extract_strided_slice %70 {offsets = [1, 0, 0], sizes = [12, 16, 128], strides = [1, 1, 1]} : vector<14x16x128xf32> to vector<12x16x128xf32>
    %73 = arith.maximumf %71, %72 : vector<12x16x128xf32>
    %74 = vector.extract_strided_slice %70 {offsets = [2, 0, 0], sizes = [12, 16, 128], strides = [1, 1, 1]} : vector<14x16x128xf32> to vector<12x16x128xf32>
    %75 = arith.maximumf %73, %74 : vector<12x16x128xf32>
    %76 = vector.shape_cast %75 : vector<12x16x128xf32> to vector<192x128xf32>
    %77 = arith.truncf %76 : vector<192x128xf32> to vector<192x128xbf16>
    %c0_50 = arith.constant 0 : index
    %c0_51 = arith.constant 0 : index
    %78 = vector.load %arg9[%c0_50, %c0_51] : memref<128x128xbf16, #tpu.memory_space<vmem>>, vector<128x128xbf16>
    %cst_52 = arith.constant dense<0.000000e+00> : vector<192x128xf32>
    %79 = tpu.matmul %77, %78, %cst_52 {dimension_numbers = #tpu.dot_dimension_numbers<[1], [0], [0], [1], [0, 0, 1, 1], [], []>} : vector<192x128xbf16>, vector<128x128xbf16>, vector<192x128xf32> -> vector<192x128xf32>
    %c0_53 = arith.constant 0 : index
    %c0_54 = arith.constant 0 : index
    %80 = vector.load %arg10[%c0_53, %c0_54] : memref<1x128xf32, #tpu.memory_space<vmem>>, vector<1x128xf32>
    %81 = vector.broadcast %80 : vector<1x128xf32> to vector<192x128xf32>
    %82 = arith.addf %79, %81 : vector<192x128xf32>
    %cst_55 = arith.constant 0.000000e+00 : f32
    %83 = vector.broadcast %cst_55 : f32 to vector<192x128xf32>
    %84 = arith.maximumf %82, %83 : vector<192x128xf32>
    %85 = vector.shape_cast %84 : vector<192x128xf32> to vector<12x16x128xf32>
    %86 = vector.extract_strided_slice %85 {offsets = [0, 0, 0], sizes = [1, 16, 128], strides = [1, 1, 1]} : vector<12x16x128xf32> to vector<1x16x128xf32>
    %87 = vector.shape_cast %86 : vector<1x16x128xf32> to vector<16x128xf32>
    %88 = arith.mulf %47, %87 : vector<16x128xf32>
    %89 = vector.extract_strided_slice %85 {offsets = [1, 0, 0], sizes = [1, 16, 128], strides = [1, 1, 1]} : vector<12x16x128xf32> to vector<1x16x128xf32>
    %90 = vector.shape_cast %89 : vector<1x16x128xf32> to vector<16x128xf32>
    %91 = arith.mulf %47, %90 : vector<16x128xf32>
    %92 = vector.extract_strided_slice %85 {offsets = [2, 0, 0], sizes = [1, 16, 128], strides = [1, 1, 1]} : vector<12x16x128xf32> to vector<1x16x128xf32>
    %93 = vector.shape_cast %92 : vector<1x16x128xf32> to vector<16x128xf32>
    %94 = arith.mulf %47, %93 : vector<16x128xf32>
    %95 = vector.extract_strided_slice %85 {offsets = [3, 0, 0], sizes = [1, 16, 128], strides = [1, 1, 1]} : vector<12x16x128xf32> to vector<1x16x128xf32>
    %96 = vector.shape_cast %95 : vector<1x16x128xf32> to vector<16x128xf32>
    %97 = arith.mulf %47, %96 : vector<16x128xf32>
    %98 = vector.extract_strided_slice %85 {offsets = [4, 0, 0], sizes = [1, 16, 128], strides = [1, 1, 1]} : vector<12x16x128xf32> to vector<1x16x128xf32>
    %99 = vector.shape_cast %98 : vector<1x16x128xf32> to vector<16x128xf32>
    %100 = arith.mulf %47, %99 : vector<16x128xf32>
    %101 = vector.extract_strided_slice %85 {offsets = [5, 0, 0], sizes = [1, 16, 128], strides = [1, 1, 1]} : vector<12x16x128xf32> to vector<1x16x128xf32>
    %102 = vector.shape_cast %101 : vector<1x16x128xf32> to vector<16x128xf32>
    %103 = arith.mulf %47, %102 : vector<16x128xf32>
    %104 = vector.extract_strided_slice %85 {offsets = [6, 0, 0], sizes = [1, 16, 128], strides = [1, 1, 1]} : vector<12x16x128xf32> to vector<1x16x128xf32>
    %105 = vector.shape_cast %104 : vector<1x16x128xf32> to vector<16x128xf32>
    %106 = arith.mulf %47, %105 : vector<16x128xf32>
    %107 = vector.extract_strided_slice %85 {offsets = [7, 0, 0], sizes = [1, 16, 128], strides = [1, 1, 1]} : vector<12x16x128xf32> to vector<1x16x128xf32>
    %108 = vector.shape_cast %107 : vector<1x16x128xf32> to vector<16x128xf32>
    %109 = arith.mulf %47, %108 : vector<16x128xf32>
    %110 = vector.extract_strided_slice %85 {offsets = [8, 0, 0], sizes = [1, 16, 128], strides = [1, 1, 1]} : vector<12x16x128xf32> to vector<1x16x128xf32>
    %111 = vector.shape_cast %110 : vector<1x16x128xf32> to vector<16x128xf32>
    %112 = arith.mulf %47, %111 : vector<16x128xf32>
    %113 = vector.extract_strided_slice %85 {offsets = [9, 0, 0], sizes = [1, 16, 128], strides = [1, 1, 1]} : vector<12x16x128xf32> to vector<1x16x128xf32>
    %114 = vector.shape_cast %113 : vector<1x16x128xf32> to vector<16x128xf32>
    %115 = arith.mulf %47, %114 : vector<16x128xf32>
    %116 = vector.extract_strided_slice %85 {offsets = [10, 0, 0], sizes = [1, 16, 128], strides = [1, 1, 1]} : vector<12x16x128xf32> to vector<1x16x128xf32>
    %117 = vector.shape_cast %116 : vector<1x16x128xf32> to vector<16x128xf32>
    %118 = arith.mulf %47, %117 : vector<16x128xf32>
    %119 = vector.extract_strided_slice %85 {offsets = [11, 0, 0], sizes = [1, 16, 128], strides = [1, 1, 1]} : vector<12x16x128xf32> to vector<1x16x128xf32>
    %120 = vector.shape_cast %119 : vector<1x16x128xf32> to vector<16x128xf32>
    %121 = arith.mulf %47, %120 : vector<16x128xf32>
    %122 = tpu.concatenate %88, %91, %94, %97, %100, %103, %106, %109, %112, %115, %118, %121 in 1 : vector<16x128xf32>, vector<16x128xf32>, vector<16x128xf32>, vector<16x128xf32>, vector<16x128xf32>, vector<16x128xf32>, vector<16x128xf32>, vector<16x128xf32>, vector<16x128xf32>, vector<16x128xf32>, vector<16x128xf32>, vector<16x128xf32> -> vector<16x1536xf32>
    %123 = arith.truncf %122 : vector<16x1536xf32> to vector<16x1536xbf16>
    %c0_56 = arith.constant 0 : index
    %c0_57 = arith.constant 0 : index
    %124 = vector.load %arg11[%c0_56, %c0_57] : memref<1536x128xbf16, #tpu.memory_space<vmem>>, vector<1536x128xbf16>
    %cst_58 = arith.constant dense<0.000000e+00> : vector<16x128xf32>
    %125 = tpu.matmul %123, %124, %cst_58 {dimension_numbers = #tpu.dot_dimension_numbers<[1], [0], [0], [1], [0, 0, 1, 1], [], []>} : vector<16x1536xbf16>, vector<1536x128xbf16>, vector<16x128xf32> -> vector<16x128xf32>
    %c0_59 = arith.constant 0 : index
    %c0_60 = arith.constant 0 : index
    %126 = vector.load %arg12[%c0_59, %c0_60] : memref<1x128xf32, #tpu.memory_space<vmem>>, vector<1x128xf32>
    %127 = vector.broadcast %126 : vector<1x128xf32> to vector<16x128xf32>
    %128 = arith.addf %125, %127 : vector<16x128xf32>
    %cst_61 = arith.constant 0.000000e+00 : f32
    %129 = vector.broadcast %cst_61 : f32 to vector<16x128xf32>
    %130 = arith.maximumf %128, %129 : vector<16x128xf32>
    %131 = arith.truncf %130 : vector<16x128xf32> to vector<16x128xbf16>
    %c0_62 = arith.constant 0 : index
    %c0_63 = arith.constant 0 : index
    %132 = vector.load %arg13[%c0_62, %c0_63] : memref<128x128xbf16, #tpu.memory_space<vmem>>, vector<128x128xbf16>
    %cst_64 = arith.constant dense<0.000000e+00> : vector<16x128xf32>
    %133 = tpu.matmul %131, %132, %cst_64 {dimension_numbers = #tpu.dot_dimension_numbers<[1], [0], [0], [1], [0, 0, 1, 1], [], []>} : vector<16x128xbf16>, vector<128x128xbf16>, vector<16x128xf32> -> vector<16x128xf32>
    %c0_65 = arith.constant 0 : index
    %c0_66 = arith.constant 0 : index
    %134 = vector.load %arg14[%c0_65, %c0_66] : memref<1x128xf32, #tpu.memory_space<vmem>>, vector<1x128xf32>
    %135 = vector.broadcast %134 : vector<1x128xf32> to vector<16x128xf32>
    %136 = arith.addf %133, %135 : vector<16x128xf32>
    %cst_67 = arith.constant 0.000000e+00 : f32
    %137 = vector.broadcast %cst_67 : f32 to vector<16x128xf32>
    %138 = arith.maximumf %136, %137 : vector<16x128xf32>
    %c0_68 = arith.constant 0 : index
    %c0_69 = arith.constant 0 : index
    %139 = vector.load %arg15[%c0_68, %c0_69] : memref<16x128xf32, #tpu.memory_space<vmem>>, vector<16x128xf32>
    tpu.vector_store %arg15[%c0_68, %c0_69], %138 {strides = array<i32>} : memref<16x128xf32, #tpu.memory_space<vmem>>, vector<16x128xf32>,
    return
  }
  func.func @transform_0(%arg0: i32) -> (i32, i32, i32) {
    %c0_i32 = arith.constant 0 : i32
    %c0_i32_0 = arith.constant 0 : i32
    %c0_i32_1 = arith.constant 0 : i32
    return %c0_i32, %arg0, %c0_i32_0 : i32, i32, i32
  }
  func.func @transform_1(%arg0: i32) -> (i32, i32, i32) {
    %c0_i32 = arith.constant 0 : i32
    %c0_i32_0 = arith.constant 0 : i32
    %c0_i32_1 = arith.constant 0 : i32
    return %c0_i32, %arg0, %c0_i32_0 : i32, i32, i32
  }
  func.func @transform_2(%arg0: i32) -> (i32, i32, i32) {
    %c0_i32 = arith.constant 0 : i32
    %c0_i32_0 = arith.constant 0 : i32
    %c0_i32_1 = arith.constant 0 : i32
    %c0_i32_2 = arith.constant 0 : i32
    return %c0_i32, %c0_i32_0, %c0_i32_1 : i32, i32, i32
  }
  func.func @transform_3(%arg0: i32) -> (i32, i32) {
    %c0_i32 = arith.constant 0 : i32
    %c0_i32_0 = arith.constant 0 : i32
    %c0_i32_1 = arith.constant 0 : i32
    return %c0_i32, %c0_i32_0 : i32, i32
  }
  func.func @transform_4(%arg0: i32) -> (i32, i32) {
    %c0_i32 = arith.constant 0 : i32
    %c0_i32_0 = arith.constant 0 : i32
    %c0_i32_1 = arith.constant 0 : i32
    return %c0_i32, %c0_i32_0 : i32, i32
  }
  func.func @transform_5(%arg0: i32) -> (i32, i32) {
    %c0_i32 = arith.constant 0 : i32
    %c0_i32_0 = arith.constant 0 : i32
    %c0_i32_1 = arith.constant 0 : i32
    return %c0_i32, %c0_i32_0 : i32, i32
  }
  func.func @transform_6(%arg0: i32) -> (i32, i32, i32) {
    %c0_i32 = arith.constant 0 : i32
    %c0_i32_0 = arith.constant 0 : i32
    %c0_i32_1 = arith.constant 0 : i32
    %c0_i32_2 = arith.constant 0 : i32
    return %c0_i32, %c0_i32_0, %c0_i32_1 : i32, i32, i32
  }
  func.func @transform_7(%arg0: i32) -> (i32, i32) {
    %c0_i32 = arith.constant 0 : i32
    %c0_i32_0 = arith.constant 0 : i32
    %c0_i32_1 = arith.constant 0 : i32
    return %c0_i32, %c0_i32_0 : i32, i32
  }
  func.func @transform_8(%arg0: i32) -> (i32, i32) {
    %c0_i32 = arith.constant 0 : i32
    %c0_i32_0 = arith.constant 0 : i32
    %c0_i32_1 = arith.constant 0 : i32
    return %c0_i32, %c0_i32_0 : i32, i32
  }
  func.func @transform_9(%arg0: i32) -> (i32, i32) {
    %c0_i32 = arith.constant 0 : i32
    %c0_i32_0 = arith.constant 0 : i32
    %c0_i32_1 = arith.constant 0 : i32
    return %c0_i32, %c0_i32_0 : i32, i32
  }
  func.func @transform_10(%arg0: i32) -> (i32, i32) {
    %c0_i32 = arith.constant 0 : i32
    %c0_i32_0 = arith.constant 0 : i32
    %c0_i32_1 = arith.constant 0 : i32
    return %c0_i32, %c0_i32_0 : i32, i32
  }
  func.func @transform_11(%arg0: i32) -> (i32, i32) {
    %c0_i32 = arith.constant 0 : i32
    %c0_i32_0 = arith.constant 0 : i32
    %c0_i32_1 = arith.constant 0 : i32
    return %c0_i32, %c0_i32_0 : i32, i32
  }
  func.func @transform_12(%arg0: i32) -> (i32, i32) {
    %c0_i32 = arith.constant 0 : i32
    %c0_i32_0 = arith.constant 0 : i32
    %c0_i32_1 = arith.constant 0 : i32
    return %c0_i32, %c0_i32_0 : i32, i32
  }
  func.func @transform_13(%arg0: i32) -> (i32, i32) {
    %c0_i32 = arith.constant 0 : i32
    %c0_i32_0 = arith.constant 0 : i32
    %c0_i32_1 = arith.constant 0 : i32
    return %c0_i32, %c0_i32_0 : i32, i32
  }
  func.func @transform_14(%arg0: i32) -> (i32, i32) {
    %c0_i32 = arith.constant 0 : i32
    %c0_i32_0 = arith.constant 0 : i32
    return %arg0, %c0_i32 : i32, i32
  }
}

</mosaic_0001>

<llo_original>
// kernel: duet_v2_distributed.1
$region0: #{duet_v2_distributed.1}
  #allocation0 [shape = 'u32[]', space=smem, size = 0x4, offset = 0x4, fixed_abs, tag = 'smem constant byte address 0x4 - core index']
  #allocation1 [shape = 'u32[144,128]{1,0:T(1,128)}', space=vmem, size = 0x12000, scoped, tag = 'internal scratch']
  %s0 = inlined_call_operand.vmem [shape: bf16[8,32,16], index: 0, kind: input, shape index: {}]
  %s1 = inlined_call_operand.vmem [shape: bf16[16,32,16], index: 1, kind: input, shape index: {}]
  %s2 = inlined_call_operand.vmem [shape: bf16[3,16,128], index: 2, kind: input, shape index: {}]
  %s3 = inlined_call_operand.vmem [shape: f32[1,128], index: 3, kind: input, shape index: {}]
  %s4 = inlined_call_operand.vmem [shape: bf16[128,128], index: 4, kind: input, shape index: {}]
  %s5 = inlined_call_operand.vmem [shape: f32[1,128], index: 5, kind: input, shape index: {}]
  %s6 = inlined_call_operand.vmem [shape: bf16[3,16,128], index: 6, kind: input, shape index: {}]
  %s7 = inlined_call_operand.vmem [shape: f32[1,128], index: 7, kind: input, shape index: {}]
  %s8 = inlined_call_operand.vmem [shape: bf16[128,128], index: 8, kind: input, shape index: {}]
  %s9 = inlined_call_operand.vmem [shape: f32[1,128], index: 9, kind: input, shape index: {}]
  %s10 = inlined_call_operand.vmem [shape: bf16[1536,128], index: 10, kind: input, shape index: {}]
  %s11 = inlined_call_operand.vmem [shape: f32[1,128], index: 11, kind: input, shape index: {}]
  %s12 = inlined_call_operand.vmem [shape: bf16[128,128], index: 12, kind: input, shape index: {}]
  %s13 = inlined_call_operand.vmem [shape: f32[1,128], index: 13, kind: input, shape index: {}]
  %s14 = inlined_call_operand.hbm [shape: f32[32,128], index: 14, kind: output, shape index: {}]
  %s15 = sld [smem:[#allocation0]]
  $region171: #{duet_v2_distributed.1} parent=0
    _
  %s17 = ssub.s32 1, %s15
  %s18 = scalar_select 0, %s17, %s15
  $region1: #{duet_v2_distributed.1} parent=0
    #allocation2 [shape = 'u8[65536]{0}', space=vmem, size = 0x10000, scoped, tag = 'input window, operand 0']
    #allocation3 [shape = 'u8[131072]{0}', space=vmem, size = 0x20000, scoped, tag = 'input window, operand 1']
    #allocation4 [shape = 'u8[16384]{0}', space=vmem, size = 0x4000, scoped, tag = 'output window, operand 0']
    #allocation5 [shape = 's32[2]{0}', space=sflag, size = 0x8, scoped, tag = 'scoped memory for duet_v2_distributed.1']
    %19 = vsyncpa [#allocation5], 0
    %s20 = scalar_lea.sflag [#allocation5], 1
    %21 = vsyncpa %s20, 0
    loop: start=0, step=1, limit=4
    $region2: #{duet_v2_distributed.1} parent=1 // loop_pre_header
      _
    $region3: #{duet_v2_distributed.1} parent=1 // loop_header
      %s23 = sphi 0, %s27
      %p24 = scmp.ge.s32.totalorder %s23, 4
      %s33 = sphi 0, %s35
      %s36 = sphi 0, %s33
      %s37 = sphi 0, %s36
      %s53 = sphi 0, %s37
      %s59 = sphi 0, %s61
      %s62 = sphi 0, %s59
      %s63 = sphi 0, %s62
      %s79 = sphi 0, %s63
      %s83 = sphi 0, %s83
      %s85 = sphi 0, %s83
      %s86 = sphi 0, %s85
      %s100 = sphi 0, %s86
      %s104 = sphi 0, %s104
      %s106 = sphi 0, %s104
      %s107 = sphi 0, %s106
      %s121 = sphi 0, %s107
      %s125 = sphi 0, %s125
      %s127 = sphi 0, %s125
      %s128 = sphi 0, %s127
      %s142 = sphi 0, %s128
      %s146 = sphi 0, %s146
      %s148 = sphi 0, %s146
      %s149 = sphi 0, %s148
      %s163 = sphi 0, %s149
      %s167 = sphi 0, %s167
      %s169 = sphi 0, %s167
      %s170 = sphi 0, %s169
      %s184 = sphi 0, %s170
      %s188 = sphi 0, %s188
      %s190 = sphi 0, %s188
      %s191 = sphi 0, %s190
      %s205 = sphi 0, %s191
      %s209 = sphi 0, %s209
      %s211 = sphi 0, %s209
      %s212 = sphi 0, %s211
      %s226 = sphi 0, %s212
      %s230 = sphi 0, %s230
      %s232 = sphi 0, %s230
      %s233 = sphi 0, %s232
      %s247 = sphi 0, %s233
      %s251 = sphi 0, %s251
      %s253 = sphi 0, %s251
      %s254 = sphi 0, %s253
      %s268 = sphi 0, %s254
      %s272 = sphi 0, %s272
      %s274 = sphi 0, %s272
      %s275 = sphi 0, %s274
      %s289 = sphi 0, %s275
      %s293 = sphi 0, %s293
      %s295 = sphi 0, %s293
      %s296 = sphi 0, %s295
      %s310 = sphi 0, %s296
      %s314 = sphi 0, %s314
      %s316 = sphi 0, %s314
      %s317 = sphi 0, %s316
      %s331 = sphi 0, %s317
      %s337 = sphi 0, %s339
      %s340 = sphi 0, %s337
      %s341 = sphi 0, %s340
      %s357 = sphi 0, %s341
    $region4: #{duet_v2_distributed.1} parent=1 // loop_header_branch
      %26 = sbr.rel (%p24) target = $region8
    $region5: #{duet_v2_distributed.1} parent=1 // loop_body
      %s28 = ssub.s32 %s23, 1
      %s29 = ssub.s32 %s23, 2
      %s30 = sadd.s32 %s23, 1
      %s31 = ssub.s32 %s23, %s30
      %p32 = scmp.eq.s32.totalorder %s31, 0
      %s34 = sadd.s32 %s33, 1
      %s35 = scalar_select %p32, %s33, %s34
      %p38 = pneg %p32
      %p39 = scmp.eq.s32.totalorder %s23, 1
      %p40 = por %p38, %p39
      %p41 = scmp.ne.s32.totalorder %s33, %s36
      %p42 = scmp.eq.s32.totalorder %s23, 0
      %p43 = por %p41, %p42
      %p44 = scmp.ne.s32.totalorder %s33, %s36
      %p45 = scmp.eq.s32.totalorder %s28, 1
      %p46 = por %p44, %p45
      %p47 = scmp.ne.s32.totalorder %s36, %s37
      %p48 = scmp.eq.s32.totalorder %s28, 0
      %p49 = por %p47, %p48
      %p50 = scmp.ne.s32.totalorder %s36, %s37
      %p51 = scmp.eq.s32.totalorder %s29, 1
      %p52 = por %p50, %p51
      %p54 = scmp.ne.s32.totalorder %s37, %s53
      %p55 = scmp.eq.s32.totalorder %s29, 0
      %p56 = por %p54, %p55
      %s57 = ssub.s32 %s23, %s30
      %p58 = scmp.eq.s32.totalorder %s57, 0
      %s60 = sadd.s32 %s59, 1
      %s61 = scalar_select %p58, %s59, %s60
      %p64 = pneg %p58
      %p65 = scmp.eq.s32.totalorder %s23, 1
      %p66 = por %p64, %p65
      %p67 = scmp.ne.s32.totalorder %s59, %s62
      %p68 = scmp.eq.s32.totalorder %s23, 0
      %p69 = por %p67, %p68
      %p70 = scmp.ne.s32.totalorder %s59, %s62
      %p71 = scmp.eq.s32.totalorder %s28, 1
      %p72 = por %p70, %p71
      %p73 = scmp.ne.s32.totalorder %s62, %s63
      %p74 = scmp.eq.s32.totalorder %s28, 0
      %p75 = por %p73, %p74
      %p76 = scmp.ne.s32.totalorder %s62, %s63
      %p77 = scmp.eq.s32.totalorder %s29, 1
      %p78 = por %p76, %p77
      %p80 = scmp.ne.s32.totalorder %s63, %s79
      %p81 = scmp.eq.s32.totalorder %s29, 0
      %p82 = por %p80, %p81
      %s84 = sadd.s32 %s83, 1
      %p87 = scmp.eq.s32.totalorder %s23, 1
      %p88 = scmp.ne.s32.totalorder %s83, %s85
      %p89 = scmp.eq.s32.totalorder %s23, 0
      %p90 = por %p88, %p89
      %p91 = scmp.ne.s32.totalorder %s83, %s85
      %p92 = scmp.eq.s32.totalorder %s28, 1
      %p93 = por %p91, %p92
      %p94 = scmp.ne.s32.totalorder %s85, %s86
      %p95 = scmp.eq.s32.totalorder %s28, 0
      %p96 = por %p94, %p95
      %p97 = scmp.ne.s32.totalorder %s85, %s86
      %p98 = scmp.eq.s32.totalorder %s29, 1
      %p99 = por %p97, %p98
      %p101 = scmp.ne.s32.totalorder %s86, %s100
      %p102 = scmp.eq.s32.totalorder %s29, 0
      %p103 = por %p101, %p102
      %s105 = sadd.s32 %s104, 1
      %p108 = scmp.eq.s32.totalorder %s23, 1
      %p109 = scmp.ne.s32.totalorder %s104, %s106
      %p110 = scmp.eq.s32.totalorder %s23, 0
      %p111 = por %p109, %p110
      %p112 = scmp.ne.s32.totalorder %s104, %s106
      %p113 = scmp.eq.s32.totalorder %s28, 1
      %p114 = por %p112, %p113
      %p115 = scmp.ne.s32.totalorder %s106, %s107
      %p116 = scmp.eq.s32.totalorder %s28, 0
      %p117 = por %p115, %p116
      %p118 = scmp.ne.s32.totalorder %s106, %s107
      %p119 = scmp.eq.s32.totalorder %s29, 1
      %p120 = por %p118, %p119
      %p122 = scmp.ne.s32.totalorder %s107, %s121
      %p123 = scmp.eq.s32.totalorder %s29, 0
      %p124 = por %p122, %p123
      %s126 = sadd.s32 %s125, 1
      %p129 = scmp.eq.s32.totalorder %s23, 1
      %p130 = scmp.ne.s32.totalorder %s125, %s127
      %p131 = scmp.eq.s32.totalorder %s23, 0
      %p132 = por %p130, %p131
      %p133 = scmp.ne.s32.totalorder %s125, %s127
      %p134 = scmp.eq.s32.totalorder %s28, 1
      %p135 = por %p133, %p134
      %p136 = scmp.ne.s32.totalorder %s127, %s128
      %p137 = scmp.eq.s32.totalorder %s28, 0
      %p138 = por %p136, %p137
      %p139 = scmp.ne.s32.totalorder %s127, %s128
      %p140 = scmp.eq.s32.totalorder %s29, 1
      %p141 = por %p139, %p140
      %p143 = scmp.ne.s32.totalorder %s128, %s142
      %p144 = scmp.eq.s32.totalorder %s29, 0
      %p145 = por %p143, %p144
      %s147 = sadd.s32 %s146, 1
      %p150 = scmp.eq.s32.totalorder %s23, 1
      %p151 = scmp.ne.s32.totalorder %s146, %s148
      %p152 = scmp.eq.s32.totalorder %s23, 0
      %p153 = por %p151, %p152
      %p154 = scmp.ne.s32.totalorder %s146, %s148
      %p155 = scmp.eq.s32.totalorder %s28, 1
      %p156 = por %p154, %p155
      %p157 = scmp.ne.s32.totalorder %s148, %s149
      %p158 = scmp.eq.s32.totalorder %s28, 0
      %p159 = por %p157, %p158
      %p160 = scmp.ne.s32.totalorder %s148, %s149
      %p161 = scmp.eq.s32.totalorder %s29, 1
      %p162 = por %p160, %p161
      %p164 = scmp.ne.s32.totalorder %s149, %s163
      %p165 = scmp.eq.s32.totalorder %s29, 0
      %p166 = por %p164, %p165
      %s168 = sadd.s32 %s167, 1
      %p171 = scmp.eq.s32.totalorder %s23, 1
      %p172 = scmp.ne.s32.totalorder %s167, %s169
      %p173 = scmp.eq.s32.totalorder %s23, 0
      %p174 = por %p172, %p173
      %p175 = scmp.ne.s32.totalorder %s167, %s169
      %p176 = scmp.eq.s32.totalorder %s28, 1
      %p177 = por %p175, %p176
      %p178 = scmp.ne.s32.totalorder %s169, %s170
      %p179 = scmp.eq.s32.totalorder %s28, 0
      %p180 = por %p178, %p179
      %p181 = scmp.ne.s32.totalorder %s169, %s170
      %p182 = scmp.eq.s32.totalorder %s29, 1
      %p183 = por %p181, %p182
      %p185 = scmp.ne.s32.totalorder %s170, %s184
      %p186 = scmp.eq.s32.totalorder %s29, 0
      %p187 = por %p185, %p186
      %s189 = sadd.s32 %s188, 1
      %p192 = scmp.eq.s32.totalorder %s23, 1
      %p193 = scmp.ne.s32.totalorder %s188, %s190
      %p194 = scmp.eq.s32.totalorder %s23, 0
      %p195 = por %p193, %p194
      %p196 = scmp.ne.s32.totalorder %s188, %s190
      %p197 = scmp.eq.s32.totalorder %s28, 1
      %p198 = por %p196, %p197
      %p199 = scmp.ne.s32.totalorder %s190, %s191
      %p200 = scmp.eq.s32.totalorder %s28, 0
      %p201 = por %p199, %p200
      %p202 = scmp.ne.s32.totalorder %s190, %s191
      %p203 = scmp.eq.s32.totalorder %s29, 1
      %p204 = por %p202, %p203
      %p206 = scmp.ne.s32.totalorder %s191, %s205
      %p207 = scmp.eq.s32.totalorder %s29, 0
      %p208 = por %p206, %p207
      %s210 = sadd.s32 %s209, 1
      %p213 = scmp.eq.s32.totalorder %s23, 1
      %p214 = scmp.ne.s32.totalorder %s209, %s211
      %p215 = scmp.eq.s32.totalorder %s23, 0
      %p216 = por %p214, %p215
      %p217 = scmp.ne.s32.totalorder %s209, %s211
      %p218 = scmp.eq.s32.totalorder %s28, 1
      %p219 = por %p217, %p218
      %p220 = scmp.ne.s32.totalorder %s211, %s212
      %p221 = scmp.eq.s32.totalorder %s28, 0
      %p222 = por %p220, %p221
      %p223 = scmp.ne.s32.totalorder %s211, %s212
      %p224 = scmp.eq.s32.totalorder %s29, 1
      %p225 = por %p223, %p224
      %p227 = scmp.ne.s32.totalorder %s212, %s226
      %p228 = scmp.eq.s32.totalorder %s29, 0
      %p229 = por %p227, %p228
      %s231 = sadd.s32 %s230, 1
      %p234 = scmp.eq.s32.totalorder %s23, 1
      %p235 = scmp.ne.s32.totalorder %s230, %s232
      %p236 = scmp.eq.s32.totalorder %s23, 0
      %p237 = por %p235, %p236
      %p238 = scmp.ne.s32.totalorder %s230, %s232
      %p239 = scmp.eq.s32.totalorder %s28, 1
      %p240 = por %p238, %p239
      %p241 = scmp.ne.s32.totalorder %s232, %s233
      %p242 = scmp.eq.s32.totalorder %s28, 0
      %p243 = por %p241, %p242
      %p244 = scmp.ne.s32.totalorder %s232, %s233
      %p245 = scmp.eq.s32.totalorder %s29, 1
      %p246 = por %p244, %p245
      %p248 = scmp.ne.s32.totalorder %s233, %s247
      %p249 = scmp.eq.s32.totalorder %s29, 0
      %p250 = por %p248, %p249
      %s252 = sadd.s32 %s251, 1
      %p255 = scmp.eq.s32.totalorder %s23, 1
      %p256 = scmp.ne.s32.totalorder %s251, %s253
      %p257 = scmp.eq.s32.totalorder %s23, 0
      %p258 = por %p256, %p257
      %p259 = scmp.ne.s32.totalorder %s251, %s253
      %p260 = scmp.eq.s32.totalorder %s28, 1
      %p261 = por %p259, %p260
      %p262 = scmp.ne.s32.totalorder %s253, %s254
      %p263 = scmp.eq.s32.totalorder %s28, 0
      %p264 = por %p262, %p263
      %p265 = scmp.ne.s32.totalorder %s253, %s254
      %p266 = scmp.eq.s32.totalorder %s29, 1
      %p267 = por %p265, %p266
      %p269 = scmp.ne.s32.totalorder %s254, %s268
      %p270 = scmp.eq.s32.totalorder %s29, 0
      %p271 = por %p269, %p270
      %s273 = sadd.s32 %s272, 1
      %p276 = scmp.eq.s32.totalorder %s23, 1
      %p277 = scmp.ne.s32.totalorder %s272, %s274
      %p278 = scmp.eq.s32.totalorder %s23, 0
      %p279 = por %p277, %p278
      %p280 = scmp.ne.s32.totalorder %s272, %s274
      %p281 = scmp.eq.s32.totalorder %s28, 1
      %p282 = por %p280, %p281
      %p283 = scmp.ne.s32.totalorder %s274, %s275
      %p284 = scmp.eq.s32.totalorder %s28, 0
      %p285 = por %p283, %p284
      %p286 = scmp.ne.s32.totalorder %s274, %s275
      %p287 = scmp.eq.s32.totalorder %s29, 1
      %p288 = por %p286, %p287
      %p290 = scmp.ne.s32.totalorder %s275, %s289
      %p291 = scmp.eq.s32.totalorder %s29, 0
      %p292 = por %p290, %p291
      %s294 = sadd.s32 %s293, 1
      %p297 = scmp.eq.s32.totalorder %s23, 1
      %p298 = scmp.ne.s32.totalorder %s293, %s295
      %p299 = scmp.eq.s32.totalorder %s23, 0
      %p300 = por %p298, %p299
      %p301 = scmp.ne.s32.totalorder %s293, %s295
      %p302 = scmp.eq.s32.totalorder %s28, 1
      %p303 = por %p301, %p302
      %p304 = scmp.ne.s32.totalorder %s295, %s296
      %p305 = scmp.eq.s32.totalorder %s28, 0
      %p306 = por %p304, %p305
      %p307 = scmp.ne.s32.totalorder %s295, %s296
      %p308 = scmp.eq.s32.totalorder %s29, 1
      %p309 = por %p307, %p308
      %p311 = scmp.ne.s32.totalorder %s296, %s310
      %p312 = scmp.eq.s32.totalorder %s29, 0
      %p313 = por %p311, %p312
      %s315 = sadd.s32 %s314, 1
      %p318 = scmp.eq.s32.totalorder %s23, 1
      %p319 = scmp.ne.s32.totalorder %s314, %s316
      %p320 = scmp.eq.s32.totalorder %s23, 0
      %p321 = por %p319, %p320
      %p322 = scmp.ne.s32.totalorder %s314, %s316
      %p323 = scmp.eq.s32.totalorder %s28, 1
      %p324 = por %p322, %p323
      %p325 = scmp.ne.s32.totalorder %s316, %s317
      %p326 = scmp.eq.s32.totalorder %s28, 0
      %p327 = por %p325, %p326
      %p328 = scmp.ne.s32.totalorder %s316, %s317
      %p329 = scmp.eq.s32.totalorder %s29, 1
      %p330 = por %p328, %p329
      %p332 = scmp.ne.s32.totalorder %s317, %s331
      %p333 = scmp.eq.s32.totalorder %s29, 0
      %p334 = por %p332, %p333
      %s335 = ssub.s32 %s23, %s30
      %p336 = scmp.eq.s32.totalorder %s335, 0
      %s338 = sadd.s32 %s337, 1
      %s339 = scalar_select %p336, %s337, %s338
      %p342 = pneg %p336
      %p343 = scmp.eq.s32.totalorder %s23, 1
      %p344 = por %p342, %p343
      %p345 = scmp.ne.s32.totalorder %s337, %s340
      %p346 = scmp.eq.s32.totalorder %s23, 0
      %p347 = por %p345, %p346
      %p348 = scmp.ne.s32.totalorder %s337, %s340
      %p349 = scmp.eq.s32.totalorder %s28, 1
      %p350 = por %p348, %p349
      %p351 = scmp.ne.s32.totalorder %s340, %s341
      %p352 = scmp.eq.s32.totalorder %s28, 0
      %p353 = por %p351, %p352
      %p354 = scmp.ne.s32.totalorder %s340, %s341
      %p355 = scmp.eq.s32.totalorder %s29, 1
      %p356 = por %p354, %p355
      %p358 = scmp.ne.s32.totalorder %s341, %s357
      %p359 = scmp.eq.s32.totalorder %s29, 0
      %p360 = por %p358, %p359
      %p361 = scmp.le.s32.totalorder 1, %s23
      %p362 = scmp.lt.s32.totalorder %s23, 3
      %p363 = pnand %p361, %p362
      %p364 = pneg %p363
      // Predicated region
      $region9: #{duet_v2_distributed.1} parent=5 // pred_check
        _
      $region10: #{duet_v2_distributed.1} parent=5 // pred_check_branch
        %366 = sbr.rel (%p363) target = $region12
      $region11: #{duet_v2_distributed.1} parent=5 // pred_region
        %s367 = ssub.s32 %s23, 1
        // Predicated region
        $region13: #{duet_v2_distributed.1} parent=11 // pred_check
          %p368 = pneg %p96
        $region14: #{duet_v2_distributed.1} parent=11 // pred_check_branch
          %370 = sbr.rel (%p368) target = $region16
        $region15: #{duet_v2_distributed.1} parent=11 // pred_region
          _
        $region16: #{duet_v2_distributed.1} parent=11 // pred_fallthru
          _
        // Predicated region
        $region17: #{duet_v2_distributed.1} parent=11 // pred_check
          %p371 = pneg %p117
        $region18: #{duet_v2_distributed.1} parent=11 // pred_check_branch
          %373 = sbr.rel (%p371) target = $region20
        $region19: #{duet_v2_distributed.1} parent=11 // pred_region
          _
        $region20: #{duet_v2_distributed.1} parent=11 // pred_fallthru
          _
        // Predicated region
        $region21: #{duet_v2_distributed.1} parent=11 // pred_check
          %p374 = pneg %p138
        $region22: #{duet_v2_distributed.1} parent=11 // pred_check_branch
          %376 = sbr.rel (%p374) target = $region24
        $region23: #{duet_v2_distributed.1} parent=11 // pred_region
          _
        $region24: #{duet_v2_distributed.1} parent=11 // pred_fallthru
          _
        // Predicated region
        $region25: #{duet_v2_distributed.1} parent=11 // pred_check
          %p377 = pneg %p159
        $region26: #{duet_v2_distributed.1} parent=11 // pred_check_branch
          %379 = sbr.rel (%p377) target = $region28
        $region27: #{duet_v2_distributed.1} parent=11 // pred_region
          _
        $region28: #{duet_v2_distributed.1} parent=11 // pred_fallthru
          _
        // Predicated region
        $region29: #{duet_v2_distributed.1} parent=11 // pred_check
          %p380 = pneg %p180
        $region30: #{duet_v2_distributed.1} parent=11 // pred_check_branch
          %382 = sbr.rel (%p380) target = $region32
        $region31: #{duet_v2_distributed.1} parent=11 // pred_region
          _
        $region32: #{duet_v2_distributed.1} parent=11 // pred_fallthru
          _
        // Predicated region
        $region33: #{duet_v2_distributed.1} parent=11 // pred_check
          %p383 = pneg %p201
        $region34: #{duet_v2_distributed.1} parent=11 // pred_check_branch
          %385 = sbr.rel (%p383) target = $region36
        $region35: #{duet_v2_distributed.1} parent=11 // pred_region
          _
        $region36: #{duet_v2_distributed.1} parent=11 // pred_fallthru
          _
        // Predicated region
        $region37: #{duet_v2_distributed.1} parent=11 // pred_check
          %p386 = pneg %p222
        $region38: #{duet_v2_distributed.1} parent=11 // pred_check_branch
          %388 = sbr.rel (%p386) target = $region40
        $region39: #{duet_v2_distributed.1} parent=11 // pred_region
          _
        $region40: #{duet_v2_distributed.1} parent=11 // pred_fallthru
          _
        // Predicated region
        $region41: #{duet_v2_distributed.1} parent=11 // pred_check
          %p389 = pneg %p243
        $region42: #{duet_v2_distributed.1} parent=11 // pred_check_branch
          %391 = sbr.rel (%p389) target = $region44
        $region43: #{duet_v2_distributed.1} parent=11 // pred_region
          _
        $region44: #{duet_v2_distributed.1} parent=11 // pred_fallthru
          _
        // Predicated region
        $region45: #{duet_v2_distributed.1} parent=11 // pred_check
          %p392 = pneg %p264
        $region46: #{duet_v2_distributed.1} parent=11 // pred_check_branch
          %394 = sbr.rel (%p392) target = $region48
        $region47: #{duet_v2_distributed.1} parent=11 // pred_region
          _
        $region48: #{duet_v2_distributed.1} parent=11 // pred_fallthru
          _
        // Predicated region
        $region49: #{duet_v2_distributed.1} parent=11 // pred_check
          %p395 = pneg %p285
        $region50: #{duet_v2_distributed.1} parent=11 // pred_check_branch
          %397 = sbr.rel (%p395) target = $region52
        $region51: #{duet_v2_distributed.1} parent=11 // pred_region
          _
        $region52: #{duet_v2_distributed.1} parent=11 // pred_fallthru
          _
        // Predicated region
        $region53: #{duet_v2_distributed.1} parent=11 // pred_check
          %p398 = pneg %p306
        $region54: #{duet_v2_distributed.1} parent=11 // pred_check_branch
          %400 = sbr.rel (%p398) target = $region56
        $region55: #{duet_v2_distributed.1} parent=11 // pred_region
          _
        $region56: #{duet_v2_distributed.1} parent=11 // pred_fallthru
          _
        // Predicated region
        $region57: #{duet_v2_distributed.1} parent=11 // pred_check
          %p401 = pneg %p327
        $region58: #{duet_v2_distributed.1} parent=11 // pred_check_branch
          %403 = sbr.rel (%p401) target = $region60
        $region59: #{duet_v2_distributed.1} parent=11 // pred_region
          _
        $region60: #{duet_v2_distributed.1} parent=11 // pred_fallthru
          _
      $region12: #{duet_v2_distributed.1} parent=5 // pred_fallthru
        _
      %p404 = scmp.lt.s32.totalorder %s23, 2
      // Predicated region
      $region61: #{duet_v2_distributed.1} parent=5 // pred_check
        %p405 = pneg %p404
      $region62: #{duet_v2_distributed.1} parent=5 // pred_check_branch
        %407 = sbr.rel (%p405) target = $region64
      $region63: #{duet_v2_distributed.1} parent=5 // pred_region
        // Predicated region
        $region65: #{duet_v2_distributed.1} parent=63 // pred_check
          %p408 = pneg %p43
        $region66: #{duet_v2_distributed.1} parent=63 // pred_check_branch
          %410 = sbr.rel (%p408) target = $region68
        $region67: #{duet_v2_distributed.1} parent=63 // pred_region
          %s411 = sand.u32 %s33, 1
          %s412 = sand.u32 %s33, 1
          %s413 = smul.addr %s412, 64
          %s414 = scalar_lea.vmem [#allocation2], %s413
          %s415 = smul.u32 2, %s23
          %s416 = smul.addr %s415, 4
          %s417 = scalar_lea.vmem %s0, %s416
          // Predicated region
          $region69: #{duet_v2_distributed.1} parent=67 // pred_check
            _
          $region70: #{duet_v2_distributed.1} parent=67 // pred_check_branch
            %419 = sbr.rel (0) target = $region72
          $region71: #{duet_v2_distributed.1} parent=67 // pred_region
            // Predicated region
            $region73: #{duet_v2_distributed.1} parent=71 // pred_check
              _
            $region74: #{duet_v2_distributed.1} parent=71 // pred_check_branch
              %421 = sbr.rel target = $region76
            $region75: #{duet_v2_distributed.1} parent=71 // pred_region
              // Predicated region
              $region88: #{duet_v2_distributed.1} parent=75 // pred_check
                _
              $region89: #{duet_v2_distributed.1} parent=75 // pred_check_branch
                %467 = sbr.rel (0) target = $region91
              $region90: #{duet_v2_distributed.1} parent=75 // pred_region
                loop: start=0, step=1, limit=1
                $region92: #{duet_v2_distributed.1} parent=90 // loop_pre_header
                  _
                $region93: #{duet_v2_distributed.1} parent=90 // loop_header
                  %s469 = sphi 0, %s473
                  %p470 = scmp.ge.s32.totalorder %s469, 1
                  %s474 = sphi %s417, %s417
                  %s475 = sphi %s414, %s414
                $region94: #{duet_v2_distributed.1} parent=90 // loop_header_branch
                  %472 = sbr.rel (%p470) target = $region98
                $region95: #{duet_v2_distributed.1} parent=90 // loop_body
                  _
                $region96: #{duet_v2_distributed.1} parent=90 // loop_footer
                  %s473 = sadd.s32 1, %s469
                $region97: #{duet_v2_distributed.1} parent=90 // loop_footer_branch
                  %468 = sbr.rel target = $region93
                $region98: #{duet_v2_distributed.1} parent=90 // loop_exit
                  _
                %s477 = ssub.s32 16, 1
                loop: start=0, step=1, limit=1
                $region99: #{duet_v2_distributed.1} parent=90 // loop_pre_header
                  _
                $region100: #{duet_v2_distributed.1} parent=90 // loop_header
                  %s479 = sphi 0, %s483
                  %p480 = scmp.ge.s32.totalorder %s479, 1
                  %s484 = sphi %s417, %s417
                  %s485 = sphi %s414, %s414
                $region101: #{duet_v2_distributed.1} parent=90 // loop_header_branch
                  %482 = sbr.rel (%p480) target = $region105
                $region102: #{duet_v2_distributed.1} parent=90 // loop_body
                  %v486 = vld [vmem:[%s484] sm:%s477]
                  %487 = vst [vmem:[%s485] sm:%s477] %v486
                  %v488 = vld [vmem:[%s484 + $0x4] sm:%s477]
                  %489 = vst [vmem:[%s485 + $0x4] sm:%s477] %v488
                  %v490 = vld [vmem:[%s484 + $0x10] sm:%s477]
                  %491 = vst [vmem:[%s485 + $0x8] sm:%s477] %v490
                  %v492 = vld [vmem:[%s484 + $0x14] sm:%s477]
                  %493 = vst [vmem:[%s485 + $0xc] sm:%s477] %v492
                  %v494 = vld [vmem:[%s484 + $0x20] sm:%s477]
                  %495 = vst [vmem:[%s485 + $0x10] sm:%s477] %v494
                  %v496 = vld [vmem:[%s484 + $0x24] sm:%s477]
                  %497 = vst [vmem:[%s485 + $0x14] sm:%s477] %v496
                  %v498 = vld [vmem:[%s484 + $0x30] sm:%s477]
                  %499 = vst [vmem:[%s485 + $0x18] sm:%s477] %v498
                  %v500 = vld [vmem:[%s484 + $0x34] sm:%s477]
                  %501 = vst [vmem:[%s485 + $0x1c] sm:%s477] %v500
                  %v502 = vld [vmem:[%s484 + $0x40] sm:%s477]
                  %503 = vst [vmem:[%s485 + $0x20] sm:%s477] %v502
                  %v504 = vld [vmem:[%s484 + $0x44] sm:%s477]
                  %505 = vst [vmem:[%s485 + $0x24] sm:%s477] %v504
                  %v506 = vld [vmem:[%s484 + $0x50] sm:%s477]
                  %507 = vst [vmem:[%s485 + $0x28] sm:%s477] %v506
                  %v508 = vld [vmem:[%s484 + $0x54] sm:%s477]
                  %509 = vst [vmem:[%s485 + $0x2c] sm:%s477] %v508
                  %v510 = vld [vmem:[%s484 + $0x60] sm:%s477]
                  %511 = vst [vmem:[%s485 + $0x30] sm:%s477] %v510
                  %v512 = vld [vmem:[%s484 + $0x64] sm:%s477]
                  %513 = vst [vmem:[%s485 + $0x34] sm:%s477] %v512
                  %v514 = vld [vmem:[%s484 + $0x70] sm:%s477]
                  %515 = vst [vmem:[%s485 + $0x38] sm:%s477] %v514
                  %v516 = vld [vmem:[%s484 + $0x74] sm:%s477]
                  %517 = vst [vmem:[%s485 + $0x3c] sm:%s477] %v516
                $region103: #{duet_v2_distributed.1} parent=90 // loop_footer
                  %s483 = sadd.s32 1, %s479
                $region104: #{duet_v2_distributed.1} parent=90 // loop_footer_branch
                  %478 = sbr.rel target = $region100
                $region105: #{duet_v2_distributed.1} parent=90 // loop_exit
                  _
              $region91: #{duet_v2_distributed.1} parent=75 // pred_fallthru
                _
            $region76: #{duet_v2_distributed.1} parent=71 // pred_fallthru
              _
            // Predicated region
            $region77: #{duet_v2_distributed.1} parent=71 // pred_check
              _
            $region78: #{duet_v2_distributed.1} parent=71 // pred_check_branch
              %423 = sbr.rel (0) target = $region80
            $region79: #{duet_v2_distributed.1} parent=71 // pred_region
              %s425 = ssub.s32 16, 1
              loop: start=0, step=1, limit=1
              $region81: #{duet_v2_distributed.1} parent=79 // loop_pre_header
                _
              $region82: #{duet_v2_distributed.1} parent=79 // loop_header
                %s427 = sphi 0, %s431
                %p428 = scmp.ge.s32.totalorder %s427, 1
                %s432 = sphi %s417, %s417
                %s433 = sphi %s414, %s414
              $region83: #{duet_v2_distributed.1} parent=79 // loop_header_branch
                %430 = sbr.rel (%p428) target = $region87
              $region84: #{duet_v2_distributed.1} parent=79 // loop_body
                %v434 = vld [vmem:[%s432] sm:%s425]
                %435 = vst [vmem:[%s433] sm:%s425] %v434
                %v436 = vld [vmem:[%s432 + $0x4] sm:%s425]
                %437 = vst [vmem:[%s433 + $0x4] sm:%s425] %v436
                %v438 = vld [vmem:[%s432 + $0x10] sm:%s425]
                %439 = vst [vmem:[%s433 + $0x8] sm:%s425] %v438
                %v440 = vld [vmem:[%s432 + $0x14] sm:%s425]
                %441 = vst [vmem:[%s433 + $0xc] sm:%s425] %v440
                %v442 = vld [vmem:[%s432 + $0x20] sm:%s425]
                %443 = vst [vmem:[%s433 + $0x10] sm:%s425] %v442
                %v444 = vld [vmem:[%s432 + $0x24] sm:%s425]
                %445 = vst [vmem:[%s433 + $0x14] sm:%s425] %v444
                %v446 = vld [vmem:[%s432 + $0x30] sm:%s425]
                %447 = vst [vmem:[%s433 + $0x18] sm:%s425] %v446
                %v448 = vld [vmem:[%s432 + $0x34] sm:%s425]
                %449 = vst [vmem:[%s433 + $0x1c] sm:%s425] %v448
                %v450 = vld [vmem:[%s432 + $0x40] sm:%s425]
                %451 = vst [vmem:[%s433 + $0x20] sm:%s425] %v450
                %v452 = vld [vmem:[%s432 + $0x44] sm:%s425]
                %453 = vst [vmem:[%s433 + $0x24] sm:%s425] %v452
                %v454 = vld [vmem:[%s432 + $0x50] sm:%s425]
                %455 = vst [vmem:[%s433 + $0x28] sm:%s425] %v454
                %v456 = vld [vmem:[%s432 + $0x54] sm:%s425]
                %457 = vst [vmem:[%s433 + $0x2c] sm:%s425] %v456
                %v458 = vld [vmem:[%s432 + $0x60] sm:%s425]
                %459 = vst [vmem:[%s433 + $0x30] sm:%s425] %v458
                %v460 = vld [vmem:[%s432 + $0x64] sm:%s425]
                %461 = vst [vmem:[%s433 + $0x34] sm:%s425] %v460
                %v462 = vld [vmem:[%s432 + $0x70] sm:%s425]
                %463 = vst [vmem:[%s433 + $0x38] sm:%s425] %v462
                %v464 = vld [vmem:[%s432 + $0x74] sm:%s425]
                %465 = vst [vmem:[%s433 + $0x3c] sm:%s425] %v464
              $region85: #{duet_v2_distributed.1} parent=79 // loop_footer
                %s431 = sadd.s32 1, %s427
              $region86: #{duet_v2_distributed.1} parent=79 // loop_footer_branch
                %426 = sbr.rel target = $region82
              $region87: #{duet_v2_distributed.1} parent=79 // loop_exit
                _
            $region80: #{duet_v2_distributed.1} parent=71 // pred_fallthru
              _
          $region72: #{duet_v2_distributed.1} parent=67 // pred_fallthru
            _
          %518 = vnop
        $region68: #{duet_v2_distributed.1} parent=63 // pred_fallthru
          _
        // Predicated region
        $region106: #{duet_v2_distributed.1} parent=63 // pred_check
          %p519 = pneg %p69
        $region107: #{duet_v2_distributed.1} parent=63 // pred_check_branch
          %521 = sbr.rel (%p519) target = $region109
        $region108: #{duet_v2_distributed.1} parent=63 // pred_region
          %s522 = sand.u32 %s59, 1
          %s523 = sand.u32 %s59, 1
          %s524 = smul.addr %s523, 128
          %s525 = scalar_lea.vmem [#allocation3], %s524
          %s526 = smul.u32 2, %s23
          %s527 = smul.addr %s526, 4
          %s528 = scalar_lea.vmem %s1, %s527
          // Predicated region
          $region110: #{duet_v2_distributed.1} parent=108 // pred_check
            _
          $region111: #{duet_v2_distributed.1} parent=108 // pred_check_branch
            %530 = sbr.rel (0) target = $region113
          $region112: #{duet_v2_distributed.1} parent=108 // pred_region
            // Predicated region
            $region114: #{duet_v2_distributed.1} parent=112 // pred_check
              _
            $region115: #{duet_v2_distributed.1} parent=112 // pred_check_branch
              %532 = sbr.rel target = $region117
            $region116: #{duet_v2_distributed.1} parent=112 // pred_region
              // Predicated region
              $region129: #{duet_v2_distributed.1} parent=116 // pred_check
                _
              $region130: #{duet_v2_distributed.1} parent=116 // pred_check_branch
                %610 = sbr.rel (0) target = $region132
              $region131: #{duet_v2_distributed.1} parent=116 // pred_region
                loop: start=0, step=1, limit=1
                $region133: #{duet_v2_distributed.1} parent=131 // loop_pre_header
                  _
                $region134: #{duet_v2_distributed.1} parent=131 // loop_header
                  %s612 = sphi 0, %s616
                  %p613 = scmp.ge.s32.totalorder %s612, 1
                  %s617 = sphi %s528, %s528
                  %s618 = sphi %s525, %s525
                $region135: #{duet_v2_distributed.1} parent=131 // loop_header_branch
                  %615 = sbr.rel (%p613) target = $region139
                $region136: #{duet_v2_distributed.1} parent=131 // loop_body
                  _
                $region137: #{duet_v2_distributed.1} parent=131 // loop_footer
                  %s616 = sadd.s32 1, %s612
                $region138: #{duet_v2_distributed.1} parent=131 // loop_footer_branch
                  %611 = sbr.rel target = $region134
                $region139: #{duet_v2_distributed.1} parent=131 // loop_exit
                  _
                %s620 = ssub.s32 16, 1
                loop: start=0, step=1, limit=1
                $region140: #{duet_v2_distributed.1} parent=131 // loop_pre_header
                  _
                $region141: #{duet_v2_distributed.1} parent=131 // loop_header
                  %s622 = sphi 0, %s626
                  %p623 = scmp.ge.s32.totalorder %s622, 1
                  %s627 = sphi %s528, %s528
                  %s628 = sphi %s525, %s525
                $region142: #{duet_v2_distributed.1} parent=131 // loop_header_branch
                  %625 = sbr.rel (%p623) target = $region146
                $region143: #{duet_v2_distributed.1} parent=131 // loop_body
                  %v629 = vld [vmem:[%s627] sm:%s620]
                  %630 = vst [vmem:[%s628] sm:%s620] %v629
                  %v631 = vld [vmem:[%s627 + $0x4] sm:%s620]
                  %632 = vst [vmem:[%s628 + $0x4] sm:%s620] %v631
                  %v633 = vld [vmem:[%s627 + $0x10] sm:%s620]
                  %634 = vst [vmem:[%s628 + $0x8] sm:%s620] %v633
                  %v635 = vld [vmem:[%s627 + $0x14] sm:%s620]
                  %636 = vst [vmem:[%s628 + $0xc] sm:%s620] %v635
                  %v637 = vld [vmem:[%s627 + $0x20] sm:%s620]
                  %638 = vst [vmem:[%s628 + $0x10] sm:%s620] %v637
                  %v639 = vld [vmem:[%s627 + $0x24] sm:%s620]
                  %640 = vst [vmem:[%s628 + $0x14] sm:%s620] %v639
                  %v641 = vld [vmem:[%s627 + $0x30] sm:%s620]
                  %642 = vst [vmem:[%s628 + $0x18] sm:%s620] %v641
                  %v643 = vld [vmem:[%s627 + $0x34] sm:%s620]
                  %644 = vst [vmem:[%s628 + $0x1c] sm:%s620] %v643
                  %v645 = vld [vmem:[%s627 + $0x40] sm:%s620]
                  %646 = vst [vmem:[%s628 + $0x20] sm:%s620] %v645
                  %v647 = vld [vmem:[%s627 + $0x44] sm:%s620]
                  %648 = vst [vmem:[%s628 + $0x24] sm:%s620] %v647
                  %v649 = vld [vmem:[%s627 + $0x50] sm:%s620]
                  %650 = vst [vmem:[%s628 + $0x28] sm:%s620] %v649
                  %v651 = vld [vmem:[%s627 + $0x54] sm:%s620]
                  %652 = vst [vmem:[%s628 + $0x2c] sm:%s620] %v651
                  %v653 = vld [vmem:[%s627 + $0x60] sm:%s620]
                  %654 = vst [vmem:[%s628 + $0x30] sm:%s620] %v653
                  %v655 = vld [vmem:[%s627 + $0x64] sm:%s620]
                  %656 = vst [vmem:[%s628 + $0x34] sm:%s620] %v655
                  %v657 = vld [vmem:[%s627 + $0x70] sm:%s620]
                  %658 = vst [vmem:[%s628 + $0x38] sm:%s620] %v657
                  %v659 = vld [vmem:[%s627 + $0x74] sm:%s620]
                  %660 = vst [vmem:[%s628 + $0x3c] sm:%s620] %v659
                  %v661 = vld [vmem:[%s627 + $0x80] sm:%s620]
                  %662 = vst [vmem:[%s628 + $0x40] sm:%s620] %v661
                  %v663 = vld [vmem:[%s627 + $0x84] sm:%s620]
                  %664 = vst [vmem:[%s628 + $0x44] sm:%s620] %v663
                  %v665 = vld [vmem:[%s627 + $0x90] sm:%s620]
                  %666 = vst [vmem:[%s628 + $0x48] sm:%s620] %v665
                  %v667 = vld [vmem:[%s627 + $0x94] sm:%s620]
                  %668 = vst [vmem:[%s628 + $0x4c] sm:%s620] %v667
                  %v669 = vld [vmem:[%s627 + $0xa0] sm:%s620]
                  %670 = vst [vmem:[%s628 + $0x50] sm:%s620] %v669
                  %v671 = vld [vmem:[%s627 + $0xa4] sm:%s620]
                  %672 = vst [vmem:[%s628 + $0x54] sm:%s620] %v671
                  %v673 = vld [vmem:[%s627 + $0xb0] sm:%s620]
                  %674 = vst [vmem:[%s628 + $0x58] sm:%s620] %v673
                  %v675 = vld [vmem:[%s627 + $0xb4] sm:%s620]
                  %676 = vst [vmem:[%s628 + $0x5c] sm:%s620] %v675
                  %v677 = vld [vmem:[%s627 + $0xc0] sm:%s620]
                  %678 = vst [vmem:[%s628 + $0x60] sm:%s620] %v677
                  %v679 = vld [vmem:[%s627 + $0xc4] sm:%s620]
                  %680 = vst [vmem:[%s628 + $0x64] sm:%s620] %v679
                  %v681 = vld [vmem:[%s627 + $0xd0] sm:%s620]
                  %682 = vst [vmem:[%s628 + $0x68] sm:%s620] %v681
                  %v683 = vld [vmem:[%s627 + $0xd4] sm:%s620]
                  %684 = vst [vmem:[%s628 + $0x6c] sm:%s620] %v683
                  %v685 = vld [vmem:[%s627 + $0xe0] sm:%s620]
                  %686 = vst [vmem:[%s628 + $0x70] sm:%s620] %v685
                  %v687 = vld [vmem:[%s627 + $0xe4] sm:%s620]
                  %688 = vst [vmem:[%s628 + $0x74] sm:%s620] %v687
                  %v689 = vld [vmem:[%s627 + $0xf0] sm:%s620]
                  %690 = vst [vmem:[%s628 + $0x78] sm:%s620] %v689
                  %v691 = vld [vmem:[%s627 + $0xf4] sm:%s620]
                  %692 = vst [vmem:[%s628 + $0x7c] sm:%s620] %v691
                $region144: #{duet_v2_distributed.1} parent=131 // loop_footer
                  %s626 = sadd.s32 1, %s622
                $region145: #{duet_v2_distributed.1} parent=131 // loop_footer_branch
                  %621 = sbr.rel target = $region141
                $region146: #{duet_v2_distributed.1} parent=131 // loop_exit
                  _
              $region132: #{duet_v2_distributed.1} parent=116 // pred_fallthru
                _
            $region117: #{duet_v2_distributed.1} parent=112 // pred_fallthru
              _
            // Predicated region
            $region118: #{duet_v2_distributed.1} parent=112 // pred_check
              _
            $region119: #{duet_v2_distributed.1} parent=112 // pred_check_branch
              %534 = sbr.rel (0) target = $region121
            $region120: #{duet_v2_distributed.1} parent=112 // pred_region
              %s536 = ssub.s32 16, 1
              loop: start=0, step=1, limit=1
              $region122: #{duet_v2_distributed.1} parent=120 // loop_pre_header
                _
              $region123: #{duet_v2_distributed.1} parent=120 // loop_header
                %s538 = sphi 0, %s542
                %p539 = scmp.ge.s32.totalorder %s538, 1
                %s543 = sphi %s528, %s528
                %s544 = sphi %s525, %s525
              $region124: #{duet_v2_distributed.1} parent=120 // loop_header_branch
                %541 = sbr.rel (%p539) target = $region128
              $region125: #{duet_v2_distributed.1} parent=120 // loop_body
                %v545 = vld [vmem:[%s543] sm:%s536]
                %546 = vst [vmem:[%s544] sm:%s536] %v545
                %v547 = vld [vmem:[%s543 + $0x4] sm:%s536]
                %548 = vst [vmem:[%s544 + $0x4] sm:%s536] %v547
                %v549 = vld [vmem:[%s543 + $0x10] sm:%s536]
                %550 = vst [vmem:[%s544 + $0x8] sm:%s536] %v549
                %v551 = vld [vmem:[%s543 + $0x14] sm:%s536]
                %552 = vst [vmem:[%s544 + $0xc] sm:%s536] %v551
                %v553 = vld [vmem:[%s543 + $0x20] sm:%s536]
                %554 = vst [vmem:[%s544 + $0x10] sm:%s536] %v553
                %v555 = vld [vmem:[%s543 + $0x24] sm:%s536]
                %556 = vst [vmem:[%s544 + $0x14] sm:%s536] %v555
                %v557 = vld [vmem:[%s543 + $0x30] sm:%s536]
                %558 = vst [vmem:[%s544 + $0x18] sm:%s536] %v557
                %v559 = vld [vmem:[%s543 + $0x34] sm:%s536]
                %560 = vst [vmem:[%s544 + $0x1c] sm:%s536] %v559
                %v561 = vld [vmem:[%s543 + $0x40] sm:%s536]
                %562 = vst [vmem:[%s544 + $0x20] sm:%s536] %v561
                %v563 = vld [vmem:[%s543 + $0x44] sm:%s536]
                %564 = vst [vmem:[%s544 + $0x24] sm:%s536] %v563
                %v565 = vld [vmem:[%s543 + $0x50] sm:%s536]
                %566 = vst [vmem:[%s544 + $0x28] sm:%s536] %v565
                %v567 = vld [vmem:[%s543 + $0x54] sm:%s536]
                %568 = vst [vmem:[%s544 + $0x2c] sm:%s536] %v567
                %v569 = vld [vmem:[%s543 + $0x60] sm:%s536]
                %570 = vst [vmem:[%s544 + $0x30] sm:%s536] %v569
                %v571 = vld [vmem:[%s543 + $0x64] sm:%s536]
                %572 = vst [vmem:[%s544 + $0x34] sm:%s536] %v571
                %v573 = vld [vmem:[%s543 + $0x70] sm:%s536]
                %574 = vst [vmem:[%s544 + $0x38] sm:%s536] %v573
                %v575 = vld [vmem:[%s543 + $0x74] sm:%s536]
                %576 = vst [vmem:[%s544 + $0x3c] sm:%s536] %v575
                %v577 = vld [vmem:[%s543 + $0x80] sm:%s536]
                %578 = vst [vmem:[%s544 + $0x40] sm:%s536] %v577
                %v579 = vld [vmem:[%s543 + $0x84] sm:%s536]
                %580 = vst [vmem:[%s544 + $0x44] sm:%s536] %v579
                %v581 = vld [vmem:[%s543 + $0x90] sm:%s536]
                %582 = vst [vmem:[%s544 + $0x48] sm:%s536] %v581
                %v583 = vld [vmem:[%s543 + $0x94] sm:%s536]
                %584 = vst [vmem:[%s544 + $0x4c] sm:%s536] %v583
                %v585 = vld [vmem:[%s543 + $0xa0] sm:%s536]
                %586 = vst [vmem:[%s544 + $0x50] sm:%s536] %v585
                %v587 = vld [vmem:[%s543 + $0xa4] sm:%s536]
                %588 = vst [vmem:[%s544 + $0x54] sm:%s536] %v587
                %v589 = vld [vmem:[%s543 + $0xb0] sm:%s536]
                %590 = vst [vmem:[%s544 + $0x58] sm:%s536] %v589
                %v591 = vld [vmem:[%s543 + $0xb4] sm:%s536]
                %592 = vst [vmem:[%s544 + $0x5c] sm:%s536] %v591
                %v593 = vld [vmem:[%s543 + $0xc0] sm:%s536]
                %594 = vst [vmem:[%s544 + $0x60] sm:%s536] %v593
                %v595 = vld [vmem:[%s543 + $0xc4] sm:%s536]
                %596 = vst [vmem:[%s544 + $0x64] sm:%s536] %v595
                %v597 = vld [vmem:[%s543 + $0xd0] sm:%s536]
                %598 = vst [vmem:[%s544 + $0x68] sm:%s536] %v597
                %v599 = vld [vmem:[%s543 + $0xd4] sm:%s536]
                %600 = vst [vmem:[%s544 + $0x6c] sm:%s536] %v599
                %v601 = vld [vmem:[%s543 + $0xe0] sm:%s536]
                %602 = vst [vmem:[%s544 + $0x70] sm:%s536] %v601
                %v603 = vld [vmem:[%s543 + $0xe4] sm:%s536]
                %604 = vst [vmem:[%s544 + $0x74] sm:%s536] %v603
                %v605 = vld [vmem:[%s543 + $0xf0] sm:%s536]
                %606 = vst [vmem:[%s544 + $0x78] sm:%s536] %v605
                %v607 = vld [vmem:[%s543 + $0xf4] sm:%s536]
                %608 = vst [vmem:[%s544 + $0x7c] sm:%s536] %v607
              $region126: #{duet_v2_distributed.1} parent=120 // loop_footer
                %s542 = sadd.s32 1, %s538
              $region127: #{duet_v2_distributed.1} parent=120 // loop_footer_branch
                %537 = sbr.rel target = $region123
              $region128: #{duet_v2_distributed.1} parent=120 // loop_exit
                _
            $region121: #{duet_v2_distributed.1} parent=112 // pred_fallthru
              _
          $region113: #{duet_v2_distributed.1} parent=108 // pred_fallthru
            _
          %693 = vnop
        $region109: #{duet_v2_distributed.1} parent=63 // pred_fallthru
          _
      $region64: #{duet_v2_distributed.1} parent=5 // pred_fallthru
        _
      %p694 = scmp.le.s32.totalorder 1, %s23
      %p695 = scmp.lt.s32.totalorder %s23, 3
      %p696 = pnand %p694, %p695
      %p697 = pneg %p696
      // Predicated region
      $region147: #{duet_v2_distributed.1} parent=5 // pred_check
        _
      $region148: #{duet_v2_distributed.1} parent=5 // pred_check_branch
        %699 = sbr.rel (%p696) target = $region150
      $region149: #{duet_v2_distributed.1} parent=5 // pred_region
        %s700 = ssub.s32 %s23, 1
        %s701 = sand.u32 %s36, 1
        %s702 = sand.u32 %s36, 1
        %s703 = smul.addr %s702, 64
        %s704 = scalar_lea.vmem [#allocation2], %s703
        // Predicated region
        $region151: #{duet_v2_distributed.1} parent=149 // pred_check
          %p705 = pneg %p49
        $region152: #{duet_v2_distributed.1} parent=149 // pred_check_branch
          %707 = sbr.rel (%p705) target = $region154
        $region153: #{duet_v2_distributed.1} parent=149 // pred_region
          _
        $region154: #{duet_v2_distributed.1} parent=149 // pred_fallthru
          _
        %s708 = sand.u32 %s62, 1
        %s709 = sand.u32 %s62, 1
        %s710 = smul.addr %s709, 128
        %s711 = scalar_lea.vmem [#allocation3], %s710
        // Predicated region
        $region155: #{duet_v2_distributed.1} parent=149 // pred_check
          %p712 = pneg %p75
        $region156: #{duet_v2_distributed.1} parent=149 // pred_check_branch
          %714 = sbr.rel (%p712) target = $region158
        $region157: #{duet_v2_distributed.1} parent=149 // pred_region
          _
        $region158: #{duet_v2_distributed.1} parent=149 // pred_fallthru
          _
        %s715 = sand.u32 %s36, 1
        %s716 = sand.u32 %s36, 1
        %s717 = smul.addr %s716, 64
        %s718 = scalar_lea.vmem [#allocation2], %s717
        %p719 = pneg %p49
        %p720 = pneg %p46
        %s721 = sand.u32 %s62, 1
        %s722 = sand.u32 %s62, 1
        %s723 = smul.addr %s722, 128
        %s724 = scalar_lea.vmem [#allocation3], %s723
        %p725 = pneg %p75
        %p726 = pneg %p72
        %p727 = pneg %p96
        %p728 = pneg %p93
        %p729 = pneg %p117
        %p730 = pneg %p114
        %p731 = pneg %p138
        %p732 = pneg %p135
        %p733 = pneg %p159
        %p734 = pneg %p156
        %p735 = pneg %p180
        %p736 = pneg %p177
        %p737 = pneg %p201
        %p738 = pneg %p198
        %p739 = pneg %p222
        %p740 = pneg %p219
        %p741 = pneg %p243
        %p742 = pneg %p240
        %p743 = pneg %p264
        %p744 = pneg %p261
        %p745 = pneg %p285
        %p746 = pneg %p282
        %p747 = pneg %p306
        %p748 = pneg %p303
        %p749 = pneg %p327
        %p750 = pneg %p324
        %p751 = pneg %p353
        %p752 = pneg %p350
        %s753 = sand.u32 %s340, 1
        %s754 = scalar_lea.sflag [#allocation5], %s753
        %s755 = sand.u32 %s340, 1
        %s756 = smul.addr %s755, 16
        %s757 = scalar_lea.vmem [#allocation4], %s756
        %s758 = smul.u32 2, %s28
        %s759 = smul.u32 2, %s28
        %s760 = smul.u32 2, %s28
        %v762 = vld [vmem:[%s704] sm:$0xf]
        %v763 = vld [vmem:[%s704 + $0x4] sm:$0xf]
        %v764 = vld [vmem:[%s704 + $0x8] sm:$0xf]
        %v765 = vld [vmem:[%s704 + $0xc] sm:$0xf]
        %v766 = vld [vmem:[%s704 + $0x10] sm:$0xf]
        %v767 = vld [vmem:[%s704 + $0x14] sm:$0xf]
        %v768 = vld [vmem:[%s704 + $0x18] sm:$0xf]
        %v769 = vld [vmem:[%s704 + $0x1c] sm:$0xf]
        %v770 = vld [vmem:[%s704 + $0x20] sm:$0xf]
        %v771 = vld [vmem:[%s704 + $0x24] sm:$0xf]
        %v772 = vld [vmem:[%s704 + $0x28] sm:$0xf]
        %v773 = vld [vmem:[%s704 + $0x2c] sm:$0xf]
        %v774 = vld [vmem:[%s2] sm:$0xf]
        %v775 = vld [vmem:[%s2 + $0x4] sm:$0xf]
        %s776 = scalar_lea.vmem %s704, 8 [#allocation2]
        %v777 = vld [vmem:[%s776] sm:$0xf]
        %v778 = vld [vmem:[%s776 + $0x4] sm:$0xf]
        %v779 = vld [vmem:[%s776 + $0x8] sm:$0xf]
        %v780 = vld [vmem:[%s776 + $0xc] sm:$0xf]
        %v781 = vld [vmem:[%s776 + $0x10] sm:$0xf]
        %v782 = vld [vmem:[%s776 + $0x14] sm:$0xf]
        %v783 = vld [vmem:[%s776 + $0x18] sm:$0xf]
        %v784 = vld [vmem:[%s776 + $0x1c] sm:$0xf]
        %v785 = vld [vmem:[%s776 + $0x20] sm:$0xf]
        %v786 = vld [vmem:[%s776 + $0x24] sm:$0xf]
        %v787 = vld [vmem:[%s776 + $0x28] sm:$0xf]
        %v788 = vld [vmem:[%s776 + $0x2c] sm:$0xf]
        %s789 = scalar_lea.vmem %s2, 8
        %v790 = vld [vmem:[%s789] sm:$0xf]
        %v791 = vld [vmem:[%s789 + $0x4] sm:$0xf]
        %v804 = vunpack.c.l.b16 %v777
        %v805 = vunpack.c.l.b16 %v778
        %v806 = vunpack.c.l.b16 %v779
        %v807 = vunpack.c.l.b16 %v780
        %v808 = vunpack.c.l.b16 %v781
        %v809 = vunpack.c.l.b16 %v782
        %v810 = vunpack.c.l.b16 %v783
        %v811 = vunpack.c.l.b16 %v784
        %v812 = vunpack.c.l.b16 %v785
        %v813 = vunpack.c.l.b16 %v786
        %v814 = vunpack.c.l.b16 %v787
        %v815 = vunpack.c.l.b16 %v788
        %v816 = vpack.c.b16 %v805, %v804
        %v817 = vpack.c.b16 %v807, %v806
        %v818 = vpack.c.b16 %v809, %v808
        %v819 = vpack.c.b16 %v811, %v810
        %v820 = vpack.c.b16 %v813, %v812
        %v821 = vpack.c.b16 %v815, %v814
        %v824 = vunpack.c.l.b16 %v790
        %v825 = vunpack.c.l.b16 %v791
        %v826 = vpack.c.b16 %v825, %v824
        %vm828 = vcmask 130048
        %v830 = vsel %vm828, %v816, 0
        %v833 = vsel %vm828, %v817, 0
        %v836 = vsel %vm828, %v818, 0
        %v839 = vsel %vm828, %v819, 0
        %v842 = vsel %vm828, %v820, 0
        %v845 = vsel %vm828, %v821, 0
        %847 = vmatprep.subr.bf16.mxu0 0
        %848 = vmatpush1.bf16.msra.mxu0 0
        %849 = vmatprep.subr.bf16.mxu0 0
        %850 = vmatpush1.bf16.msra.mxu0 0
        %851 = vmatprep.subr.bf16.mxu0 0
        %852 = vmatpush1.bf16.msra.mxu0 0
        %853 = vmatprep.subr.bf16.mxu0 0
        %854 = vmatpush1.bf16.msra.mxu0 0
        %855 = vmatprep.subr.bf16.mxu0 0
        %856 = vmatpush1.bf16.msra.mxu0 0
        %857 = vmatprep.subr.bf16.mxu0 0
        %858 = vmatpush1.bf16.msra.mxu0 0
        %859 = vmatprep.subr.bf16.mxu0 0
        %860 = vmatpush1.bf16.msra.mxu0 0
        %861 = vmatprep.subr.bf16.mxu0 0
        %862 = vmatpush1.bf16.msra.mxu0 %v826
        %863 = vmatprep.subr.bf16.mxu0 0
        %864 = vmatpush2.bf16.msra.mxu0 0
        %865 = vmatprep.subr.bf16.mxu0 0
        %866 = vmatpush2.bf16.msra.mxu0 0
        %867 = vmatprep.subr.bf16.mxu0 0
        %868 = vmatpush2.bf16.msra.mxu0 0
        %869 = vmatprep.subr.bf16.mxu0 0
        %870 = vmatpush2.bf16.msra.mxu0 0
        %871 = vmatprep.subr.bf16.mxu0 0
        %872 = vmatpush2.bf16.msra.mxu0 0
        %873 = vmatprep.subr.bf16.mxu0 0
        %874 = vmatpush2.bf16.msra.mxu0 0
        %875 = vmatprep.subr.bf16.mxu0 0
        %876 = vmatpush2.bf16.msra.mxu0 0
        %877 = vmatprep.subr.bf16.mxu0 0
        %878 = vmatpush2.bf16.msra.mxu0 0
        %879 = vmatprep.mubr.bf16.mxu0 0
        %880 = vmatmul.mubr.bf16.gmra.mxu0 %v830
        %v881 = vpop.f32.mrf.mxu0
        %v882 = vadd.f32 0.0, %v881
        %v883 = vpop.f32.mrf.mxu0
        %v884 = vpop.f32.mrf.mxu0
        %v885 = vadd.f32 0.0, %v884
        %v886 = vpop.f32.mrf.mxu0
        %887 = vmatprep.mubr.bf16.mxu0 0
        %888 = vmatmul.mubr.bf16.gmra.mxu0 %v833
        %v889 = vpop.f32.mrf.mxu0
        %v890 = vadd.f32 0.0, %v889
        %v891 = vpop.f32.mrf.mxu0
        %v892 = vpop.f32.mrf.mxu0
        %v893 = vadd.f32 0.0, %v892
        %v894 = vpop.f32.mrf.mxu0
        %895 = vmatprep.mubr.bf16.mxu0 0
        %896 = vmatmul.mubr.bf16.gmra.mxu0 %v836
        %v897 = vpop.f32.mrf.mxu0
        %v898 = vadd.f32 0.0, %v897
        %v899 = vpop.f32.mrf.mxu0
        %v900 = vpop.f32.mrf.mxu0
        %v901 = vadd.f32 0.0, %v900
        %v902 = vpop.f32.mrf.mxu0
        %903 = vmatprep.mubr.bf16.mxu0 0
        %904 = vmatmul.mubr.bf16.gmra.mxu0 %v839
        %v905 = vpop.f32.mrf.mxu0
        %v906 = vadd.f32 0.0, %v905
        %v907 = vpop.f32.mrf.mxu0
        %v908 = vpop.f32.mrf.mxu0
        %v909 = vadd.f32 0.0, %v908
        %v910 = vpop.f32.mrf.mxu0
        %911 = vmatprep.mubr.bf16.mxu0 0
        %912 = vmatmul.mubr.bf16.gmra.mxu0 %v842
        %v913 = vpop.f32.mrf.mxu0
        %v914 = vadd.f32 0.0, %v913
        %v915 = vpop.f32.mrf.mxu0
        %v916 = vpop.f32.mrf.mxu0
        %v917 = vadd.f32 0.0, %v916
        %v918 = vpop.f32.mrf.mxu0
        %919 = vmatprep.mubr.bf16.mxu0 0
        %920 = vmatmul.mubr.bf16.gmra.mxu0 %v845
        %v921 = vpop.f32.mrf.mxu0
        %v922 = vadd.f32 0.0, %v921
        %v923 = vpop.f32.mrf.mxu0
        %v924 = vpop.f32.mrf.mxu0
        %v925 = vadd.f32 0.0, %v924
        %v926 = vpop.f32.mrf.mxu0
        %927 = vdwg.mxu0
        %v940 = vunpack.c.l.b16 %v762
        %v941 = vunpack.c.l.b16 %v763
        %v942 = vunpack.c.l.b16 %v764
        %v943 = vunpack.c.l.b16 %v765
        %v944 = vunpack.c.l.b16 %v766
        %v945 = vunpack.c.l.b16 %v767
        %v946 = vunpack.c.l.b16 %v768
        %v947 = vunpack.c.l.b16 %v769
        %v948 = vunpack.c.l.b16 %v770
        %v949 = vunpack.c.l.b16 %v771
        %v950 = vunpack.c.l.b16 %v772
        %v951 = vunpack.c.l.b16 %v773
        %v952 = vpack.c.b16 %v941, %v940
        %v953 = vpack.c.b16 %v943, %v942
        %v954 = vpack.c.b16 %v945, %v944
        %v955 = vpack.c.b16 %v947, %v946
        %v956 = vpack.c.b16 %v949, %v948
        %v957 = vpack.c.b16 %v951, %v950
        %v960 = vunpack.c.l.b16 %v774
        %v961 = vunpack.c.l.b16 %v775
        %v962 = vpack.c.b16 %v961, %v960
        %v965 = vsel %vm828, %v952, 0
        %v968 = vsel %vm828, %v953, 0
        %v971 = vsel %vm828, %v954, 0
        %v974 = vsel %vm828, %v955, 0
        %v977 = vsel %vm828, %v956, 0
        %v980 = vsel %vm828, %v957, 0
        %982 = vmatprep.subr.bf16.mxu0 0
        %983 = vmatpush1.bf16.msra.mxu0 0
        %984 = vmatprep.subr.bf16.mxu0 0
        %985 = vmatpush1.bf16.msra.mxu0 0
        %986 = vmatprep.subr.bf16.mxu0 0
        %987 = vmatpush1.bf16.msra.mxu0 0
        %988 = vmatprep.subr.bf16.mxu0 0
        %989 = vmatpush1.bf16.msra.mxu0 0
        %990 = vmatprep.subr.bf16.mxu0 0
        %991 = vmatpush1.bf16.msra.mxu0 0
        %992 = vmatprep.subr.bf16.mxu0 0
        %993 = vmatpush1.bf16.msra.mxu0 0
        %994 = vmatprep.subr.bf16.mxu0 0
        %995 = vmatpush1.bf16.msra.mxu0 0
        %996 = vmatprep.subr.bf16.mxu0 0
        %997 = vmatpush1.bf16.msra.mxu0 %v962
        %998 = vmatprep.subr.bf16.mxu0 0
        %999 = vmatpush2.bf16.msra.mxu0 0
        %1000 = vmatprep.subr.bf16.mxu0 0
        %1001 = vmatpush2.bf16.msra.mxu0 0
        %1002 = vmatprep.subr.bf16.mxu0 0
        %1003 = vmatpush2.bf16.msra.mxu0 0
        %1004 = vmatprep.subr.bf16.mxu0 0
        %1005 = vmatpush2.bf16.msra.mxu0 0
        %1006 = vmatprep.subr.bf16.mxu0 0
        %1007 = vmatpush2.bf16.msra.mxu0 0
        %1008 = vmatprep.subr.bf16.mxu0 0
        %1009 = vmatpush2.bf16.msra.mxu0 0
        %1010 = vmatprep.subr.bf16.mxu0 0
        %1011 = vmatpush2.bf16.msra.mxu0 0
        %1012 = vmatprep.subr.bf16.mxu0 0
        %1013 = vmatpush2.bf16.msra.mxu0 0
        %1014 = vmatprep.mubr.bf16.mxu0 0
        %1015 = vmatmul.mubr.bf16.gmra.mxu0 %v965
        %v1016 = vpop.f32.mrf.mxu0
        %v1017 = vadd.f32 %v882, %v1016
        %v1018 = vpop.f32.mrf.mxu0
        %v1019 = vpop.f32.mrf.mxu0
        %v1020 = vadd.f32 %v885, %v1019
        %v1021 = vpop.f32.mrf.mxu0
        %1022 = vmatprep.mubr.bf16.mxu0 0
        %1023 = vmatmul.mubr.bf16.gmra.mxu0 %v968
        %v1024 = vpop.f32.mrf.mxu0
        %v1025 = vadd.f32 %v890, %v1024
        %v1026 = vpop.f32.mrf.mxu0
        %v1027 = vpop.f32.mrf.mxu0
        %v1028 = vadd.f32 %v893, %v1027
        %v1029 = vpop.f32.mrf.mxu0
        %1030 = vmatprep.mubr.bf16.mxu0 0
        %1031 = vmatmul.mubr.bf16.gmra.mxu0 %v971
        %v1032 = vpop.f32.mrf.mxu0
        %v1033 = vadd.f32 %v898, %v1032
        %v1034 = vpop.f32.mrf.mxu0
        %v1035 = vpop.f32.mrf.mxu0
        %v1036 = vadd.f32 %v901, %v1035
        %v1037 = vpop.f32.mrf.mxu0
        %1038 = vmatprep.mubr.bf16.mxu0 0
        %1039 = vmatmul.mubr.bf16.gmra.mxu0 %v974
        %v1040 = vpop.f32.mrf.mxu0
        %v1041 = vadd.f32 %v906, %v1040
        %v1042 = vpop.f32.mrf.mxu0
        %v1043 = vpop.f32.mrf.mxu0
        %v1044 = vadd.f32 %v909, %v1043
        %v1045 = vpop.f32.mrf.mxu0
        %1046 = vmatprep.mubr.bf16.mxu0 0
        %1047 = vmatmul.mubr.bf16.gmra.mxu0 %v977
        %v1048 = vpop.f32.mrf.mxu0
        %v1049 = vadd.f32 %v914, %v1048
        %v1050 = vpop.f32.mrf.mxu0
        %v1051 = vpop.f32.mrf.mxu0
        %v1052 = vadd.f32 %v917, %v1051
        %v1053 = vpop.f32.mrf.mxu0
        %1054 = vmatprep.mubr.bf16.mxu0 0
        %1055 = vmatmul.mubr.bf16.gmra.mxu0 %v980
        %v1056 = vpop.f32.mrf.mxu0
        %v1057 = vadd.f32 %v922, %v1056
        %v1058 = vpop.f32.mrf.mxu0
        %v1059 = vpop.f32.mrf.mxu0
        %v1060 = vadd.f32 %v925, %v1059
        %v1061 = vpop.f32.mrf.mxu0
        %1062 = vdwg.mxu0
        %s1063 = scalar_lea.vmem %s704, 16 [#allocation2]
        %v1064 = vld [vmem:[%s1063] sm:$0xf]
        %v1065 = vld [vmem:[%s1063 + $0x4] sm:$0xf]
        %v1066 = vld [vmem:[%s1063 + $0x8] sm:$0xf]
        %v1067 = vld [vmem:[%s1063 + $0xc] sm:$0xf]
        %v1068 = vld [vmem:[%s1063 + $0x10] sm:$0xf]
        %v1069 = vld [vmem:[%s1063 + $0x14] sm:$0xf]
        %v1070 = vld [vmem:[%s1063 + $0x18] sm:$0xf]
        %v1071 = vld [vmem:[%s1063 + $0x1c] sm:$0xf]
        %v1072 = vld [vmem:[%s1063 + $0x20] sm:$0xf]
        %v1073 = vld [vmem:[%s1063 + $0x24] sm:$0xf]
        %v1074 = vld [vmem:[%s1063 + $0x28] sm:$0xf]
        %v1075 = vld [vmem:[%s1063 + $0x2c] sm:$0xf]
        %s1076 = scalar_lea.vmem %s2, 16
        %v1077 = vld [vmem:[%s1076] sm:$0xf]
        %v1078 = vld [vmem:[%s1076 + $0x4] sm:$0xf]
        %v1091 = vunpack.c.l.b16 %v1064
        %v1092 = vunpack.c.l.b16 %v1065
        %v1093 = vunpack.c.l.b16 %v1066
        %v1094 = vunpack.c.l.b16 %v1067
        %v1095 = vunpack.c.l.b16 %v1068
        %v1096 = vunpack.c.l.b16 %v1069
        %v1097 = vunpack.c.l.b16 %v1070
        %v1098 = vunpack.c.l.b16 %v1071
        %v1099 = vunpack.c.l.b16 %v1072
        %v1100 = vunpack.c.l.b16 %v1073
        %v1101 = vunpack.c.l.b16 %v1074
        %v1102 = vunpack.c.l.b16 %v1075
        %v1103 = vpack.c.b16 %v1092, %v1091
        %v1104 = vpack.c.b16 %v1094, %v1093
        %v1105 = vpack.c.b16 %v1096, %v1095
        %v1106 = vpack.c.b16 %v1098, %v1097
        %v1107 = vpack.c.b16 %v1100, %v1099
        %v1108 = vpack.c.b16 %v1102, %v1101
        %v1111 = vunpack.c.l.b16 %v1077
        %v1112 = vunpack.c.l.b16 %v1078
        %v1113 = vpack.c.b16 %v1112, %v1111
        %v1116 = vsel %vm828, %v1103, 0
        %v1119 = vsel %vm828, %v1104, 0
        %v1122 = vsel %vm828, %v1105, 0
        %v1125 = vsel %vm828, %v1106, 0
        %v1128 = vsel %vm828, %v1107, 0
        %v1131 = vsel %vm828, %v1108, 0
        %1133 = vmatprep.subr.bf16.mxu0 0
        %1134 = vmatpush1.bf16.msra.mxu0 0
        %1135 = vmatprep.subr.bf16.mxu0 0
        %1136 = vmatpush1.bf16.msra.mxu0 0
        %1137 = vmatprep.subr.bf16.mxu0 0
        %1138 = vmatpush1.bf16.msra.mxu0 0
        %1139 = vmatprep.subr.bf16.mxu0 0
        %1140 = vmatpush1.bf16.msra.mxu0 0
        %1141 = vmatprep.subr.bf16.mxu0 0
        %1142 = vmatpush1.bf16.msra.mxu0 0
        %1143 = vmatprep.subr.bf16.mxu0 0
        %1144 = vmatpush1.bf16.msra.mxu0 0
        %1145 = vmatprep.subr.bf16.mxu0 0
        %1146 = vmatpush1.bf16.msra.mxu0 0
        %1147 = vmatprep.subr.bf16.mxu0 0
        %1148 = vmatpush1.bf16.msra.mxu0 %v1113
        %1149 = vmatprep.subr.bf16.mxu0 0
        %1150 = vmatpush2.bf16.msra.mxu0 0
        %1151 = vmatprep.subr.bf16.mxu0 0
        %1152 = vmatpush2.bf16.msra.mxu0 0
        %1153 = vmatprep.subr.bf16.mxu0 0
        %1154 = vmatpush2.bf16.msra.mxu0 0
        %1155 = vmatprep.subr.bf16.mxu0 0
        %1156 = vmatpush2.bf16.msra.mxu0 0
        %1157 = vmatprep.subr.bf16.mxu0 0
        %1158 = vmatpush2.bf16.msra.mxu0 0
        %1159 = vmatprep.subr.bf16.mxu0 0
        %1160 = vmatpush2.bf16.msra.mxu0 0
        %1161 = vmatprep.subr.bf16.mxu0 0
        %1162 = vmatpush2.bf16.msra.mxu0 0
        %1163 = vmatprep.subr.bf16.mxu0 0
        %1164 = vmatpush2.bf16.msra.mxu0 0
        %1165 = vmatprep.mubr.bf16.mxu0 0
        %1166 = vmatmul.mubr.bf16.gmra.mxu0 %v1116
        %v1167 = vpop.f32.mrf.mxu0
        %v1168 = vadd.f32 0.0, %v1167
        %v1169 = vpop.f32.mrf.mxu0
        %v1170 = vpop.f32.mrf.mxu0
        %v1171 = vadd.f32 0.0, %v1170
        %v1172 = vpop.f32.mrf.mxu0
        %1173 = vmatprep.mubr.bf16.mxu0 0
        %1174 = vmatmul.mubr.bf16.gmra.mxu0 %v1119
        %v1175 = vpop.f32.mrf.mxu0
        %v1176 = vadd.f32 0.0, %v1175
        %v1177 = vpop.f32.mrf.mxu0
        %v1178 = vpop.f32.mrf.mxu0
        %v1179 = vadd.f32 0.0, %v1178
        %v1180 = vpop.f32.mrf.mxu0
        %1181 = vmatprep.mubr.bf16.mxu0 0
        %1182 = vmatmul.mubr.bf16.gmra.mxu0 %v1122
        %v1183 = vpop.f32.mrf.mxu0
        %v1184 = vadd.f32 0.0, %v1183
        %v1185 = vpop.f32.mrf.mxu0
        %v1186 = vpop.f32.mrf.mxu0
        %v1187 = vadd.f32 0.0, %v1186
        %v1188 = vpop.f32.mrf.mxu0
        %1189 = vmatprep.mubr.bf16.mxu0 0
        %1190 = vmatmul.mubr.bf16.gmra.mxu0 %v1125
        %v1191 = vpop.f32.mrf.mxu0
        %v1192 = vadd.f32 0.0, %v1191
        %v1193 = vpop.f32.mrf.mxu0
        %v1194 = vpop.f32.mrf.mxu0
        %v1195 = vadd.f32 0.0, %v1194
        %v1196 = vpop.f32.mrf.mxu0
        %1197 = vmatprep.mubr.bf16.mxu0 0
        %1198 = vmatmul.mubr.bf16.gmra.mxu0 %v1128
        %v1199 = vpop.f32.mrf.mxu0
        %v1200 = vadd.f32 0.0, %v1199
        %v1201 = vpop.f32.mrf.mxu0
        %v1202 = vpop.f32.mrf.mxu0
        %v1203 = vadd.f32 0.0, %v1202
        %v1204 = vpop.f32.mrf.mxu0
        %1205 = vmatprep.mubr.bf16.mxu0 0
        %1206 = vmatmul.mubr.bf16.gmra.mxu0 %v1131
        %v1207 = vpop.f32.mrf.mxu0
        %v1208 = vadd.f32 0.0, %v1207
        %v1209 = vpop.f32.mrf.mxu0
        %v1210 = vpop.f32.mrf.mxu0
        %v1211 = vadd.f32 0.0, %v1210
        %v1212 = vpop.f32.mrf.mxu0
        %1213 = vdwg.mxu0
        %v1214 = vadd.f32 %v1017, %v1168
        %v1215 = vadd.f32 %v1020, %v1171
        %v1216 = vadd.f32 %v1025, %v1176
        %v1217 = vadd.f32 %v1028, %v1179
        %v1218 = vadd.f32 %v1033, %v1184
        %v1219 = vadd.f32 %v1036, %v1187
        %v1220 = vadd.f32 %v1041, %v1192
        %v1221 = vadd.f32 %v1044, %v1195
        %v1222 = vadd.f32 %v1049, %v1200
        %v1223 = vadd.f32 %v1052, %v1203
        %v1224 = vadd.f32 %v1057, %v1208
        %v1225 = vadd.f32 %v1060, %v1211
        %v1226 = vld [vmem:[%s3] sm:$0x1]
        %v1228 = vlaneseq
        %v1229 = vshrl.u32 %v1228, 7
        %v1230 = vsub.s32 0, %v1229
        %v1231 = vrot.slane %v1226, %v1230
        %v1233 = vadd.f32 %v1214, %v1231
        %v1234 = vadd.f32 %v1215, %v1231
        %v1235 = vadd.f32 %v1216, %v1231
        %v1236 = vadd.f32 %v1217, %v1231
        %v1237 = vadd.f32 %v1218, %v1231
        %v1238 = vadd.f32 %v1219, %v1231
        %v1239 = vadd.f32 %v1220, %v1231
        %v1240 = vadd.f32 %v1221, %v1231
        %v1241 = vadd.f32 %v1222, %v1231
        %v1242 = vadd.f32 %v1223, %v1231
        %v1243 = vadd.f32 %v1224, %v1231
        %v1244 = vadd.f32 %v1225, %v1231
        %v1245 = vmax.f32 %v1233, 0.0
        %v1246 = vmax.f32 %v1234, 0.0
        %v1247 = vmax.f32 %v1235, 0.0
        %v1248 = vmax.f32 %v1236, 0.0
        %v1249 = vmax.f32 %v1237, 0.0
        %v1250 = vmax.f32 %v1238, 0.0
        %v1251 = vmax.f32 %v1239, 0.0
        %v1252 = vmax.f32 %v1240, 0.0
        %v1253 = vmax.f32 %v1241, 0.0
        %v1254 = vmax.f32 %v1242, 0.0
        %v1255 = vmax.f32 %v1243, 0.0
        %v1256 = vmax.f32 %v1244, 0.0
        %v1257 = vmax.f32 %v1245, %v1247
        %v1258 = vmax.f32 %v1246, %v1248
        %v1259 = vmax.f32 %v1257, %v1249
        %v1260 = vmax.f32 %v1258, %v1250
        %v1261 = vmax.f32 %v1259, %v1251
        %v1262 = vmax.f32 %v1260, %v1252
        %v1263 = vmax.f32 %v1261, %v1253
        %v1264 = vmax.f32 %v1262, %v1254
        %v1265 = vmax.f32 %v1263, %v1255
        %v1266 = vmax.f32 %v1264, %v1256
        %v1267 = vpack.c.bf16 %v1266, %v1265
        %v1268 = vld [vmem:[%s4] sm:$0xf]
        %v1269 = vld [vmem:[%s4 + $0x4] sm:$0xf]
        %v1270 = vld [vmem:[%s4 + $0x8] sm:$0xf]
        %v1271 = vld [vmem:[%s4 + $0xc] sm:$0xf]
        %v1272 = vld [vmem:[%s4 + $0x10] sm:$0xf]
        %v1273 = vld [vmem:[%s4 + $0x14] sm:$0xf]
        %v1274 = vld [vmem:[%s4 + $0x18] sm:$0xf]
        %v1275 = vld [vmem:[%s4 + $0x1c] sm:$0xf]
        %v1276 = vld [vmem:[%s4 + $0x20] sm:$0xf]
        %v1277 = vld [vmem:[%s4 + $0x24] sm:$0xf]
        %v1278 = vld [vmem:[%s4 + $0x28] sm:$0xf]
        %v1279 = vld [vmem:[%s4 + $0x2c] sm:$0xf]
        %v1280 = vld [vmem:[%s4 + $0x30] sm:$0xf]
        %v1281 = vld [vmem:[%s4 + $0x34] sm:$0xf]
        %v1282 = vld [vmem:[%s4 + $0x38] sm:$0xf]
        %v1283 = vld [vmem:[%s4 + $0x3c] sm:$0xf]
        %v1284 = vld [vmem:[%s5] sm:$0x1]
        %v1286 = vlaneseq
        %v1287 = vshrl.u32 %v1286, 7
        %v1288 = vsub.s32 0, %v1287
        %v1289 = vrot.slane %v1284, %v1288
        %v1307 = vunpack.c.l.b16 %v1268
        %v1308 = vunpack.c.l.b16 %v1269
        %v1309 = vunpack.c.l.b16 %v1270
        %v1310 = vunpack.c.l.b16 %v1271
        %v1311 = vunpack.c.l.b16 %v1272
        %v1312 = vunpack.c.l.b16 %v1273
        %v1313 = vunpack.c.l.b16 %v1274
        %v1314 = vunpack.c.l.b16 %v1275
        %v1315 = vunpack.c.l.b16 %v1276
        %v1316 = vunpack.c.l.b16 %v1277
        %v1317 = vunpack.c.l.b16 %v1278
        %v1318 = vunpack.c.l.b16 %v1279
        %v1319 = vunpack.c.l.b16 %v1280
        %v1320 = vunpack.c.l.b16 %v1281
        %v1321 = vunpack.c.l.b16 %v1282
        %v1322 = vunpack.c.l.b16 %v1283
        %v1323 = vpack.c.b16 %v1308, %v1307
        %v1324 = vpack.c.b16 %v1310, %v1309
        %v1325 = vpack.c.b16 %v1312, %v1311
        %v1326 = vpack.c.b16 %v1314, %v1313
        %v1327 = vpack.c.b16 %v1316, %v1315
        %v1328 = vpack.c.b16 %v1318, %v1317
        %v1329 = vpack.c.b16 %v1320, %v1319
        %v1330 = vpack.c.b16 %v1322, %v1321
        %1339 = vmatprep.subr.bf16.mxu0 0
        %1340 = vmatpush1.bf16.msra.mxu0 %v1330
        %1341 = vmatprep.subr.bf16.mxu0 0
        %1342 = vmatpush1.bf16.msra.mxu0 %v1329
        %1343 = vmatprep.subr.bf16.mxu0 0
        %1344 = vmatpush1.bf16.msra.mxu0 %v1328
        %1345 = vmatprep.subr.bf16.mxu0 0
        %1346 = vmatpush1.bf16.msra.mxu0 %v1327
        %1347 = vmatprep.subr.bf16.mxu0 0
        %1348 = vmatpush1.bf16.msra.mxu0 %v1326
        %1349 = vmatprep.subr.bf16.mxu0 0
        %1350 = vmatpush1.bf16.msra.mxu0 %v1325
        %1351 = vmatprep.subr.bf16.mxu0 0
        %1352 = vmatpush1.bf16.msra.mxu0 %v1324
        %1353 = vmatprep.subr.bf16.mxu0 0
        %1354 = vmatpush1.bf16.msra.mxu0 %v1323
        %1355 = vmatprep.subr.bf16.mxu0 0
        %1356 = vmatpush2.bf16.msra.mxu0 0
        %1357 = vmatprep.subr.bf16.mxu0 0
        %1358 = vmatpush2.bf16.msra.mxu0 0
        %1359 = vmatprep.subr.bf16.mxu0 0
        %1360 = vmatpush2.bf16.msra.mxu0 0
        %1361 = vmatprep.subr.bf16.mxu0 0
        %1362 = vmatpush2.bf16.msra.mxu0 0
        %1363 = vmatprep.subr.bf16.mxu0 0
        %1364 = vmatpush2.bf16.msra.mxu0 0
        %1365 = vmatprep.subr.bf16.mxu0 0
        %1366 = vmatpush2.bf16.msra.mxu0 0
        %1367 = vmatprep.subr.bf16.mxu0 0
        %1368 = vmatpush2.bf16.msra.mxu0 0
        %1369 = vmatprep.subr.bf16.mxu0 0
        %1370 = vmatpush2.bf16.msra.mxu0 0
        %1371 = vmatprep.mubr.bf16.mxu0 0
        %1372 = vmatmul.mubr.bf16.gmra.mxu0 %v1267
        %v1373 = vpop.f32.mrf.mxu0
        %v1374 = vadd.f32 %v1289, %v1373
        %v1375 = vpop.f32.mrf.mxu0
        %v1376 = vpop.f32.mrf.mxu0
        %v1377 = vadd.f32 %v1289, %v1376
        %v1378 = vpop.f32.mrf.mxu0
        %1379 = vdwg.mxu0
        %v1380 = vmax.f32 %v1374, 0.0
        %v1381 = vmax.f32 %v1377, 0.0
        %v1382 = vld [vmem:[%s711] sm:$0xf]
        %v1383 = vld [vmem:[%s711 + $0x4] sm:$0xf]
        %v1384 = vld [vmem:[%s711 + $0x8] sm:$0xf]
        %v1385 = vld [vmem:[%s711 + $0xc] sm:$0xf]
        %v1386 = vld [vmem:[%s711 + $0x10] sm:$0xf]
        %v1387 = vld [vmem:[%s711 + $0x14] sm:$0xf]
        %v1388 = vld [vmem:[%s711 + $0x18] sm:$0xf]
        %v1389 = vld [vmem:[%s711 + $0x1c] sm:$0xf]
        %v1390 = vld [vmem:[%s711 + $0x20] sm:$0xf]
        %v1391 = vld [vmem:[%s711 + $0x24] sm:$0xf]
        %v1392 = vld [vmem:[%s711 + $0x28] sm:$0xf]
        %v1393 = vld [vmem:[%s711 + $0x2c] sm:$0xf]
        %v1394 = vld [vmem:[%s711 + $0x30] sm:$0xf]
        %v1395 = vld [vmem:[%s711 + $0x34] sm:$0xf]
        %v1396 = vld [vmem:[%s711 + $0x38] sm:$0xf]
        %v1397 = vld [vmem:[%s711 + $0x3c] sm:$0xf]
        %v1398 = vld [vmem:[%s711 + $0x40] sm:$0xf]
        %v1399 = vld [vmem:[%s711 + $0x44] sm:$0xf]
        %v1400 = vld [vmem:[%s711 + $0x48] sm:$0xf]
        %v1401 = vld [vmem:[%s711 + $0x4c] sm:$0xf]
        %v1402 = vld [vmem:[%s711 + $0x50] sm:$0xf]
        %v1403 = vld [vmem:[%s711 + $0x54] sm:$0xf]
        %v1404 = vld [vmem:[%s711 + $0x58] sm:$0xf]
        %v1405 = vld [vmem:[%s711 + $0x5c] sm:$0xf]
        %v1406 = vld [vmem:[%s711 + $0x60] sm:$0xf]
        %v1407 = vld [vmem:[%s711 + $0x64] sm:$0xf]
        %v1408 = vld [vmem:[%s711 + $0x68] sm:$0xf]
        %v1409 = vld [vmem:[%s711 + $0x6c] sm:$0xf]
        %v1410 = vld [vmem:[%s6] sm:$0xf]
        %v1411 = vld [vmem:[%s6 + $0x4] sm:$0xf]
        %s1412 = scalar_lea.vmem %s711, 8 [#allocation3]
        %v1413 = vld [vmem:[%s1412] sm:$0xf]
        %v1414 = vld [vmem:[%s1412 + $0x4] sm:$0xf]
        %v1415 = vld [vmem:[%s1412 + $0x8] sm:$0xf]
        %v1416 = vld [vmem:[%s1412 + $0xc] sm:$0xf]
        %v1417 = vld [vmem:[%s1412 + $0x10] sm:$0xf]
        %v1418 = vld [vmem:[%s1412 + $0x14] sm:$0xf]
        %v1419 = vld [vmem:[%s1412 + $0x18] sm:$0xf]
        %v1420 = vld [vmem:[%s1412 + $0x1c] sm:$0xf]
        %v1421 = vld [vmem:[%s1412 + $0x20] sm:$0xf]
        %v1422 = vld [vmem:[%s1412 + $0x24] sm:$0xf]
        %v1423 = vld [vmem:[%s1412 + $0x28] sm:$0xf]
        %v1424 = vld [vmem:[%s1412 + $0x2c] sm:$0xf]
        %v1425 = vld [vmem:[%s1412 + $0x30] sm:$0xf]
        %v1426 = vld [vmem:[%s1412 + $0x34] sm:$0xf]
        %v1427 = vld [vmem:[%s1412 + $0x38] sm:$0xf]
        %v1428 = vld [vmem:[%s1412 + $0x3c] sm:$0xf]
        %v1429 = vld [vmem:[%s1412 + $0x40] sm:$0xf]
        %v1430 = vld [vmem:[%s1412 + $0x44] sm:$0xf]
        %v1431 = vld [vmem:[%s1412 + $0x48] sm:$0xf]
        %v1432 = vld [vmem:[%s1412 + $0x4c] sm:$0xf]
        %v1433 = vld [vmem:[%s1412 + $0x50] sm:$0xf]
        %v1434 = vld [vmem:[%s1412 + $0x54] sm:$0xf]
        %v1435 = vld [vmem:[%s1412 + $0x58] sm:$0xf]
        %v1436 = vld [vmem:[%s1412 + $0x5c] sm:$0xf]
        %v1437 = vld [vmem:[%s1412 + $0x60] sm:$0xf]
        %v1438 = vld [vmem:[%s1412 + $0x64] sm:$0xf]
        %v1439 = vld [vmem:[%s1412 + $0x68] sm:$0xf]
        %v1440 = vld [vmem:[%s1412 + $0x6c] sm:$0xf]
        %s1441 = scalar_lea.vmem %s6, 8
        %v1442 = vld [vmem:[%s1441] sm:$0xf]
        %v1443 = vld [vmem:[%s1441 + $0x4] sm:$0xf]
        %v1472 = vunpack.c.l.b16 %v1413
        %v1473 = vunpack.c.l.b16 %v1414
        %v1474 = vunpack.c.l.b16 %v1415
        %v1475 = vunpack.c.l.b16 %v1416
        %v1476 = vunpack.c.l.b16 %v1417
        %v1477 = vunpack.c.l.b16 %v1418
        %v1478 = vunpack.c.l.b16 %v1419
        %v1479 = vunpack.c.l.b16 %v1420
        %v1480 = vunpack.c.l.b16 %v1421
        %v1481 = vunpack.c.l.b16 %v1422
        %v1482 = vunpack.c.l.b16 %v1423
        %v1483 = vunpack.c.l.b16 %v1424
        %v1484 = vunpack.c.l.b16 %v1425
        %v1485 = vunpack.c.l.b16 %v1426
        %v1486 = vunpack.c.l.b16 %v1427
        %v1487 = vunpack.c.l.b16 %v1428
        %v1488 = vunpack.c.l.b16 %v1429
        %v1489 = vunpack.c.l.b16 %v1430
        %v1490 = vunpack.c.l.b16 %v1431
        %v1491 = vunpack.c.l.b16 %v1432
        %v1492 = vunpack.c.l.b16 %v1433
        %v1493 = vunpack.c.l.b16 %v1434
        %v1494 = vunpack.c.l.b16 %v1435
        %v1495 = vunpack.c.l.b16 %v1436
        %v1496 = vunpack.c.l.b16 %v1437
        %v1497 = vunpack.c.l.b16 %v1438
        %v1498 = vunpack.c.l.b16 %v1439
        %v1499 = vunpack.c.l.b16 %v1440
        %v1500 = vpack.c.b16 %v1473, %v1472
        %v1501 = vpack.c.b16 %v1475, %v1474
        %v1502 = vpack.c.b16 %v1477, %v1476
        %v1503 = vpack.c.b16 %v1479, %v1478
        %v1504 = vpack.c.b16 %v1481, %v1480
        %v1505 = vpack.c.b16 %v1483, %v1482
        %v1506 = vpack.c.b16 %v1485, %v1484
        %v1507 = vpack.c.b16 %v1487, %v1486
        %v1508 = vpack.c.b16 %v1489, %v1488
        %v1509 = vpack.c.b16 %v1491, %v1490
        %v1510 = vpack.c.b16 %v1493, %v1492
        %v1511 = vpack.c.b16 %v1495, %v1494
        %v1512 = vpack.c.b16 %v1497, %v1496
        %v1513 = vpack.c.b16 %v1499, %v1498
        %v1516 = vunpack.c.l.b16 %v1442
        %v1517 = vunpack.c.l.b16 %v1443
        %v1518 = vpack.c.b16 %v1517, %v1516
        %v1521 = vsel %vm828, %v1500, 0
        %v1524 = vsel %vm828, %v1501, 0
        %v1527 = vsel %vm828, %v1502, 0
        %v1530 = vsel %vm828, %v1503, 0
        %v1533 = vsel %vm828, %v1504, 0
        %v1536 = vsel %vm828, %v1505, 0
        %v1539 = vsel %vm828, %v1506, 0
        %v1542 = vsel %vm828, %v1507, 0
        %v1545 = vsel %vm828, %v1508, 0
        %v1548 = vsel %vm828, %v1509, 0
        %v1551 = vsel %vm828, %v1510, 0
        %v1554 = vsel %vm828, %v1511, 0
        %v1557 = vsel %vm828, %v1512, 0
        %v1560 = vsel %vm828, %v1513, 0
        %1562 = vmatprep.subr.bf16.mxu0 0
        %1563 = vmatpush1.bf16.msra.mxu0 0
        %1564 = vmatprep.subr.bf16.mxu0 0
        %1565 = vmatpush1.bf16.msra.mxu0 0
        %1566 = vmatprep.subr.bf16.mxu0 0
        %1567 = vmatpush1.bf16.msra.mxu0 0
        %1568 = vmatprep.subr.bf16.mxu0 0
        %1569 = vmatpush1.bf16.msra.mxu0 0
        %1570 = vmatprep.subr.bf16.mxu0 0
        %1571 = vmatpush1.bf16.msra.mxu0 0
        %1572 = vmatprep.subr.bf16.mxu0 0
        %1573 = vmatpush1.bf16.msra.mxu0 0
        %1574 = vmatprep.subr.bf16.mxu0 0
        %1575 = vmatpush1.bf16.msra.mxu0 0
        %1576 = vmatprep.subr.bf16.mxu0 0
        %1577 = vmatpush1.bf16.msra.mxu0 %v1518
        %1578 = vmatprep.subr.bf16.mxu0 0
        %1579 = vmatpush2.bf16.msra.mxu0 0
        %1580 = vmatprep.subr.bf16.mxu0 0
        %1581 = vmatpush2.bf16.msra.mxu0 0
        %1582 = vmatprep.subr.bf16.mxu0 0
        %1583 = vmatpush2.bf16.msra.mxu0 0
        %1584 = vmatprep.subr.bf16.mxu0 0
        %1585 = vmatpush2.bf16.msra.mxu0 0
        %1586 = vmatprep.subr.bf16.mxu0 0
        %1587 = vmatpush2.bf16.msra.mxu0 0
        %1588 = vmatprep.subr.bf16.mxu0 0
        %1589 = vmatpush2.bf16.msra.mxu0 0
        %1590 = vmatprep.subr.bf16.mxu0 0
        %1591 = vmatpush2.bf16.msra.mxu0 0
        %1592 = vmatprep.subr.bf16.mxu0 0
        %1593 = vmatpush2.bf16.msra.mxu0 0
        %1594 = vmatprep.mubr.bf16.mxu0 0
        %1595 = vmatmul.mubr.bf16.gmra.mxu0 %v1521
        %v1596 = vpop.f32.mrf.mxu0
        %v1597 = vadd.f32 0.0, %v1596
        %v1598 = vpop.f32.mrf.mxu0
        %v1599 = vpop.f32.mrf.mxu0
        %v1600 = vadd.f32 0.0, %v1599
        %v1601 = vpop.f32.mrf.mxu0
        %1602 = vmatprep.mubr.bf16.mxu0 0
        %1603 = vmatmul.mubr.bf16.gmra.mxu0 %v1524
        %v1604 = vpop.f32.mrf.mxu0
        %v1605 = vadd.f32 0.0, %v1604
        %v1606 = vpop.f32.mrf.mxu0
        %v1607 = vpop.f32.mrf.mxu0
        %v1608 = vadd.f32 0.0, %v1607
        %v1609 = vpop.f32.mrf.mxu0
        %1610 = vmatprep.mubr.bf16.mxu0 0
        %1611 = vmatmul.mubr.bf16.gmra.mxu0 %v1527
        %v1612 = vpop.f32.mrf.mxu0
        %v1613 = vadd.f32 0.0, %v1612
        %v1614 = vpop.f32.mrf.mxu0
        %v1615 = vpop.f32.mrf.mxu0
        %v1616 = vadd.f32 0.0, %v1615
        %v1617 = vpop.f32.mrf.mxu0
        %1618 = vmatprep.mubr.bf16.mxu0 0
        %1619 = vmatmul.mubr.bf16.gmra.mxu0 %v1530
        %v1620 = vpop.f32.mrf.mxu0
        %v1621 = vadd.f32 0.0, %v1620
        %v1622 = vpop.f32.mrf.mxu0
        %v1623 = vpop.f32.mrf.mxu0
        %v1624 = vadd.f32 0.0, %v1623
        %v1625 = vpop.f32.mrf.mxu0
        %1626 = vmatprep.mubr.bf16.mxu0 0
        %1627 = vmatmul.mubr.bf16.gmra.mxu0 %v1533
        %v1628 = vpop.f32.mrf.mxu0
        %v1629 = vadd.f32 0.0, %v1628
        %v1630 = vpop.f32.mrf.mxu0
        %v1631 = vpop.f32.mrf.mxu0
        %v1632 = vadd.f32 0.0, %v1631
        %v1633 = vpop.f32.mrf.mxu0
        %1634 = vmatprep.mubr.bf16.mxu0 0
        %1635 = vmatmul.mubr.bf16.gmra.mxu0 %v1536
        %v1636 = vpop.f32.mrf.mxu0
        %v1637 = vadd.f32 0.0, %v1636
        %v1638 = vpop.f32.mrf.mxu0
        %v1639 = vpop.f32.mrf.mxu0
        %v1640 = vadd.f32 0.0, %v1639
        %v1641 = vpop.f32.mrf.mxu0
        %1642 = vmatprep.mubr.bf16.mxu0 0
        %1643 = vmatmul.mubr.bf16.gmra.mxu0 %v1539
        %v1644 = vpop.f32.mrf.mxu0
        %v1645 = vadd.f32 0.0, %v1644
        %v1646 = vpop.f32.mrf.mxu0
        %v1647 = vpop.f32.mrf.mxu0
        %v1648 = vadd.f32 0.0, %v1647
        %v1649 = vpop.f32.mrf.mxu0
        %1650 = vmatprep.mubr.bf16.mxu0 0
        %1651 = vmatmul.mubr.bf16.gmra.mxu0 %v1542
        %v1652 = vpop.f32.mrf.mxu0
        %v1653 = vadd.f32 0.0, %v1652
        %v1654 = vpop.f32.mrf.mxu0
        %v1655 = vpop.f32.mrf.mxu0
        %v1656 = vadd.f32 0.0, %v1655
        %v1657 = vpop.f32.mrf.mxu0
        %1658 = vmatprep.mubr.bf16.mxu0 0
        %1659 = vmatmul.mubr.bf16.gmra.mxu0 %v1545
        %v1660 = vpop.f32.mrf.mxu0
        %v1661 = vadd.f32 0.0, %v1660
        %v1662 = vpop.f32.mrf.mxu0
        %v1663 = vpop.f32.mrf.mxu0
        %v1664 = vadd.f32 0.0, %v1663
        %v1665 = vpop.f32.mrf.mxu0
        %1666 = vmatprep.mubr.bf16.mxu0 0
        %1667 = vmatmul.mubr.bf16.gmra.mxu0 %v1548
        %v1668 = vpop.f32.mrf.mxu0
        %v1669 = vadd.f32 0.0, %v1668
        %v1670 = vpop.f32.mrf.mxu0
        %v1671 = vpop.f32.mrf.mxu0
        %v1672 = vadd.f32 0.0, %v1671
        %v1673 = vpop.f32.mrf.mxu0
        %1674 = vmatprep.mubr.bf16.mxu0 0
        %1675 = vmatmul.mubr.bf16.gmra.mxu0 %v1551
        %v1676 = vpop.f32.mrf.mxu0
        %v1677 = vadd.f32 0.0, %v1676
        %v1678 = vpop.f32.mrf.mxu0
        %v1679 = vpop.f32.mrf.mxu0
        %v1680 = vadd.f32 0.0, %v1679
        %v1681 = vpop.f32.mrf.mxu0
        %1682 = vmatprep.mubr.bf16.mxu0 0
        %1683 = vmatmul.mubr.bf16.gmra.mxu0 %v1554
        %v1684 = vpop.f32.mrf.mxu0
        %v1685 = vadd.f32 0.0, %v1684
        %v1686 = vpop.f32.mrf.mxu0
        %v1687 = vpop.f32.mrf.mxu0
        %v1688 = vadd.f32 0.0, %v1687
        %v1689 = vpop.f32.mrf.mxu0
        %1690 = vmatprep.mubr.bf16.mxu0 0
        %1691 = vmatmul.mubr.bf16.gmra.mxu0 %v1557
        %v1692 = vpop.f32.mrf.mxu0
        %v1693 = vadd.f32 0.0, %v1692
        %v1694 = vpop.f32.mrf.mxu0
        %v1695 = vpop.f32.mrf.mxu0
        %v1696 = vadd.f32 0.0, %v1695
        %v1697 = vpop.f32.mrf.mxu0
        %1698 = vmatprep.mubr.bf16.mxu0 0
        %1699 = vmatmul.mubr.bf16.gmra.mxu0 %v1560
        %v1700 = vpop.f32.mrf.mxu0
        %v1701 = vadd.f32 0.0, %v1700
        %v1702 = vpop.f32.mrf.mxu0
        %v1703 = vpop.f32.mrf.mxu0
        %v1704 = vadd.f32 0.0, %v1703
        %v1705 = vpop.f32.mrf.mxu0
        %1706 = vdwg.mxu0
        %v1735 = vunpack.c.l.b16 %v1382
        %v1736 = vunpack.c.l.b16 %v1383
        %v1737 = vunpack.c.l.b16 %v1384
        %v1738 = vunpack.c.l.b16 %v1385
        %v1739 = vunpack.c.l.b16 %v1386
        %v1740 = vunpack.c.l.b16 %v1387
        %v1741 = vunpack.c.l.b16 %v1388
        %v1742 = vunpack.c.l.b16 %v1389
        %v1743 = vunpack.c.l.b16 %v1390
        %v1744 = vunpack.c.l.b16 %v1391
        %v1745 = vunpack.c.l.b16 %v1392
        %v1746 = vunpack.c.l.b16 %v1393
        %v1747 = vunpack.c.l.b16 %v1394
        %v1748 = vunpack.c.l.b16 %v1395
        %v1749 = vunpack.c.l.b16 %v1396
        %v1750 = vunpack.c.l.b16 %v1397
        %v1751 = vunpack.c.l.b16 %v1398
        %v1752 = vunpack.c.l.b16 %v1399
        %v1753 = vunpack.c.l.b16 %v1400
        %v1754 = vunpack.c.l.b16 %v1401
        %v1755 = vunpack.c.l.b16 %v1402
        %v1756 = vunpack.c.l.b16 %v1403
        %v1757 = vunpack.c.l.b16 %v1404
        %v1758 = vunpack.c.l.b16 %v1405
        %v1759 = vunpack.c.l.b16 %v1406
        %v1760 = vunpack.c.l.b16 %v1407
        %v1761 = vunpack.c.l.b16 %v1408
        %v1762 = vunpack.c.l.b16 %v1409
        %v1763 = vpack.c.b16 %v1736, %v1735
        %v1764 = vpack.c.b16 %v1738, %v1737
        %v1765 = vpack.c.b16 %v1740, %v1739
        %v1766 = vpack.c.b16 %v1742, %v1741
        %v1767 = vpack.c.b16 %v1744, %v1743
        %v1768 = vpack.c.b16 %v1746, %v1745
        %v1769 = vpack.c.b16 %v1748, %v1747
        %v1770 = vpack.c.b16 %v1750, %v1749
        %v1771 = vpack.c.b16 %v1752, %v1751
        %v1772 = vpack.c.b16 %v1754, %v1753
        %v1773 = vpack.c.b16 %v1756, %v1755
        %v1774 = vpack.c.b16 %v1758, %v1757
        %v1775 = vpack.c.b16 %v1760, %v1759
        %v1776 = vpack.c.b16 %v1762, %v1761
        %v1779 = vunpack.c.l.b16 %v1410
        %v1780 = vunpack.c.l.b16 %v1411
        %v1781 = vpack.c.b16 %v1780, %v1779
        %v1784 = vsel %vm828, %v1763, 0
        %v1787 = vsel %vm828, %v1764, 0
        %v1790 = vsel %vm828, %v1765, 0
        %v1793 = vsel %vm828, %v1766, 0
        %v1796 = vsel %vm828, %v1767, 0
        %v1799 = vsel %vm828, %v1768, 0
        %v1802 = vsel %vm828, %v1769, 0
        %v1805 = vsel %vm828, %v1770, 0
        %v1808 = vsel %vm828, %v1771, 0
        %v1811 = vsel %vm828, %v1772, 0
        %v1814 = vsel %vm828, %v1773, 0
        %v1817 = vsel %vm828, %v1774, 0
        %v1820 = vsel %vm828, %v1775, 0
        %v1823 = vsel %vm828, %v1776, 0
        %1825 = vmatprep.subr.bf16.mxu0 0
        %1826 = vmatpush1.bf16.msra.mxu0 0
        %1827 = vmatprep.subr.bf16.mxu0 0
        %1828 = vmatpush1.bf16.msra.mxu0 0
        %1829 = vmatprep.subr.bf16.mxu0 0
        %1830 = vmatpush1.bf16.msra.mxu0 0
        %1831 = vmatprep.subr.bf16.mxu0 0
        %1832 = vmatpush1.bf16.msra.mxu0 0
        %1833 = vmatprep.subr.bf16.mxu0 0
        %1834 = vmatpush1.bf16.msra.mxu0 0
        %1835 = vmatprep.subr.bf16.mxu0 0
        %1836 = vmatpush1.bf16.msra.mxu0 0
        %1837 = vmatprep.subr.bf16.mxu0 0
        %1838 = vmatpush1.bf16.msra.mxu0 0
        %1839 = vmatprep.subr.bf16.mxu0 0
        %1840 = vmatpush1.bf16.msra.mxu0 %v1781
        %1841 = vmatprep.subr.bf16.mxu0 0
        %1842 = vmatpush2.bf16.msra.mxu0 0
        %1843 = vmatprep.subr.bf16.mxu0 0
        %1844 = vmatpush2.bf16.msra.mxu0 0
        %1845 = vmatprep.subr.bf16.mxu0 0
        %1846 = vmatpush2.bf16.msra.mxu0 0
        %1847 = vmatprep.subr.bf16.mxu0 0
        %1848 = vmatpush2.bf16.msra.mxu0 0
        %1849 = vmatprep.subr.bf16.mxu0 0
        %1850 = vmatpush2.bf16.msra.mxu0 0
        %1851 = vmatprep.subr.bf16.mxu0 0
        %1852 = vmatpush2.bf16.msra.mxu0 0
        %1853 = vmatprep.subr.bf16.mxu0 0
        %1854 = vmatpush2.bf16.msra.mxu0 0
        %1855 = vmatprep.subr.bf16.mxu0 0
        %1856 = vmatpush2.bf16.msra.mxu0 0
        %1857 = vmatprep.mubr.bf16.mxu0 0
        %1858 = vmatmul.mubr.bf16.gmra.mxu0 %v1784
        %v1859 = vpop.f32.mrf.mxu0
        %v1860 = vadd.f32 %v1597, %v1859
        %v1861 = vpop.f32.mrf.mxu0
        %v1862 = vpop.f32.mrf.mxu0
        %v1863 = vadd.f32 %v1600, %v1862
        %v1864 = vpop.f32.mrf.mxu0
        %1865 = vmatprep.mubr.bf16.mxu0 0
        %1866 = vmatmul.mubr.bf16.gmra.mxu0 %v1787
        %v1867 = vpop.f32.mrf.mxu0
        %v1868 = vadd.f32 %v1605, %v1867
        %v1869 = vpop.f32.mrf.mxu0
        %v1870 = vpop.f32.mrf.mxu0
        %v1871 = vadd.f32 %v1608, %v1870
        %v1872 = vpop.f32.mrf.mxu0
        %1873 = vmatprep.mubr.bf16.mxu0 0
        %1874 = vmatmul.mubr.bf16.gmra.mxu0 %v1790
        %v1875 = vpop.f32.mrf.mxu0
        %v1876 = vadd.f32 %v1613, %v1875
        %v1877 = vpop.f32.mrf.mxu0
        %v1878 = vpop.f32.mrf.mxu0
        %v1879 = vadd.f32 %v1616, %v1878
        %v1880 = vpop.f32.mrf.mxu0
        %1881 = vmatprep.mubr.bf16.mxu0 0
        %1882 = vmatmul.mubr.bf16.gmra.mxu0 %v1793
        %v1883 = vpop.f32.mrf.mxu0
        %v1884 = vadd.f32 %v1621, %v1883
        %v1885 = vpop.f32.mrf.mxu0
        %v1886 = vpop.f32.mrf.mxu0
        %v1887 = vadd.f32 %v1624, %v1886
        %v1888 = vpop.f32.mrf.mxu0
        %1889 = vmatprep.mubr.bf16.mxu0 0
        %1890 = vmatmul.mubr.bf16.gmra.mxu0 %v1796
        %v1891 = vpop.f32.mrf.mxu0
        %v1892 = vadd.f32 %v1629, %v1891
        %v1893 = vpop.f32.mrf.mxu0
        %v1894 = vpop.f32.mrf.mxu0
        %v1895 = vadd.f32 %v1632, %v1894
        %v1896 = vpop.f32.mrf.mxu0
        %1897 = vmatprep.mubr.bf16.mxu0 0
        %1898 = vmatmul.mubr.bf16.gmra.mxu0 %v1799
        %v1899 = vpop.f32.mrf.mxu0
        %v1900 = vadd.f32 %v1637, %v1899
        %v1901 = vpop.f32.mrf.mxu0
        %v1902 = vpop.f32.mrf.mxu0
        %v1903 = vadd.f32 %v1640, %v1902
        %v1904 = vpop.f32.mrf.mxu0
        %1905 = vmatprep.mubr.bf16.mxu0 0
        %1906 = vmatmul.mubr.bf16.gmra.mxu0 %v1802
        %v1907 = vpop.f32.mrf.mxu0
        %v1908 = vadd.f32 %v1645, %v1907
        %v1909 = vpop.f32.mrf.mxu0
        %v1910 = vpop.f32.mrf.mxu0
        %v1911 = vadd.f32 %v1648, %v1910
        %v1912 = vpop.f32.mrf.mxu0
        %1913 = vmatprep.mubr.bf16.mxu0 0
        %1914 = vmatmul.mubr.bf16.gmra.mxu0 %v1805
        %v1915 = vpop.f32.mrf.mxu0
        %v1916 = vadd.f32 %v1653, %v1915
        %v1917 = vpop.f32.mrf.mxu0
        %v1918 = vpop.f32.mrf.mxu0
        %v1919 = vadd.f32 %v1656, %v1918
        %v1920 = vpop.f32.mrf.mxu0
        %1921 = vmatprep.mubr.bf16.mxu0 0
        %1922 = vmatmul.mubr.bf16.gmra.mxu0 %v1808
        %v1923 = vpop.f32.mrf.mxu0
        %v1924 = vadd.f32 %v1661, %v1923
        %v1925 = vpop.f32.mrf.mxu0
        %v1926 = vpop.f32.mrf.mxu0
        %v1927 = vadd.f32 %v1664, %v1926
        %v1928 = vpop.f32.mrf.mxu0
        %1929 = vmatprep.mubr.bf16.mxu0 0
        %1930 = vmatmul.mubr.bf16.gmra.mxu0 %v1811
        %v1931 = vpop.f32.mrf.mxu0
        %v1932 = vadd.f32 %v1669, %v1931
        %v1933 = vpop.f32.mrf.mxu0
        %v1934 = vpop.f32.mrf.mxu0
        %v1935 = vadd.f32 %v1672, %v1934
        %v1936 = vpop.f32.mrf.mxu0
        %1937 = vmatprep.mubr.bf16.mxu0 0
        %1938 = vmatmul.mubr.bf16.gmra.mxu0 %v1814
        %v1939 = vpop.f32.mrf.mxu0
        %v1940 = vadd.f32 %v1677, %v1939
        %v1941 = vpop.f32.mrf.mxu0
        %v1942 = vpop.f32.mrf.mxu0
        %v1943 = vadd.f32 %v1680, %v1942
        %v1944 = vpop.f32.mrf.mxu0
        %1945 = vmatprep.mubr.bf16.mxu0 0
        %1946 = vmatmul.mubr.bf16.gmra.mxu0 %v1817
        %v1947 = vpop.f32.mrf.mxu0
        %v1948 = vadd.f32 %v1685, %v1947
        %v1949 = vpop.f32.mrf.mxu0
        %v1950 = vpop.f32.mrf.mxu0
        %v1951 = vadd.f32 %v1688, %v1950
        %v1952 = vpop.f32.mrf.mxu0
        %1953 = vmatprep.mubr.bf16.mxu0 0
        %1954 = vmatmul.mubr.bf16.gmra.mxu0 %v1820
        %v1955 = vpop.f32.mrf.mxu0
        %v1956 = vadd.f32 %v1693, %v1955
        %v1957 = vpop.f32.mrf.mxu0
        %v1958 = vpop.f32.mrf.mxu0
        %v1959 = vadd.f32 %v1696, %v1958
        %v1960 = vpop.f32.mrf.mxu0
        %1961 = vmatprep.mubr.bf16.mxu0 0
        %1962 = vmatmul.mubr.bf16.gmra.mxu0 %v1823
        %v1963 = vpop.f32.mrf.mxu0
        %v1964 = vadd.f32 %v1701, %v1963
        %v1965 = vpop.f32.mrf.mxu0
        %v1966 = vpop.f32.mrf.mxu0
        %v1967 = vadd.f32 %v1704, %v1966
        %v1968 = vpop.f32.mrf.mxu0
        %1969 = vdwg.mxu0
        %s1970 = scalar_lea.vmem %s711, 16 [#allocation3]
        %v1971 = vld [vmem:[%s1970] sm:$0xf]
        %v1972 = vld [vmem:[%s1970 + $0x4] sm:$0xf]
        %v1973 = vld [vmem:[%s1970 + $0x8] sm:$0xf]
        %v1974 = vld [vmem:[%s1970 + $0xc] sm:$0xf]
        %v1975 = vld [vmem:[%s1970 + $0x10] sm:$0xf]
        %v1976 = vld [vmem:[%s1970 + $0x14] sm:$0xf]
        %v1977 = vld [vmem:[%s1970 + $0x18] sm:$0xf]
        %v1978 = vld [vmem:[%s1970 + $0x1c] sm:$0xf]
        %v1979 = vld [vmem:[%s1970 + $0x20] sm:$0xf]
        %v1980 = vld [vmem:[%s1970 + $0x24] sm:$0xf]
        %v1981 = vld [vmem:[%s1970 + $0x28] sm:$0xf]
        %v1982 = vld [vmem:[%s1970 + $0x2c] sm:$0xf]
        %v1983 = vld [vmem:[%s1970 + $0x30] sm:$0xf]
        %v1984 = vld [vmem:[%s1970 + $0x34] sm:$0xf]
        %v1985 = vld [vmem:[%s1970 + $0x38] sm:$0xf]
        %v1986 = vld [vmem:[%s1970 + $0x3c] sm:$0xf]
        %v1987 = vld [vmem:[%s1970 + $0x40] sm:$0xf]
        %v1988 = vld [vmem:[%s1970 + $0x44] sm:$0xf]
        %v1989 = vld [vmem:[%s1970 + $0x48] sm:$0xf]
        %v1990 = vld [vmem:[%s1970 + $0x4c] sm:$0xf]
        %v1991 = vld [vmem:[%s1970 + $0x50] sm:$0xf]
        %v1992 = vld [vmem:[%s1970 + $0x54] sm:$0xf]
        %v1993 = vld [vmem:[%s1970 + $0x58] sm:$0xf]
        %v1994 = vld [vmem:[%s1970 + $0x5c] sm:$0xf]
        %v1995 = vld [vmem:[%s1970 + $0x60] sm:$0xf]
        %v1996 = vld [vmem:[%s1970 + $0x64] sm:$0xf]
        %v1997 = vld [vmem:[%s1970 + $0x68] sm:$0xf]
        %v1998 = vld [vmem:[%s1970 + $0x6c] sm:$0xf]
        %s1999 = scalar_lea.vmem %s6, 16
        %v2000 = vld [vmem:[%s1999] sm:$0xf]
        %v2001 = vld [vmem:[%s1999 + $0x4] sm:$0xf]
        %v2030 = vunpack.c.l.b16 %v1971
        %v2031 = vunpack.c.l.b16 %v1972
        %v2032 = vunpack.c.l.b16 %v1973
        %v2033 = vunpack.c.l.b16 %v1974
        %v2034 = vunpack.c.l.b16 %v1975
        %v2035 = vunpack.c.l.b16 %v1976
        %v2036 = vunpack.c.l.b16 %v1977
        %v2037 = vunpack.c.l.b16 %v1978
        %v2038 = vunpack.c.l.b16 %v1979
        %v2039 = vunpack.c.l.b16 %v1980
        %v2040 = vunpack.c.l.b16 %v1981
        %v2041 = vunpack.c.l.b16 %v1982
        %v2042 = vunpack.c.l.b16 %v1983
        %v2043 = vunpack.c.l.b16 %v1984
        %v2044 = vunpack.c.l.b16 %v1985
        %v2045 = vunpack.c.l.b16 %v1986
        %v2046 = vunpack.c.l.b16 %v1987
        %v2047 = vunpack.c.l.b16 %v1988
        %v2048 = vunpack.c.l.b16 %v1989
        %v2049 = vunpack.c.l.b16 %v1990
        %v2050 = vunpack.c.l.b16 %v1991
        %v2051 = vunpack.c.l.b16 %v1992
        %v2052 = vunpack.c.l.b16 %v1993
        %v2053 = vunpack.c.l.b16 %v1994
        %v2054 = vunpack.c.l.b16 %v1995
        %v2055 = vunpack.c.l.b16 %v1996
        %v2056 = vunpack.c.l.b16 %v1997
        %v2057 = vunpack.c.l.b16 %v1998
        %v2058 = vpack.c.b16 %v2031, %v2030
        %v2059 = vpack.c.b16 %v2033, %v2032
        %v2060 = vpack.c.b16 %v2035, %v2034
        %v2061 = vpack.c.b16 %v2037, %v2036
        %v2062 = vpack.c.b16 %v2039, %v2038
        %v2063 = vpack.c.b16 %v2041, %v2040
        %v2064 = vpack.c.b16 %v2043, %v2042
        %v2065 = vpack.c.b16 %v2045, %v2044
        %v2066 = vpack.c.b16 %v2047, %v2046
        %v2067 = vpack.c.b16 %v2049, %v2048
        %v2068 = vpack.c.b16 %v2051, %v2050
        %v2069 = vpack.c.b16 %v2053, %v2052
        %v2070 = vpack.c.b16 %v2055, %v2054
        %v2071 = vpack.c.b16 %v2057, %v2056
        %v2074 = vunpack.c.l.b16 %v2000
        %v2075 = vunpack.c.l.b16 %v2001
        %v2076 = vpack.c.b16 %v2075, %v2074
        %v2079 = vsel %vm828, %v2058, 0
        %v2082 = vsel %vm828, %v2059, 0
        %v2085 = vsel %vm828, %v2060, 0
        %v2088 = vsel %vm828, %v2061, 0
        %v2091 = vsel %vm828, %v2062, 0
        %v2094 = vsel %vm828, %v2063, 0
        %v2097 = vsel %vm828, %v2064, 0
        %v2100 = vsel %vm828, %v2065, 0
        %v2103 = vsel %vm828, %v2066, 0
        %v2106 = vsel %vm828, %v2067, 0
        %v2109 = vsel %vm828, %v2068, 0
        %v2112 = vsel %vm828, %v2069, 0
        %v2115 = vsel %vm828, %v2070, 0
        %v2118 = vsel %vm828, %v2071, 0
        %2120 = vmatprep.subr.bf16.mxu0 0
        %2121 = vmatpush1.bf16.msra.mxu0 0
        %2122 = vmatprep.subr.bf16.mxu0 0
        %2123 = vmatpush1.bf16.msra.mxu0 0
        %2124 = vmatprep.subr.bf16.mxu0 0
        %2125 = vmatpush1.bf16.msra.mxu0 0
        %2126 = vmatprep.subr.bf16.mxu0 0
        %2127 = vmatpush1.bf16.msra.mxu0 0
        %2128 = vmatprep.subr.bf16.mxu0 0
        %2129 = vmatpush1.bf16.msra.mxu0 0
        %2130 = vmatprep.subr.bf16.mxu0 0
        %2131 = vmatpush1.bf16.msra.mxu0 0
        %2132 = vmatprep.subr.bf16.mxu0 0
        %2133 = vmatpush1.bf16.msra.mxu0 0
        %2134 = vmatprep.subr.bf16.mxu0 0
        %2135 = vmatpush1.bf16.msra.mxu0 %v2076
        %2136 = vmatprep.subr.bf16.mxu0 0
        %2137 = vmatpush2.bf16.msra.mxu0 0
        %2138 = vmatprep.subr.bf16.mxu0 0
        %2139 = vmatpush2.bf16.msra.mxu0 0
        %2140 = vmatprep.subr.bf16.mxu0 0
        %2141 = vmatpush2.bf16.msra.mxu0 0
        %2142 = vmatprep.subr.bf16.mxu0 0
        %2143 = vmatpush2.bf16.msra.mxu0 0
        %2144 = vmatprep.subr.bf16.mxu0 0
        %2145 = vmatpush2.bf16.msra.mxu0 0
        %2146 = vmatprep.subr.bf16.mxu0 0
        %2147 = vmatpush2.bf16.msra.mxu0 0
        %2148 = vmatprep.subr.bf16.mxu0 0
        %2149 = vmatpush2.bf16.msra.mxu0 0
        %2150 = vmatprep.subr.bf16.mxu0 0
        %2151 = vmatpush2.bf16.msra.mxu0 0
        %2152 = vmatprep.mubr.bf16.mxu0 0
        %2153 = vmatmul.mubr.bf16.gmra.mxu0 %v2079
        %v2154 = vpop.f32.mrf.mxu0
        %v2155 = vadd.f32 0.0, %v2154
        %v2156 = vpop.f32.mrf.mxu0
        %v2157 = vpop.f32.mrf.mxu0
        %v2158 = vadd.f32 0.0, %v2157
        %v2159 = vpop.f32.mrf.mxu0
        %2160 = vmatprep.mubr.bf16.mxu0 0
        %2161 = vmatmul.mubr.bf16.gmra.mxu0 %v2082
        %v2162 = vpop.f32.mrf.mxu0
        %v2163 = vadd.f32 0.0, %v2162
        %v2164 = vpop.f32.mrf.mxu0
        %v2165 = vpop.f32.mrf.mxu0
        %v2166 = vadd.f32 0.0, %v2165
        %v2167 = vpop.f32.mrf.mxu0
        %2168 = vmatprep.mubr.bf16.mxu0 0
        %2169 = vmatmul.mubr.bf16.gmra.mxu0 %v2085
        %v2170 = vpop.f32.mrf.mxu0
        %v2171 = vadd.f32 0.0, %v2170
        %v2172 = vpop.f32.mrf.mxu0
        %v2173 = vpop.f32.mrf.mxu0
        %v2174 = vadd.f32 0.0, %v2173
        %v2175 = vpop.f32.mrf.mxu0
        %2176 = vmatprep.mubr.bf16.mxu0 0
        %2177 = vmatmul.mubr.bf16.gmra.mxu0 %v2088
        %v2178 = vpop.f32.mrf.mxu0
        %v2179 = vadd.f32 0.0, %v2178
        %v2180 = vpop.f32.mrf.mxu0
        %v2181 = vpop.f32.mrf.mxu0
        %v2182 = vadd.f32 0.0, %v2181
        %v2183 = vpop.f32.mrf.mxu0
        %2184 = vmatprep.mubr.bf16.mxu0 0
        %2185 = vmatmul.mubr.bf16.gmra.mxu0 %v2091
        %v2186 = vpop.f32.mrf.mxu0
        %v2187 = vadd.f32 0.0, %v2186
        %v2188 = vpop.f32.mrf.mxu0
        %v2189 = vpop.f32.mrf.mxu0
        %v2190 = vadd.f32 0.0, %v2189
        %v2191 = vpop.f32.mrf.mxu0
        %2192 = vmatprep.mubr.bf16.mxu0 0
        %2193 = vmatmul.mubr.bf16.gmra.mxu0 %v2094
        %v2194 = vpop.f32.mrf.mxu0
        %v2195 = vadd.f32 0.0, %v2194
        %v2196 = vpop.f32.mrf.mxu0
        %v2197 = vpop.f32.mrf.mxu0
        %v2198 = vadd.f32 0.0, %v2197
        %v2199 = vpop.f32.mrf.mxu0
        %2200 = vmatprep.mubr.bf16.mxu0 0
        %2201 = vmatmul.mubr.bf16.gmra.mxu0 %v2097
        %v2202 = vpop.f32.mrf.mxu0
        %v2203 = vadd.f32 0.0, %v2202
        %v2204 = vpop.f32.mrf.mxu0
        %v2205 = vpop.f32.mrf.mxu0
        %v2206 = vadd.f32 0.0, %v2205
        %v2207 = vpop.f32.mrf.mxu0
        %2208 = vmatprep.mubr.bf16.mxu0 0
        %2209 = vmatmul.mubr.bf16.gmra.mxu0 %v2100
        %v2210 = vpop.f32.mrf.mxu0
        %v2211 = vadd.f32 0.0, %v2210
        %v2212 = vpop.f32.mrf.mxu0
        %v2213 = vpop.f32.mrf.mxu0
        %v2214 = vadd.f32 0.0, %v2213
        %v2215 = vpop.f32.mrf.mxu0
        %2216 = vmatprep.mubr.bf16.mxu0 0
        %2217 = vmatmul.mubr.bf16.gmra.mxu0 %v2103
        %v2218 = vpop.f32.mrf.mxu0
        %v2219 = vadd.f32 0.0, %v2218
        %v2220 = vpop.f32.mrf.mxu0
        %v2221 = vpop.f32.mrf.mxu0
        %v2222 = vadd.f32 0.0, %v2221
        %v2223 = vpop.f32.mrf.mxu0
        %2224 = vmatprep.mubr.bf16.mxu0 0
        %2225 = vmatmul.mubr.bf16.gmra.mxu0 %v2106
        %v2226 = vpop.f32.mrf.mxu0
        %v2227 = vadd.f32 0.0, %v2226
        %v2228 = vpop.f32.mrf.mxu0
        %v2229 = vpop.f32.mrf.mxu0
        %v2230 = vadd.f32 0.0, %v2229
        %v2231 = vpop.f32.mrf.mxu0
        %2232 = vmatprep.mubr.bf16.mxu0 0
        %2233 = vmatmul.mubr.bf16.gmra.mxu0 %v2109
        %v2234 = vpop.f32.mrf.mxu0
        %v2235 = vadd.f32 0.0, %v2234
        %v2236 = vpop.f32.mrf.mxu0
        %v2237 = vpop.f32.mrf.mxu0
        %v2238 = vadd.f32 0.0, %v2237
        %v2239 = vpop.f32.mrf.mxu0
        %2240 = vmatprep.mubr.bf16.mxu0 0
        %2241 = vmatmul.mubr.bf16.gmra.mxu0 %v2112
        %v2242 = vpop.f32.mrf.mxu0
        %v2243 = vadd.f32 0.0, %v2242
        %v2244 = vpop.f32.mrf.mxu0
        %v2245 = vpop.f32.mrf.mxu0
        %v2246 = vadd.f32 0.0, %v2245
        %v2247 = vpop.f32.mrf.mxu0
        %2248 = vmatprep.mubr.bf16.mxu0 0
        %2249 = vmatmul.mubr.bf16.gmra.mxu0 %v2115
        %v2250 = vpop.f32.mrf.mxu0
        %v2251 = vadd.f32 0.0, %v2250
        %v2252 = vpop.f32.mrf.mxu0
        %v2253 = vpop.f32.mrf.mxu0
        %v2254 = vadd.f32 0.0, %v2253
        %v2255 = vpop.f32.mrf.mxu0
        %2256 = vmatprep.mubr.bf16.mxu0 0
        %2257 = vmatmul.mubr.bf16.gmra.mxu0 %v2118
        %v2258 = vpop.f32.mrf.mxu0
        %v2259 = vadd.f32 0.0, %v2258
        %v2260 = vpop.f32.mrf.mxu0
        %v2261 = vpop.f32.mrf.mxu0
        %v2262 = vadd.f32 0.0, %v2261
        %v2263 = vpop.f32.mrf.mxu0
        %2264 = vdwg.mxu0
        %v2265 = vadd.f32 %v1860, %v2155
        %v2266 = vadd.f32 %v1863, %v2158
        %v2267 = vadd.f32 %v1868, %v2163
        %v2268 = vadd.f32 %v1871, %v2166
        %v2269 = vadd.f32 %v1876, %v2171
        %v2270 = vadd.f32 %v1879, %v2174
        %v2271 = vadd.f32 %v1884, %v2179
        %v2272 = vadd.f32 %v1887, %v2182
        %v2273 = vadd.f32 %v1892, %v2187
        %v2274 = vadd.f32 %v1895, %v2190
        %v2275 = vadd.f32 %v1900, %v2195
        %v2276 = vadd.f32 %v1903, %v2198
        %v2277 = vadd.f32 %v1908, %v2203
        %v2278 = vadd.f32 %v1911, %v2206
        %v2279 = vadd.f32 %v1916, %v2211
        %v2280 = vadd.f32 %v1919, %v2214
        %v2281 = vadd.f32 %v1924, %v2219
        %v2282 = vadd.f32 %v1927, %v2222
        %v2283 = vadd.f32 %v1932, %v2227
        %v2284 = vadd.f32 %v1935, %v2230
        %v2285 = vadd.f32 %v1940, %v2235
        %v2286 = vadd.f32 %v1943, %v2238
        %v2287 = vadd.f32 %v1948, %v2243
        %v2288 = vadd.f32 %v1951, %v2246
        %v2289 = vadd.f32 %v1956, %v2251
        %v2290 = vadd.f32 %v1959, %v2254
        %v2291 = vadd.f32 %v1964, %v2259
        %v2292 = vadd.f32 %v1967, %v2262
        %v2293 = vld [vmem:[%s7] sm:$0x1]
        %v2295 = vlaneseq
        %v2296 = vshrl.u32 %v2295, 7
        %v2297 = vsub.s32 0, %v2296
        %v2298 = vrot.slane %v2293, %v2297
        %v2300 = vadd.f32 %v2265, %v2298
        %v2301 = vadd.f32 %v2266, %v2298
        %v2302 = vadd.f32 %v2267, %v2298
        %v2303 = vadd.f32 %v2268, %v2298
        %v2304 = vadd.f32 %v2269, %v2298
        %v2305 = vadd.f32 %v2270, %v2298
        %v2306 = vadd.f32 %v2271, %v2298
        %v2307 = vadd.f32 %v2272, %v2298
        %v2308 = vadd.f32 %v2273, %v2298
        %v2309 = vadd.f32 %v2274, %v2298
        %v2310 = vadd.f32 %v2275, %v2298
        %v2311 = vadd.f32 %v2276, %v2298
        %v2312 = vadd.f32 %v2277, %v2298
        %v2313 = vadd.f32 %v2278, %v2298
        %v2314 = vadd.f32 %v2279, %v2298
        %v2315 = vadd.f32 %v2280, %v2298
        %v2316 = vadd.f32 %v2281, %v2298
        %v2317 = vadd.f32 %v2282, %v2298
        %v2318 = vadd.f32 %v2283, %v2298
        %v2319 = vadd.f32 %v2284, %v2298
        %v2320 = vadd.f32 %v2285, %v2298
        %v2321 = vadd.f32 %v2286, %v2298
        %v2322 = vadd.f32 %v2287, %v2298
        %v2323 = vadd.f32 %v2288, %v2298
        %v2324 = vadd.f32 %v2289, %v2298
        %v2325 = vadd.f32 %v2290, %v2298
        %v2326 = vadd.f32 %v2291, %v2298
        %v2327 = vadd.f32 %v2292, %v2298
        %v2328 = vmax.f32 %v2300, 0.0
        %v2329 = vmax.f32 %v2301, 0.0
        %v2330 = vmax.f32 %v2302, 0.0
        %v2331 = vmax.f32 %v2303, 0.0
        %v2332 = vmax.f32 %v2304, 0.0
        %v2333 = vmax.f32 %v2305, 0.0
        %v2334 = vmax.f32 %v2306, 0.0
        %v2335 = vmax.f32 %v2307, 0.0
        %v2336 = vmax.f32 %v2308, 0.0
        %v2337 = vmax.f32 %v2309, 0.0
        %v2338 = vmax.f32 %v2310, 0.0
        %v2339 = vmax.f32 %v2311, 0.0
        %v2340 = vmax.f32 %v2312, 0.0
        %v2341 = vmax.f32 %v2313, 0.0
        %v2342 = vmax.f32 %v2314, 0.0
        %v2343 = vmax.f32 %v2315, 0.0
        %v2344 = vmax.f32 %v2316, 0.0
        %v2345 = vmax.f32 %v2317, 0.0
        %v2346 = vmax.f32 %v2318, 0.0
        %v2347 = vmax.f32 %v2319, 0.0
        %v2348 = vmax.f32 %v2320, 0.0
        %v2349 = vmax.f32 %v2321, 0.0
        %v2350 = vmax.f32 %v2322, 0.0
        %v2351 = vmax.f32 %v2323, 0.0
        %v2352 = vmax.f32 %v2324, 0.0
        %v2353 = vmax.f32 %v2325, 0.0
        %v2354 = vmax.f32 %v2326, 0.0
        %v2355 = vmax.f32 %v2327, 0.0
        %v2356 = vmax.f32 %v2328, %v2330
        %v2357 = vmax.f32 %v2329, %v2331
        %v2358 = vmax.f32 %v2330, %v2332
        %v2359 = vmax.f32 %v2331, %v2333
        %v2360 = vmax.f32 %v2332, %v2334
        %v2361 = vmax.f32 %v2333, %v2335
        %v2362 = vmax.f32 %v2334, %v2336
        %v2363 = vmax.f32 %v2335, %v2337
        %v2364 = vmax.f32 %v2336, %v2338
        %v2365 = vmax.f32 %v2337, %v2339
        %v2366 = vmax.f32 %v2338, %v2340
        %v2367 = vmax.f32 %v2339, %v2341
        %v2368 = vmax.f32 %v2340, %v2342
        %v2369 = vmax.f32 %v2341, %v2343
        %v2370 = vmax.f32 %v2342, %v2344
        %v2371 = vmax.f32 %v2343, %v2345
        %v2372 = vmax.f32 %v2344, %v2346
        %v2373 = vmax.f32 %v2345, %v2347
        %v2374 = vmax.f32 %v2346, %v2348
        %v2375 = vmax.f32 %v2347, %v2349
        %v2376 = vmax.f32 %v2348, %v2350
        %v2377 = vmax.f32 %v2349, %v2351
        %v2378 = vmax.f32 %v2350, %v2352
        %v2379 = vmax.f32 %v2351, %v2353
        %v2380 = vmax.f32 %v2356, %v2332
        %v2381 = vmax.f32 %v2357, %v2333
        %v2382 = vmax.f32 %v2358, %v2334
        %v2383 = vmax.f32 %v2359, %v2335
        %v2384 = vmax.f32 %v2360, %v2336
        %v2385 = vmax.f32 %v2361, %v2337
        %v2386 = vmax.f32 %v2362, %v2338
        %v2387 = vmax.f32 %v2363, %v2339
        %v2388 = vmax.f32 %v2364, %v2340
        %v2389 = vmax.f32 %v2365, %v2341
        %v2390 = vmax.f32 %v2366, %v2342
        %v2391 = vmax.f32 %v2367, %v2343
        %v2392 = vmax.f32 %v2368, %v2344
        %v2393 = vmax.f32 %v2369, %v2345
        %v2394 = vmax.f32 %v2370, %v2346
        %v2395 = vmax.f32 %v2371, %v2347
        %v2396 = vmax.f32 %v2372, %v2348
        %v2397 = vmax.f32 %v2373, %v2349
        %v2398 = vmax.f32 %v2374, %v2350
        %v2399 = vmax.f32 %v2375, %v2351
        %v2400 = vmax.f32 %v2376, %v2352
        %v2401 = vmax.f32 %v2377, %v2353
        %v2402 = vmax.f32 %v2378, %v2354
        %v2403 = vmax.f32 %v2379, %v2355
        %v2404 = vpack.c.bf16 %v2381, %v2380
        %v2405 = vpack.c.bf16 %v2383, %v2382
        %v2406 = vpack.c.bf16 %v2385, %v2384
        %v2407 = vpack.c.bf16 %v2387, %v2386
        %v2408 = vpack.c.bf16 %v2389, %v2388
        %v2409 = vpack.c.bf16 %v2391, %v2390
        %v2410 = vpack.c.bf16 %v2393, %v2392
        %v2411 = vpack.c.bf16 %v2395, %v2394
        %v2412 = vpack.c.bf16 %v2397, %v2396
        %v2413 = vpack.c.bf16 %v2399, %v2398
        %v2414 = vpack.c.bf16 %v2401, %v2400
        %v2415 = vpack.c.bf16 %v2403, %v2402
        %v2416 = vld [vmem:[%s8] sm:$0xf]
        %v2417 = vld [vmem:[%s8 + $0x4] sm:$0xf]
        %v2418 = vld [vmem:[%s8 + $0x8] sm:$0xf]
        %v2419 = vld [vmem:[%s8 + $0xc] sm:$0xf]
        %v2420 = vld [vmem:[%s8 + $0x10] sm:$0xf]
        %v2421 = vld [vmem:[%s8 + $0x14] sm:$0xf]
        %v2422 = vld [vmem:[%s8 + $0x18] sm:$0xf]
        %v2423 = vld [vmem:[%s8 + $0x1c] sm:$0xf]
        %v2424 = vld [vmem:[%s8 + $0x20] sm:$0xf]
        %v2425 = vld [vmem:[%s8 + $0x24] sm:$0xf]
        %v2426 = vld [vmem:[%s8 + $0x28] sm:$0xf]
        %v2427 = vld [vmem:[%s8 + $0x2c] sm:$0xf]
        %v2428 = vld [vmem:[%s8 + $0x30] sm:$0xf]
        %v2429 = vld [vmem:[%s8 + $0x34] sm:$0xf]
        %v2430 = vld [vmem:[%s8 + $0x38] sm:$0xf]
        %v2431 = vld [vmem:[%s8 + $0x3c] sm:$0xf]
        %v2432 = vld [vmem:[%s9] sm:$0x1]
        %v2434 = vlaneseq
        %v2435 = vshrl.u32 %v2434, 7
        %v2436 = vsub.s32 0, %v2435
        %v2437 = vrot.slane %v2432, %v2436
        %v2455 = vunpack.c.l.b16 %v2416
        %v2456 = vunpack.c.l.b16 %v2417
        %v2457 = vunpack.c.l.b16 %v2418
        %v2458 = vunpack.c.l.b16 %v2419
        %v2459 = vunpack.c.l.b16 %v2420
        %v2460 = vunpack.c.l.b16 %v2421
        %v2461 = vunpack.c.l.b16 %v2422
        %v2462 = vunpack.c.l.b16 %v2423
        %v2463 = vunpack.c.l.b16 %v2424
        %v2464 = vunpack.c.l.b16 %v2425
        %v2465 = vunpack.c.l.b16 %v2426
        %v2466 = vunpack.c.l.b16 %v2427
        %v2467 = vunpack.c.l.b16 %v2428
        %v2468 = vunpack.c.l.b16 %v2429
        %v2469 = vunpack.c.l.b16 %v2430
        %v2470 = vunpack.c.l.b16 %v2431
        %v2471 = vpack.c.b16 %v2456, %v2455
        %v2472 = vpack.c.b16 %v2458, %v2457
        %v2473 = vpack.c.b16 %v2460, %v2459
        %v2474 = vpack.c.b16 %v2462, %v2461
        %v2475 = vpack.c.b16 %v2464, %v2463
        %v2476 = vpack.c.b16 %v2466, %v2465
        %v2477 = vpack.c.b16 %v2468, %v2467
        %v2478 = vpack.c.b16 %v2470, %v2469
        %2487 = vmatprep.subr.bf16.mxu0 0
        %2488 = vmatpush1.bf16.msra.mxu0 %v2478
        %2489 = vmatprep.subr.bf16.mxu0 0
        %2490 = vmatpush1.bf16.msra.mxu0 %v2477
        %2491 = vmatprep.subr.bf16.mxu0 0
        %2492 = vmatpush1.bf16.msra.mxu0 %v2476
        %2493 = vmatprep.subr.bf16.mxu0 0
        %2494 = vmatpush1.bf16.msra.mxu0 %v2475
        %2495 = vmatprep.subr.bf16.mxu0 0
        %2496 = vmatpush1.bf16.msra.mxu0 %v2474
        %2497 = vmatprep.subr.bf16.mxu0 0
        %2498 = vmatpush1.bf16.msra.mxu0 %v2473
        %2499 = vmatprep.subr.bf16.mxu0 0
        %2500 = vmatpush1.bf16.msra.mxu0 %v2472
        %2501 = vmatprep.subr.bf16.mxu0 0
        %2502 = vmatpush1.bf16.msra.mxu0 %v2471
        %2503 = vmatprep.subr.bf16.mxu0 0
        %2504 = vmatpush2.bf16.msra.mxu0 0
        %2505 = vmatprep.subr.bf16.mxu0 0
        %2506 = vmatpush2.bf16.msra.mxu0 0
        %2507 = vmatprep.subr.bf16.mxu0 0
        %2508 = vmatpush2.bf16.msra.mxu0 0
        %2509 = vmatprep.subr.bf16.mxu0 0
        %2510 = vmatpush2.bf16.msra.mxu0 0
        %2511 = vmatprep.subr.bf16.mxu0 0
        %2512 = vmatpush2.bf16.msra.mxu0 0
        %2513 = vmatprep.subr.bf16.mxu0 0
        %2514 = vmatpush2.bf16.msra.mxu0 0
        %2515 = vmatprep.subr.bf16.mxu0 0
        %2516 = vmatpush2.bf16.msra.mxu0 0
        %2517 = vmatprep.subr.bf16.mxu0 0
        %2518 = vmatpush2.bf16.msra.mxu0 0
        %2519 = vmatprep.mubr.bf16.mxu0 0
        %2520 = vmatmul.mubr.bf16.gmra.mxu0 %v2404
        %v2521 = vpop.f32.mrf.mxu0
        %v2522 = vadd.f32 %v2437, %v2521
        %v2523 = vpop.f32.mrf.mxu0
        %v2524 = vpop.f32.mrf.mxu0
        %v2525 = vadd.f32 %v2437, %v2524
        %v2526 = vpop.f32.mrf.mxu0
        %2527 = vmatprep.mubr.bf16.mxu0 0
        %2528 = vmatmul.mubr.bf16.gmra.mxu0 %v2405
        %v2529 = vpop.f32.mrf.mxu0
        %v2530 = vadd.f32 %v2437, %v2529
        %v2531 = vpop.f32.mrf.mxu0
        %v2532 = vpop.f32.mrf.mxu0
        %v2533 = vadd.f32 %v2437, %v2532
        %v2534 = vpop.f32.mrf.mxu0
        %2535 = vmatprep.mubr.bf16.mxu0 0
        %2536 = vmatmul.mubr.bf16.gmra.mxu0 %v2406
        %v2537 = vpop.f32.mrf.mxu0
        %v2538 = vadd.f32 %v2437, %v2537
        %v2539 = vpop.f32.mrf.mxu0
        %v2540 = vpop.f32.mrf.mxu0
        %v2541 = vadd.f32 %v2437, %v2540
        %v2542 = vpop.f32.mrf.mxu0
        %2543 = vmatprep.mubr.bf16.mxu0 0
        %2544 = vmatmul.mubr.bf16.gmra.mxu0 %v2407
        %v2545 = vpop.f32.mrf.mxu0
        %v2546 = vadd.f32 %v2437, %v2545
        %v2547 = vpop.f32.mrf.mxu0
        %v2548 = vpop.f32.mrf.mxu0
        %v2549 = vadd.f32 %v2437, %v2548
        %v2550 = vpop.f32.mrf.mxu0
        %2551 = vmatprep.mubr.bf16.mxu0 0
        %2552 = vmatmul.mubr.bf16.gmra.mxu0 %v2408
        %v2553 = vpop.f32.mrf.mxu0
        %v2554 = vadd.f32 %v2437, %v2553
        %v2555 = vpop.f32.mrf.mxu0
        %v2556 = vpop.f32.mrf.mxu0
        %v2557 = vadd.f32 %v2437, %v2556
        %v2558 = vpop.f32.mrf.mxu0
        %2559 = vmatprep.mubr.bf16.mxu0 0
        %2560 = vmatmul.mubr.bf16.gmra.mxu0 %v2409
        %v2561 = vpop.f32.mrf.mxu0
        %v2562 = vadd.f32 %v2437, %v2561
        %v2563 = vpop.f32.mrf.mxu0
        %v2564 = vpop.f32.mrf.mxu0
        %v2565 = vadd.f32 %v2437, %v2564
        %v2566 = vpop.f32.mrf.mxu0
        %2567 = vmatprep.mubr.bf16.mxu0 0
        %2568 = vmatmul.mubr.bf16.gmra.mxu0 %v2410
        %v2569 = vpop.f32.mrf.mxu0
        %v2570 = vadd.f32 %v2437, %v2569
        %v2571 = vpop.f32.mrf.mxu0
        %v2572 = vpop.f32.mrf.mxu0
        %v2573 = vadd.f32 %v2437, %v2572
        %v2574 = vpop.f32.mrf.mxu0
        %2575 = vmatprep.mubr.bf16.mxu0 0
        %2576 = vmatmul.mubr.bf16.gmra.mxu0 %v2411
        %v2577 = vpop.f32.mrf.mxu0
        %v2578 = vadd.f32 %v2437, %v2577
        %v2579 = vpop.f32.mrf.mxu0
        %v2580 = vpop.f32.mrf.mxu0
        %v2581 = vadd.f32 %v2437, %v2580
        %v2582 = vpop.f32.mrf.mxu0
        %2583 = vmatprep.mubr.bf16.mxu0 0
        %2584 = vmatmul.mubr.bf16.gmra.mxu0 %v2412
        %v2585 = vpop.f32.mrf.mxu0
        %v2586 = vadd.f32 %v2437, %v2585
        %v2587 = vpop.f32.mrf.mxu0
        %v2588 = vpop.f32.mrf.mxu0
        %v2589 = vadd.f32 %v2437, %v2588
        %v2590 = vpop.f32.mrf.mxu0
        %2591 = vmatprep.mubr.bf16.mxu0 0
        %2592 = vmatmul.mubr.bf16.gmra.mxu0 %v2413
        %v2593 = vpop.f32.mrf.mxu0
        %v2594 = vadd.f32 %v2437, %v2593
        %v2595 = vpop.f32.mrf.mxu0
        %v2596 = vpop.f32.mrf.mxu0
        %v2597 = vadd.f32 %v2437, %v2596
        %v2598 = vpop.f32.mrf.mxu0
        %2599 = vmatprep.mubr.bf16.mxu0 0
        %2600 = vmatmul.mubr.bf16.gmra.mxu0 %v2414
        %v2601 = vpop.f32.mrf.mxu0
        %v2602 = vadd.f32 %v2437, %v2601
        %v2603 = vpop.f32.mrf.mxu0
        %v2604 = vpop.f32.mrf.mxu0
        %v2605 = vadd.f32 %v2437, %v2604
        %v2606 = vpop.f32.mrf.mxu0
        %2607 = vmatprep.mubr.bf16.mxu0 0
        %2608 = vmatmul.mubr.bf16.gmra.mxu0 %v2415
        %v2609 = vpop.f32.mrf.mxu0
        %v2610 = vadd.f32 %v2437, %v2609
        %v2611 = vpop.f32.mrf.mxu0
        %v2612 = vpop.f32.mrf.mxu0
        %v2613 = vadd.f32 %v2437, %v2612
        %v2614 = vpop.f32.mrf.mxu0
        %2615 = vdwg.mxu0
        %v2616 = vmax.f32 %v2522, 0.0
        %v2617 = vmax.f32 %v2525, 0.0
        %v2618 = vmax.f32 %v2530, 0.0
        %v2619 = vmax.f32 %v2533, 0.0
        %v2620 = vmax.f32 %v2538, 0.0
        %v2621 = vmax.f32 %v2541, 0.0
        %v2622 = vmax.f32 %v2546, 0.0
        %v2623 = vmax.f32 %v2549, 0.0
        %v2624 = vmax.f32 %v2554, 0.0
        %v2625 = vmax.f32 %v2557, 0.0
        %v2626 = vmax.f32 %v2562, 0.0
        %v2627 = vmax.f32 %v2565, 0.0
        %v2628 = vmax.f32 %v2570, 0.0
        %v2629 = vmax.f32 %v2573, 0.0
        %v2630 = vmax.f32 %v2578, 0.0
        %v2631 = vmax.f32 %v2581, 0.0
        %v2632 = vmax.f32 %v2586, 0.0
        %v2633 = vmax.f32 %v2589, 0.0
        %v2634 = vmax.f32 %v2594, 0.0
        %v2635 = vmax.f32 %v2597, 0.0
        %v2636 = vmax.f32 %v2602, 0.0
        %v2637 = vmax.f32 %v2605, 0.0
        %v2638 = vmax.f32 %v2610, 0.0
        %v2639 = vmax.f32 %v2613, 0.0
        %v2640 = vmul.f32 %v1380, %v2616
        %v2641 = vmul.f32 %v1381, %v2617
        %v2642 = vmul.f32 %v1380, %v2618
        %v2643 = vmul.f32 %v1381, %v2619
        %v2644 = vmul.f32 %v1380, %v2620
        %v2645 = vmul.f32 %v1381, %v2621
        %v2646 = vmul.f32 %v1380, %v2622
        %v2647 = vmul.f32 %v1381, %v2623
        %v2648 = vmul.f32 %v1380, %v2624
        %v2649 = vmul.f32 %v1381, %v2625
        %v2650 = vmul.f32 %v1380, %v2626
        %v2651 = vmul.f32 %v1381, %v2627
        %v2652 = vmul.f32 %v1380, %v2628
        %v2653 = vmul.f32 %v1381, %v2629
        %v2654 = vmul.f32 %v1380, %v2630
        %v2655 = vmul.f32 %v1381, %v2631
        %v2656 = vmul.f32 %v1380, %v2632
        %v2657 = vmul.f32 %v1381, %v2633
        %v2658 = vmul.f32 %v1380, %v2634
        %v2659 = vmul.f32 %v1381, %v2635
        %v2660 = vmul.f32 %v1380, %v2636
        %v2661 = vmul.f32 %v1381, %v2637
        %v2662 = vmul.f32 %v1380, %v2638
        %v2663 = vmul.f32 %v1381, %v2639
        %v2664 = vpack.c.bf16 %v2641, %v2640
        %v2665 = vpack.c.bf16 %v2643, %v2642
        %v2666 = vpack.c.bf16 %v2645, %v2644
        %v2667 = vpack.c.bf16 %v2647, %v2646
        %v2668 = vpack.c.bf16 %v2649, %v2648
        %v2669 = vpack.c.bf16 %v2651, %v2650
        %v2670 = vpack.c.bf16 %v2653, %v2652
        %v2671 = vpack.c.bf16 %v2655, %v2654
        %v2672 = vpack.c.bf16 %v2657, %v2656
        %v2673 = vpack.c.bf16 %v2659, %v2658
        %v2674 = vpack.c.bf16 %v2661, %v2660
        %v2675 = vpack.c.bf16 %v2663, %v2662
        %v2676 = vld [vmem:[%s10] sm:$0xf]
        %v2677 = vld [vmem:[%s10 + $0x4] sm:$0xf]
        %v2678 = vld [vmem:[%s10 + $0x8] sm:$0xf]
        %v2679 = vld [vmem:[%s10 + $0xc] sm:$0xf]
        %v2680 = vld [vmem:[%s10 + $0x10] sm:$0xf]
        %v2681 = vld [vmem:[%s10 + $0x14] sm:$0xf]
        %v2682 = vld [vmem:[%s10 + $0x18] sm:$0xf]
        %v2683 = vld [vmem:[%s10 + $0x1c] sm:$0xf]
        %v2684 = vld [vmem:[%s10 + $0x20] sm:$0xf]
        %v2685 = vld [vmem:[%s10 + $0x24] sm:$0xf]
        %v2686 = vld [vmem:[%s10 + $0x28] sm:$0xf]
        %v2687 = vld [vmem:[%s10 + $0x2c] sm:$0xf]
        %v2688 = vld [vmem:[%s10 + $0x30] sm:$0xf]
        %v2689 = vld [vmem:[%s10 + $0x34] sm:$0xf]
        %v2690 = vld [vmem:[%s10 + $0x38] sm:$0xf]
        %v2691 = vld [vmem:[%s10 + $0x3c] sm:$0xf]
        %v2692 = vld [vmem:[%s10 + $0x40] sm:$0xf]
        %v2693 = vld [vmem:[%s10 + $0x44] sm:$0xf]
        %v2694 = vld [vmem:[%s10 + $0x48] sm:$0xf]
        %v2695 = vld [vmem:[%s10 + $0x4c] sm:$0xf]
        %v2696 = vld [vmem:[%s10 + $0x50] sm:$0xf]
        %v2697 = vld [vmem:[%s10 + $0x54] sm:$0xf]
        %v2698 = vld [vmem:[%s10 + $0x58] sm:$0xf]
        %v2699 = vld [vmem:[%s10 + $0x5c] sm:$0xf]
        %v2700 = vld [vmem:[%s10 + $0x60] sm:$0xf]
        %v2701 = vld [vmem:[%s10 + $0x64] sm:$0xf]
        %v2702 = vld [vmem:[%s10 + $0x68] sm:$0xf]
        %v2703 = vld [vmem:[%s10 + $0x6c] sm:$0xf]
        %v2704 = vld [vmem:[%s10 + $0x70] sm:$0xf]
        %v2705 = vld [vmem:[%s10 + $0x74] sm:$0xf]
        %v2706 = vld [vmem:[%s10 + $0x78] sm:$0xf]
        %v2707 = vld [vmem:[%s10 + $0x7c] sm:$0xf]
        %v2708 = vld [vmem:[%s10 + $0x80] sm:$0xf]
        %v2709 = vld [vmem:[%s10 + $0x84] sm:$0xf]
        %v2710 = vld [vmem:[%s10 + $0x88] sm:$0xf]
        %v2711 = vld [vmem:[%s10 + $0x8c] sm:$0xf]
        %v2712 = vld [vmem:[%s10 + $0x90] sm:$0xf]
        %v2713 = vld [vmem:[%s10 + $0x94] sm:$0xf]
        %v2714 = vld [vmem:[%s10 + $0x98] sm:$0xf]
        %v2715 = vld [vmem:[%s10 + $0x9c] sm:$0xf]
        %v2716 = vld [vmem:[%s10 + $0xa0] sm:$0xf]
        %v2717 = vld [vmem:[%s10 + $0xa4] sm:$0xf]
        %v2718 = vld [vmem:[%s10 + $0xa8] sm:$0xf]
        %v2719 = vld [vmem:[%s10 + $0xac] sm:$0xf]
        %v2720 = vld [vmem:[%s10 + $0xb0] sm:$0xf]
        %v2721 = vld [vmem:[%s10 + $0xb4] sm:$0xf]
        %v2722 = vld [vmem:[%s10 + $0xb8] sm:$0xf]
        %v2723 = vld [vmem:[%s10 + $0xbc] sm:$0xf]
        %v2724 = vld [vmem:[%s10 + $0xc0] sm:$0xf]
        %v2725 = vld [vmem:[%s10 + $0xc4] sm:$0xf]
        %v2726 = vld [vmem:[%s10 + $0xc8] sm:$0xf]
        %v2727 = vld [vmem:[%s10 + $0xcc] sm:$0xf]
        %v2728 = vld [vmem:[%s10 + $0xd0] sm:$0xf]
        %v2729 = vld [vmem:[%s10 + $0xd4] sm:$0xf]
        %v2730 = vld [vmem:[%s10 + $0xd8] sm:$0xf]
        %v2731 = vld [vmem:[%s10 + $0xdc] sm:$0xf]
        %v2732 = vld [vmem:[%s10 + $0xe0] sm:$0xf]
        %v2733 = vld [vmem:[%s10 + $0xe4] sm:$0xf]
        %v2734 = vld [vmem:[%s10 + $0xe8] sm:$0xf]
        %v2735 = vld [vmem:[%s10 + $0xec] sm:$0xf]
        %v2736 = vld [vmem:[%s10 + $0xf0] sm:$0xf]
        %v2737 = vld [vmem:[%s10 + $0xf4] sm:$0xf]
        %v2738 = vld [vmem:[%s10 + $0xf8] sm:$0xf]
        %v2739 = vld [vmem:[%s10 + $0xfc] sm:$0xf]
        %v2740 = vld [vmem:[%s10 + $0x100] sm:$0xf]
        %v2741 = vld [vmem:[%s10 + $0x104] sm:$0xf]
        %v2742 = vld [vmem:[%s10 + $0x108] sm:$0xf]
        %v2743 = vld [vmem:[%s10 + $0x10c] sm:$0xf]
        %v2744 = vld [vmem:[%s10 + $0x110] sm:$0xf]
        %v2745 = vld [vmem:[%s10 + $0x114] sm:$0xf]
        %v2746 = vld [vmem:[%s10 + $0x118] sm:$0xf]
        %v2747 = vld [vmem:[%s10 + $0x11c] sm:$0xf]
        %v2748 = vld [vmem:[%s10 + $0x120] sm:$0xf]
        %v2749 = vld [vmem:[%s10 + $0x124] sm:$0xf]
        %v2750 = vld [vmem:[%s10 + $0x128] sm:$0xf]
        %v2751 = vld [vmem:[%s10 + $0x12c] sm:$0xf]
        %v2752 = vld [vmem:[%s10 + $0x130] sm:$0xf]
        %v2753 = vld [vmem:[%s10 + $0x134] sm:$0xf]
        %v2754 = vld [vmem:[%s10 + $0x138] sm:$0xf]
        %v2755 = vld [vmem:[%s10 + $0x13c] sm:$0xf]
        %v2756 = vld [vmem:[%s10 + $0x140] sm:$0xf]
        %v2757 = vld [vmem:[%s10 + $0x144] sm:$0xf]
        %v2758 = vld [vmem:[%s10 + $0x148] sm:$0xf]
        %v2759 = vld [vmem:[%s10 + $0x14c] sm:$0xf]
        %v2760 = vld [vmem:[%s10 + $0x150] sm:$0xf]
        %v2761 = vld [vmem:[%s10 + $0x154] sm:$0xf]
        %v2762 = vld [vmem:[%s10 + $0x158] sm:$0xf]
        %v2763 = vld [vmem:[%s10 + $0x15c] sm:$0xf]
        %v2764 = vld [vmem:[%s10 + $0x160] sm:$0xf]
        %v2765 = vld [vmem:[%s10 + $0x164] sm:$0xf]
        %v2766 = vld [vmem:[%s10 + $0x168] sm:$0xf]
        %v2767 = vld [vmem:[%s10 + $0x16c] sm:$0xf]
        %v2768 = vld [vmem:[%s10 + $0x170] sm:$0xf]
        %v2769 = vld [vmem:[%s10 + $0x174] sm:$0xf]
        %v2770 = vld [vmem:[%s10 + $0x178] sm:$0xf]
        %v2771 = vld [vmem:[%s10 + $0x17c] sm:$0xf]
        %v2772 = vld [vmem:[%s10 + $0x180] sm:$0xf]
        %v2773 = vld [vmem:[%s10 + $0x184] sm:$0xf]
        %v2774 = vld [vmem:[%s10 + $0x188] sm:$0xf]
        %v2775 = vld [vmem:[%s10 + $0x18c] sm:$0xf]
        %v2776 = vld [vmem:[%s10 + $0x190] sm:$0xf]
        %v2777 = vld [vmem:[%s10 + $0x194] sm:$0xf]
        %v2778 = vld [vmem:[%s10 + $0x198] sm:$0xf]
        %v2779 = vld [vmem:[%s10 + $0x19c] sm:$0xf]
        %v2780 = vld [vmem:[%s10 + $0x1a0] sm:$0xf]
        %v2781 = vld [vmem:[%s10 + $0x1a4] sm:$0xf]
        %v2782 = vld [vmem:[%s10 + $0x1a8] sm:$0xf]
        %v2783 = vld [vmem:[%s10 + $0x1ac] sm:$0xf]
        %v2784 = vld [vmem:[%s10 + $0x1b0] sm:$0xf]
        %v2785 = vld [vmem:[%s10 + $0x1b4] sm:$0xf]
        %v2786 = vld [vmem:[%s10 + $0x1b8] sm:$0xf]
        %v2787 = vld [vmem:[%s10 + $0x1bc] sm:$0xf]
        %v2788 = vld [vmem:[%s10 + $0x1c0] sm:$0xf]
        %v2789 = vld [vmem:[%s10 + $0x1c4] sm:$0xf]
        %v2790 = vld [vmem:[%s10 + $0x1c8] sm:$0xf]
        %v2791 = vld [vmem:[%s10 + $0x1cc] sm:$0xf]
        %v2792 = vld [vmem:[%s10 + $0x1d0] sm:$0xf]
        %v2793 = vld [vmem:[%s10 + $0x1d4] sm:$0xf]
        %v2794 = vld [vmem:[%s10 + $0x1d8] sm:$0xf]
        %v2795 = vld [vmem:[%s10 + $0x1dc] sm:$0xf]
        %v2796 = vld [vmem:[%s10 + $0x1e0] sm:$0xf]
        %v2797 = vld [vmem:[%s10 + $0x1e4] sm:$0xf]
        %v2798 = vld [vmem:[%s10 + $0x1e8] sm:$0xf]
        %v2799 = vld [vmem:[%s10 + $0x1ec] sm:$0xf]
        %v2800 = vld [vmem:[%s10 + $0x1f0] sm:$0xf]
        %v2801 = vld [vmem:[%s10 + $0x1f4] sm:$0xf]
        %v2802 = vld [vmem:[%s10 + $0x1f8] sm:$0xf]
        %v2803 = vld [vmem:[%s10 + $0x1fc] sm:$0xf]
        %v2804 = vld [vmem:[%s10 + $0x200] sm:$0xf]
        %v2805 = vld [vmem:[%s10 + $0x204] sm:$0xf]
        %v2806 = vld [vmem:[%s10 + $0x208] sm:$0xf]
        %v2807 = vld [vmem:[%s10 + $0x20c] sm:$0xf]
        %v2808 = vld [vmem:[%s10 + $0x210] sm:$0xf]
        %v2809 = vld [vmem:[%s10 + $0x214] sm:$0xf]
        %v2810 = vld [vmem:[%s10 + $0x218] sm:$0xf]
        %v2811 = vld [vmem:[%s10 + $0x21c] sm:$0xf]
        %v2812 = vld [vmem:[%s10 + $0x220] sm:$0xf]
        %v2813 = vld [vmem:[%s10 + $0x224] sm:$0xf]
        %v2814 = vld [vmem:[%s10 + $0x228] sm:$0xf]
        %v2815 = vld [vmem:[%s10 + $0x22c] sm:$0xf]
        %v2816 = vld [vmem:[%s10 + $0x230] sm:$0xf]
        %v2817 = vld [vmem:[%s10 + $0x234] sm:$0xf]
        %v2818 = vld [vmem:[%s10 + $0x238] sm:$0xf]
        %v2819 = vld [vmem:[%s10 + $0x23c] sm:$0xf]
        %v2820 = vld [vmem:[%s10 + $0x240] sm:$0xf]
        %v2821 = vld [vmem:[%s10 + $0x244] sm:$0xf]
        %v2822 = vld [vmem:[%s10 + $0x248] sm:$0xf]
        %v2823 = vld [vmem:[%s10 + $0x24c] sm:$0xf]
        %v2824 = vld [vmem:[%s10 + $0x250] sm:$0xf]
        %v2825 = vld [vmem:[%s10 + $0x254] sm:$0xf]
        %v2826 = vld [vmem:[%s10 + $0x258] sm:$0xf]
        %v2827 = vld [vmem:[%s10 + $0x25c] sm:$0xf]
        %v2828 = vld [vmem:[%s10 + $0x260] sm:$0xf]
        %v2829 = vld [vmem:[%s10 + $0x264] sm:$0xf]
        %v2830 = vld [vmem:[%s10 + $0x268] sm:$0xf]
        %v2831 = vld [vmem:[%s10 + $0x26c] sm:$0xf]
        %v2832 = vld [vmem:[%s10 + $0x270] sm:$0xf]
        %v2833 = vld [vmem:[%s10 + $0x274] sm:$0xf]
        %v2834 = vld [vmem:[%s10 + $0x278] sm:$0xf]
        %v2835 = vld [vmem:[%s10 + $0x27c] sm:$0xf]
        %v2836 = vld [vmem:[%s10 + $0x280] sm:$0xf]
        %v2837 = vld [vmem:[%s10 + $0x284] sm:$0xf]
        %v2838 = vld [vmem:[%s10 + $0x288] sm:$0xf]
        %v2839 = vld [vmem:[%s10 + $0x28c] sm:$0xf]
        %v2840 = vld [vmem:[%s10 + $0x290] sm:$0xf]
        %v2841 = vld [vmem:[%s10 + $0x294] sm:$0xf]
        %v2842 = vld [vmem:[%s10 + $0x298] sm:$0xf]
        %v2843 = vld [vmem:[%s10 + $0x29c] sm:$0xf]
        %v2844 = vld [vmem:[%s10 + $0x2a0] sm:$0xf]
        %v2845 = vld [vmem:[%s10 + $0x2a4] sm:$0xf]
        %v2846 = vld [vmem:[%s10 + $0x2a8] sm:$0xf]
        %v2847 = vld [vmem:[%s10 + $0x2ac] sm:$0xf]
        %v2848 = vld [vmem:[%s10 + $0x2b0] sm:$0xf]
        %v2849 = vld [vmem:[%s10 + $0x2b4] sm:$0xf]
        %v2850 = vld [vmem:[%s10 + $0x2b8] sm:$0xf]
        %v2851 = vld [vmem:[%s10 + $0x2bc] sm:$0xf]
        %v2852 = vld [vmem:[%s10 + $0x2c0] sm:$0xf]
        %v2853 = vld [vmem:[%s10 + $0x2c4] sm:$0xf]
        %v2854 = vld [vmem:[%s10 + $0x2c8] sm:$0xf]
        %v2855 = vld [vmem:[%s10 + $0x2cc] sm:$0xf]
        %v2856 = vld [vmem:[%s10 + $0x2d0] sm:$0xf]
        %v2857 = vld [vmem:[%s10 + $0x2d4] sm:$0xf]
        %v2858 = vld [vmem:[%s10 + $0x2d8] sm:$0xf]
        %v2859 = vld [vmem:[%s10 + $0x2dc] sm:$0xf]
        %v2860 = vld [vmem:[%s10 + $0x2e0] sm:$0xf]
        %v2861 = vld [vmem:[%s10 + $0x2e4] sm:$0xf]
        %v2862 = vld [vmem:[%s10 + $0x2e8] sm:$0xf]
        %v2863 = vld [vmem:[%s10 + $0x2ec] sm:$0xf]
        %v2864 = vld [vmem:[%s10 + $0x2f0] sm:$0xf]
        %v2865 = vld [vmem:[%s10 + $0x2f4] sm:$0xf]
        %v2866 = vld [vmem:[%s10 + $0x2f8] sm:$0xf]
        %v2867 = vld [vmem:[%s10 + $0x2fc] sm:$0xf]
        %v2868 = vld [vmem:[%s11] sm:$0x1]
        %v2870 = vlaneseq
        %v2871 = vshrl.u32 %v2870, 7
        %v2872 = vsub.s32 0, %v2871
        %v2873 = vrot.slane %v2868, %v2872
        %v3067 = vunpack.c.l.b16 %v2676
        %v3068 = vunpack.c.l.b16 %v2677
        %v3069 = vunpack.c.l.b16 %v2678
        %v3070 = vunpack.c.l.b16 %v2679
        %v3071 = vunpack.c.l.b16 %v2680
        %v3072 = vunpack.c.l.b16 %v2681
        %v3073 = vunpack.c.l.b16 %v2682
        %v3074 = vunpack.c.l.b16 %v2683
        %v3075 = vunpack.c.l.b16 %v2684
        %v3076 = vunpack.c.l.b16 %v2685
        %v3077 = vunpack.c.l.b16 %v2686
        %v3078 = vunpack.c.l.b16 %v2687
        %v3079 = vunpack.c.l.b16 %v2688
        %v3080 = vunpack.c.l.b16 %v2689
        %v3081 = vunpack.c.l.b16 %v2690
        %v3082 = vunpack.c.l.b16 %v2691
        %v3083 = vunpack.c.l.b16 %v2692
        %v3084 = vunpack.c.l.b16 %v2693
        %v3085 = vunpack.c.l.b16 %v2694
        %v3086 = vunpack.c.l.b16 %v2695
        %v3087 = vunpack.c.l.b16 %v2696
        %v3088 = vunpack.c.l.b16 %v2697
        %v3089 = vunpack.c.l.b16 %v2698
        %v3090 = vunpack.c.l.b16 %v2699
        %v3091 = vunpack.c.l.b16 %v2700
        %v3092 = vunpack.c.l.b16 %v2701
        %v3093 = vunpack.c.l.b16 %v2702
        %v3094 = vunpack.c.l.b16 %v2703
        %v3095 = vunpack.c.l.b16 %v2704
        %v3096 = vunpack.c.l.b16 %v2705
        %v3097 = vunpack.c.l.b16 %v2706
        %v3098 = vunpack.c.l.b16 %v2707
        %v3099 = vunpack.c.l.b16 %v2708
        %v3100 = vunpack.c.l.b16 %v2709
        %v3101 = vunpack.c.l.b16 %v2710
        %v3102 = vunpack.c.l.b16 %v2711
        %v3103 = vunpack.c.l.b16 %v2712
        %v3104 = vunpack.c.l.b16 %v2713
        %v3105 = vunpack.c.l.b16 %v2714
        %v3106 = vunpack.c.l.b16 %v2715
        %v3107 = vunpack.c.l.b16 %v2716
        %v3108 = vunpack.c.l.b16 %v2717
        %v3109 = vunpack.c.l.b16 %v2718
        %v3110 = vunpack.c.l.b16 %v2719
        %v3111 = vunpack.c.l.b16 %v2720
        %v3112 = vunpack.c.l.b16 %v2721
        %v3113 = vunpack.c.l.b16 %v2722
        %v3114 = vunpack.c.l.b16 %v2723
        %v3115 = vunpack.c.l.b16 %v2724
        %v3116 = vunpack.c.l.b16 %v2725
        %v3117 = vunpack.c.l.b16 %v2726
        %v3118 = vunpack.c.l.b16 %v2727
        %v3119 = vunpack.c.l.b16 %v2728
        %v3120 = vunpack.c.l.b16 %v2729
        %v3121 = vunpack.c.l.b16 %v2730
        %v3122 = vunpack.c.l.b16 %v2731
        %v3123 = vunpack.c.l.b16 %v2732
        %v3124 = vunpack.c.l.b16 %v2733
        %v3125 = vunpack.c.l.b16 %v2734
        %v3126 = vunpack.c.l.b16 %v2735
        %v3127 = vunpack.c.l.b16 %v2736
        %v3128 = vunpack.c.l.b16 %v2737
        %v3129 = vunpack.c.l.b16 %v2738
        %v3130 = vunpack.c.l.b16 %v2739
        %v3131 = vunpack.c.l.b16 %v2740
        %v3132 = vunpack.c.l.b16 %v2741
        %v3133 = vunpack.c.l.b16 %v2742
        %v3134 = vunpack.c.l.b16 %v2743
        %v3135 = vunpack.c.l.b16 %v2744
        %v3136 = vunpack.c.l.b16 %v2745
        %v3137 = vunpack.c.l.b16 %v2746
        %v3138 = vunpack.c.l.b16 %v2747
        %v3139 = vunpack.c.l.b16 %v2748
        %v3140 = vunpack.c.l.b16 %v2749
        %v3141 = vunpack.c.l.b16 %v2750
        %v3142 = vunpack.c.l.b16 %v2751
        %v3143 = vunpack.c.l.b16 %v2752
        %v3144 = vunpack.c.l.b16 %v2753
        %v3145 = vunpack.c.l.b16 %v2754
        %v3146 = vunpack.c.l.b16 %v2755
        %v3147 = vunpack.c.l.b16 %v2756
        %v3148 = vunpack.c.l.b16 %v2757
        %v3149 = vunpack.c.l.b16 %v2758
        %v3150 = vunpack.c.l.b16 %v2759
        %v3151 = vunpack.c.l.b16 %v2760
        %v3152 = vunpack.c.l.b16 %v2761
        %v3153 = vunpack.c.l.b16 %v2762
        %v3154 = vunpack.c.l.b16 %v2763
        %v3155 = vunpack.c.l.b16 %v2764
        %v3156 = vunpack.c.l.b16 %v2765
        %v3157 = vunpack.c.l.b16 %v2766
        %v3158 = vunpack.c.l.b16 %v2767
        %v3159 = vunpack.c.l.b16 %v2768
        %v3160 = vunpack.c.l.b16 %v2769
        %v3161 = vunpack.c.l.b16 %v2770
        %v3162 = vunpack.c.l.b16 %v2771
        %v3163 = vunpack.c.l.b16 %v2772
        %v3164 = vunpack.c.l.b16 %v2773
        %v3165 = vunpack.c.l.b16 %v2774
        %v3166 = vunpack.c.l.b16 %v2775
        %v3167 = vunpack.c.l.b16 %v2776
        %v3168 = vunpack.c.l.b16 %v2777
        %v3169 = vunpack.c.l.b16 %v2778
        %v3170 = vunpack.c.l.b16 %v2779
        %v3171 = vunpack.c.l.b16 %v2780
        %v3172 = vunpack.c.l.b16 %v2781
        %v3173 = vunpack.c.l.b16 %v2782
        %v3174 = vunpack.c.l.b16 %v2783
        %v3175 = vunpack.c.l.b16 %v2784
        %v3176 = vunpack.c.l.b16 %v2785
        %v3177 = vunpack.c.l.b16 %v2786
        %v3178 = vunpack.c.l.b16 %v2787
        %v3179 = vunpack.c.l.b16 %v2788
        %v3180 = vunpack.c.l.b16 %v2789
        %v3181 = vunpack.c.l.b16 %v2790
        %v3182 = vunpack.c.l.b16 %v2791
        %v3183 = vunpack.c.l.b16 %v2792
        %v3184 = vunpack.c.l.b16 %v2793
        %v3185 = vunpack.c.l.b16 %v2794
        %v3186 = vunpack.c.l.b16 %v2795
        %v3187 = vunpack.c.l.b16 %v2796
        %v3188 = vunpack.c.l.b16 %v2797
        %v3189 = vunpack.c.l.b16 %v2798
        %v3190 = vunpack.c.l.b16 %v2799
        %v3191 = vunpack.c.l.b16 %v2800
        %v3192 = vunpack.c.l.b16 %v2801
        %v3193 = vunpack.c.l.b16 %v2802
        %v3194 = vunpack.c.l.b16 %v2803
        %v3195 = vunpack.c.l.b16 %v2804
        %v3196 = vunpack.c.l.b16 %v2805
        %v3197 = vunpack.c.l.b16 %v2806
        %v3198 = vunpack.c.l.b16 %v2807
        %v3199 = vunpack.c.l.b16 %v2808
        %v3200 = vunpack.c.l.b16 %v2809
        %v3201 = vunpack.c.l.b16 %v2810
        %v3202 = vunpack.c.l.b16 %v2811
        %v3203 = vunpack.c.l.b16 %v2812
        %v3204 = vunpack.c.l.b16 %v2813
        %v3205 = vunpack.c.l.b16 %v2814
        %v3206 = vunpack.c.l.b16 %v2815
        %v3207 = vunpack.c.l.b16 %v2816
        %v3208 = vunpack.c.l.b16 %v2817
        %v3209 = vunpack.c.l.b16 %v2818
        %v3210 = vunpack.c.l.b16 %v2819
        %v3211 = vunpack.c.l.b16 %v2820
        %v3212 = vunpack.c.l.b16 %v2821
        %v3213 = vunpack.c.l.b16 %v2822
        %v3214 = vunpack.c.l.b16 %v2823
        %v3215 = vunpack.c.l.b16 %v2824
        %v3216 = vunpack.c.l.b16 %v2825
        %v3217 = vunpack.c.l.b16 %v2826
        %v3218 = vunpack.c.l.b16 %v2827
        %v3219 = vunpack.c.l.b16 %v2828
        %v3220 = vunpack.c.l.b16 %v2829
        %v3221 = vunpack.c.l.b16 %v2830
        %v3222 = vunpack.c.l.b16 %v2831
        %v3223 = vunpack.c.l.b16 %v2832
        %v3224 = vunpack.c.l.b16 %v2833
        %v3225 = vunpack.c.l.b16 %v2834
        %v3226 = vunpack.c.l.b16 %v2835
        %v3227 = vunpack.c.l.b16 %v2836
        %v3228 = vunpack.c.l.b16 %v2837
        %v3229 = vunpack.c.l.b16 %v2838
        %v3230 = vunpack.c.l.b16 %v2839
        %v3231 = vunpack.c.l.b16 %v2840
        %v3232 = vunpack.c.l.b16 %v2841
        %v3233 = vunpack.c.l.b16 %v2842
        %v3234 = vunpack.c.l.b16 %v2843
        %v3235 = vunpack.c.l.b16 %v2844
        %v3236 = vunpack.c.l.b16 %v2845
        %v3237 = vunpack.c.l.b16 %v2846
        %v3238 = vunpack.c.l.b16 %v2847
        %v3239 = vunpack.c.l.b16 %v2848
        %v3240 = vunpack.c.l.b16 %v2849
        %v3241 = vunpack.c.l.b16 %v2850
        %v3242 = vunpack.c.l.b16 %v2851
        %v3243 = vunpack.c.l.b16 %v2852
        %v3244 = vunpack.c.l.b16 %v2853
        %v3245 = vunpack.c.l.b16 %v2854
        %v3246 = vunpack.c.l.b16 %v2855
        %v3247 = vunpack.c.l.b16 %v2856
        %v3248 = vunpack.c.l.b16 %v2857
        %v3249 = vunpack.c.l.b16 %v2858
        %v3250 = vunpack.c.l.b16 %v2859
        %v3251 = vunpack.c.l.b16 %v2860
        %v3252 = vunpack.c.l.b16 %v2861
        %v3253 = vunpack.c.l.b16 %v2862
        %v3254 = vunpack.c.l.b16 %v2863
        %v3255 = vunpack.c.l.b16 %v2864
        %v3256 = vunpack.c.l.b16 %v2865
        %v3257 = vunpack.c.l.b16 %v2866
        %v3258 = vunpack.c.l.b16 %v2867
        %v3259 = vpack.c.b16 %v3068, %v3067
        %v3260 = vpack.c.b16 %v3070, %v3069
        %v3261 = vpack.c.b16 %v3072, %v3071
        %v3262 = vpack.c.b16 %v3074, %v3073
        %v3263 = vpack.c.b16 %v3076, %v3075
        %v3264 = vpack.c.b16 %v3078, %v3077
        %v3265 = vpack.c.b16 %v3080, %v3079
        %v3266 = vpack.c.b16 %v3082, %v3081
        %v3267 = vpack.c.b16 %v3084, %v3083
        %v3268 = vpack.c.b16 %v3086, %v3085
        %v3269 = vpack.c.b16 %v3088, %v3087
        %v3270 = vpack.c.b16 %v3090, %v3089
        %v3271 = vpack.c.b16 %v3092, %v3091
        %v3272 = vpack.c.b16 %v3094, %v3093
        %v3273 = vpack.c.b16 %v3096, %v3095
        %v3274 = vpack.c.b16 %v3098, %v3097
        %v3275 = vpack.c.b16 %v3100, %v3099
        %v3276 = vpack.c.b16 %v3102, %v3101
        %v3277 = vpack.c.b16 %v3104, %v3103
        %v3278 = vpack.c.b16 %v3106, %v3105
        %v3279 = vpack.c.b16 %v3108, %v3107
        %v3280 = vpack.c.b16 %v3110, %v3109
        %v3281 = vpack.c.b16 %v3112, %v3111
        %v3282 = vpack.c.b16 %v3114, %v3113
        %v3283 = vpack.c.b16 %v3116, %v3115
        %v3284 = vpack.c.b16 %v3118, %v3117
        %v3285 = vpack.c.b16 %v3120, %v3119
        %v3286 = vpack.c.b16 %v3122, %v3121
        %v3287 = vpack.c.b16 %v3124, %v3123
        %v3288 = vpack.c.b16 %v3126, %v3125
        %v3289 = vpack.c.b16 %v3128, %v3127
        %v3290 = vpack.c.b16 %v3130, %v3129
        %v3291 = vpack.c.b16 %v3132, %v3131
        %v3292 = vpack.c.b16 %v3134, %v3133
        %v3293 = vpack.c.b16 %v3136, %v3135
        %v3294 = vpack.c.b16 %v3138, %v3137
        %v3295 = vpack.c.b16 %v3140, %v3139
        %v3296 = vpack.c.b16 %v3142, %v3141
        %v3297 = vpack.c.b16 %v3144, %v3143
        %v3298 = vpack.c.b16 %v3146, %v3145
        %v3299 = vpack.c.b16 %v3148, %v3147
        %v3300 = vpack.c.b16 %v3150, %v3149
        %v3301 = vpack.c.b16 %v3152, %v3151
        %v3302 = vpack.c.b16 %v3154, %v3153
        %v3303 = vpack.c.b16 %v3156, %v3155
        %v3304 = vpack.c.b16 %v3158, %v3157
        %v3305 = vpack.c.b16 %v3160, %v3159
        %v3306 = vpack.c.b16 %v3162, %v3161
        %v3307 = vpack.c.b16 %v3164, %v3163
        %v3308 = vpack.c.b16 %v3166, %v3165
        %v3309 = vpack.c.b16 %v3168, %v3167
        %v3310 = vpack.c.b16 %v3170, %v3169
        %v3311 = vpack.c.b16 %v3172, %v3171
        %v3312 = vpack.c.b16 %v3174, %v3173
        %v3313 = vpack.c.b16 %v3176, %v3175
        %v3314 = vpack.c.b16 %v3178, %v3177
        %v3315 = vpack.c.b16 %v3180, %v3179
        %v3316 = vpack.c.b16 %v3182, %v3181
        %v3317 = vpack.c.b16 %v3184, %v3183
        %v3318 = vpack.c.b16 %v3186, %v3185
        %v3319 = vpack.c.b16 %v3188, %v3187
        %v3320 = vpack.c.b16 %v3190, %v3189
        %v3321 = vpack.c.b16 %v3192, %v3191
        %v3322 = vpack.c.b16 %v3194, %v3193
        %v3323 = vpack.c.b16 %v3196, %v3195
        %v3324 = vpack.c.b16 %v3198, %v3197
        %v3325 = vpack.c.b16 %v3200, %v3199
        %v3326 = vpack.c.b16 %v3202, %v3201
        %v3327 = vpack.c.b16 %v3204, %v3203
        %v3328 = vpack.c.b16 %v3206, %v3205
        %v3329 = vpack.c.b16 %v3208, %v3207
        %v3330 = vpack.c.b16 %v3210, %v3209
        %v3331 = vpack.c.b16 %v3212, %v3211
        %v3332 = vpack.c.b16 %v3214, %v3213
        %v3333 = vpack.c.b16 %v3216, %v3215
        %v3334 = vpack.c.b16 %v3218, %v3217
        %v3335 = vpack.c.b16 %v3220, %v3219
        %v3336 = vpack.c.b16 %v3222, %v3221
        %v3337 = vpack.c.b16 %v3224, %v3223
        %v3338 = vpack.c.b16 %v3226, %v3225
        %v3339 = vpack.c.b16 %v3228, %v3227
        %v3340 = vpack.c.b16 %v3230, %v3229
        %v3341 = vpack.c.b16 %v3232, %v3231
        %v3342 = vpack.c.b16 %v3234, %v3233
        %v3343 = vpack.c.b16 %v3236, %v3235
        %v3344 = vpack.c.b16 %v3238, %v3237
        %v3345 = vpack.c.b16 %v3240, %v3239
        %v3346 = vpack.c.b16 %v3242, %v3241
        %v3347 = vpack.c.b16 %v3244, %v3243
        %v3348 = vpack.c.b16 %v3246, %v3245
        %v3349 = vpack.c.b16 %v3248, %v3247
        %v3350 = vpack.c.b16 %v3250, %v3249
        %v3351 = vpack.c.b16 %v3252, %v3251
        %v3352 = vpack.c.b16 %v3254, %v3253
        %v3353 = vpack.c.b16 %v3256, %v3255
        %v3354 = vpack.c.b16 %v3258, %v3257
        %3451 = vmatprep.subr.bf16.mxu0 0
        %3452 = vmatpush1.bf16.msra.mxu0 %v3266
        %3453 = vmatprep.subr.bf16.mxu0 0
        %3454 = vmatpush1.bf16.msra.mxu0 %v3265
        %3455 = vmatprep.subr.bf16.mxu0 0
        %3456 = vmatpush1.bf16.msra.mxu0 %v3264
        %3457 = vmatprep.subr.bf16.mxu0 0
        %3458 = vmatpush1.bf16.msra.mxu0 %v3263
        %3459 = vmatprep.subr.bf16.mxu0 0
        %3460 = vmatpush1.bf16.msra.mxu0 %v3262
        %3461 = vmatprep.subr.bf16.mxu0 0
        %3462 = vmatpush1.bf16.msra.mxu0 %v3261
        %3463 = vmatprep.subr.bf16.mxu0 0
        %3464 = vmatpush1.bf16.msra.mxu0 %v3260
        %3465 = vmatprep.subr.bf16.mxu0 0
        %3466 = vmatpush1.bf16.msra.mxu0 %v3259
        %3467 = vmatprep.subr.bf16.mxu0 0
        %3468 = vmatpush2.bf16.msra.mxu0 %v3274
        %3469 = vmatprep.subr.bf16.mxu0 0
        %3470 = vmatpush2.bf16.msra.mxu0 %v3273
        %3471 = vmatprep.subr.bf16.mxu0 0
        %3472 = vmatpush2.bf16.msra.mxu0 %v3272
        %3473 = vmatprep.subr.bf16.mxu0 0
        %3474 = vmatpush2.bf16.msra.mxu0 %v3271
        %3475 = vmatprep.subr.bf16.mxu0 0
        %3476 = vmatpush2.bf16.msra.mxu0 %v3270
        %3477 = vmatprep.subr.bf16.mxu0 0
        %3478 = vmatpush2.bf16.msra.mxu0 %v3269
        %3479 = vmatprep.subr.bf16.mxu0 0
        %3480 = vmatpush2.bf16.msra.mxu0 %v3268
        %3481 = vmatprep.subr.bf16.mxu0 0
        %3482 = vmatpush2.bf16.msra.mxu0 %v3267
        %3483 = vmatprep.mubr.bf16.mxu0 %v2665
        %3484 = vmatmul.mubr.bf16.gmra.mxu0 %v2664
        %v3485 = vpop.f32.mrf.mxu0
        %v3486 = vadd.f32 %v2873, %v3485
        %v3487 = vpop.f32.mrf.mxu0
        %v3488 = vpop.f32.mrf.mxu0
        %v3489 = vadd.f32 %v2873, %v3488
        %v3490 = vpop.f32.mrf.mxu0
        %3491 = vdwg.mxu0
        %3492 = vmatprep.subr.bf16.mxu0 0
        %3493 = vmatpush1.bf16.msra.mxu0 %v3282
        %3494 = vmatprep.subr.bf16.mxu0 0
        %3495 = vmatpush1.bf16.msra.mxu0 %v3281
        %3496 = vmatprep.subr.bf16.mxu0 0
        %3497 = vmatpush1.bf16.msra.mxu0 %v3280
        %3498 = vmatprep.subr.bf16.mxu0 0
        %3499 = vmatpush1.bf16.msra.mxu0 %v3279
        %3500 = vmatprep.subr.bf16.mxu0 0
        %3501 = vmatpush1.bf16.msra.mxu0 %v3278
        %3502 = vmatprep.subr.bf16.mxu0 0
        %3503 = vmatpush1.bf16.msra.mxu0 %v3277
        %3504 = vmatprep.subr.bf16.mxu0 0
        %3505 = vmatpush1.bf16.msra.mxu0 %v3276
        %3506 = vmatprep.subr.bf16.mxu0 0
        %3507 = vmatpush1.bf16.msra.mxu0 %v3275
        %3508 = vmatprep.subr.bf16.mxu0 0
        %3509 = vmatpush2.bf16.msra.mxu0 %v3290
        %3510 = vmatprep.subr.bf16.mxu0 0
        %3511 = vmatpush2.bf16.msra.mxu0 %v3289
        %3512 = vmatprep.subr.bf16.mxu0 0
        %3513 = vmatpush2.bf16.msra.mxu0 %v3288
        %3514 = vmatprep.subr.bf16.mxu0 0
        %3515 = vmatpush2.bf16.msra.mxu0 %v3287
        %3516 = vmatprep.subr.bf16.mxu0 0
        %3517 = vmatpush2.bf16.msra.mxu0 %v3286
        %3518 = vmatprep.subr.bf16.mxu0 0
        %3519 = vmatpush2.bf16.msra.mxu0 %v3285
        %3520 = vmatprep.subr.bf16.mxu0 0
        %3521 = vmatpush2.bf16.msra.mxu0 %v3284
        %3522 = vmatprep.subr.bf16.mxu0 0
        %3523 = vmatpush2.bf16.msra.mxu0 %v3283
        %3524 = vmatprep.mubr.bf16.mxu0 %v2667
        %3525 = vmatmul.mubr.bf16.gmra.mxu0 %v2666
        %v3526 = vpop.f32.mrf.mxu0
        %v3527 = vadd.f32 %v3486, %v3526
        %v3528 = vpop.f32.mrf.mxu0
        %v3529 = vpop.f32.mrf.mxu0
        %v3530 = vadd.f32 %v3489, %v3529
        %v3531 = vpop.f32.mrf.mxu0
        %3532 = vdwg.mxu0
        %3533 = vmatprep.subr.bf16.mxu0 0
        %3534 = vmatpush1.bf16.msra.mxu0 %v3298
        %3535 = vmatprep.subr.bf16.mxu0 0
        %3536 = vmatpush1.bf16.msra.mxu0 %v3297
        %3537 = vmatprep.subr.bf16.mxu0 0
        %3538 = vmatpush1.bf16.msra.mxu0 %v3296
        %3539 = vmatprep.subr.bf16.mxu0 0
        %3540 = vmatpush1.bf16.msra.mxu0 %v3295
        %3541 = vmatprep.subr.bf16.mxu0 0
        %3542 = vmatpush1.bf16.msra.mxu0 %v3294
        %3543 = vmatprep.subr.bf16.mxu0 0
        %3544 = vmatpush1.bf16.msra.mxu0 %v3293
        %3545 = vmatprep.subr.bf16.mxu0 0
        %3546 = vmatpush1.bf16.msra.mxu0 %v3292
        %3547 = vmatprep.subr.bf16.mxu0 0
        %3548 = vmatpush1.bf16.msra.mxu0 %v3291
        %3549 = vmatprep.subr.bf16.mxu0 0
        %3550 = vmatpush2.bf16.msra.mxu0 %v3306
        %3551 = vmatprep.subr.bf16.mxu0 0
        %3552 = vmatpush2.bf16.msra.mxu0 %v3305
        %3553 = vmatprep.subr.bf16.mxu0 0
        %3554 = vmatpush2.bf16.msra.mxu0 %v3304
        %3555 = vmatprep.subr.bf16.mxu0 0
        %3556 = vmatpush2.bf16.msra.mxu0 %v3303
        %3557 = vmatprep.subr.bf16.mxu0 0
        %3558 = vmatpush2.bf16.msra.mxu0 %v3302
        %3559 = vmatprep.subr.bf16.mxu0 0
        %3560 = vmatpush2.bf16.msra.mxu0 %v3301
        %3561 = vmatprep.subr.bf16.mxu0 0
        %3562 = vmatpush2.bf16.msra.mxu0 %v3300
        %3563 = vmatprep.subr.bf16.mxu0 0
        %3564 = vmatpush2.bf16.msra.mxu0 %v3299
        %3565 = vmatprep.mubr.bf16.mxu0 %v2669
        %3566 = vmatmul.mubr.bf16.gmra.mxu0 %v2668
        %v3567 = vpop.f32.mrf.mxu0
        %v3568 = vadd.f32 %v3527, %v3567
        %v3569 = vpop.f32.mrf.mxu0
        %v3570 = vpop.f32.mrf.mxu0
        %v3571 = vadd.f32 %v3530, %v3570
        %v3572 = vpop.f32.mrf.mxu0
        %3573 = vdwg.mxu0
        %3574 = vmatprep.subr.bf16.mxu0 0
        %3575 = vmatpush1.bf16.msra.mxu0 %v3314
        %3576 = vmatprep.subr.bf16.mxu0 0
        %3577 = vmatpush1.bf16.msra.mxu0 %v3313
        %3578 = vmatprep.subr.bf16.mxu0 0
        %3579 = vmatpush1.bf16.msra.mxu0 %v3312
        %3580 = vmatprep.subr.bf16.mxu0 0
        %3581 = vmatpush1.bf16.msra.mxu0 %v3311
        %3582 = vmatprep.subr.bf16.mxu0 0
        %3583 = vmatpush1.bf16.msra.mxu0 %v3310
        %3584 = vmatprep.subr.bf16.mxu0 0
        %3585 = vmatpush1.bf16.msra.mxu0 %v3309
        %3586 = vmatprep.subr.bf16.mxu0 0
        %3587 = vmatpush1.bf16.msra.mxu0 %v3308
        %3588 = vmatprep.subr.bf16.mxu0 0
        %3589 = vmatpush1.bf16.msra.mxu0 %v3307
        %3590 = vmatprep.subr.bf16.mxu0 0
        %3591 = vmatpush2.bf16.msra.mxu0 %v3322
        %3592 = vmatprep.subr.bf16.mxu0 0
        %3593 = vmatpush2.bf16.msra.mxu0 %v3321
        %3594 = vmatprep.subr.bf16.mxu0 0
        %3595 = vmatpush2.bf16.msra.mxu0 %v3320
        %3596 = vmatprep.subr.bf16.mxu0 0
        %3597 = vmatpush2.bf16.msra.mxu0 %v3319
        %3598 = vmatprep.subr.bf16.mxu0 0
        %3599 = vmatpush2.bf16.msra.mxu0 %v3318
        %3600 = vmatprep.subr.bf16.mxu0 0
        %3601 = vmatpush2.bf16.msra.mxu0 %v3317
        %3602 = vmatprep.subr.bf16.mxu0 0
        %3603 = vmatpush2.bf16.msra.mxu0 %v3316
        %3604 = vmatprep.subr.bf16.mxu0 0
        %3605 = vmatpush2.bf16.msra.mxu0 %v3315
        %3606 = vmatprep.mubr.bf16.mxu0 %v2671
        %3607 = vmatmul.mubr.bf16.gmra.mxu0 %v2670
        %v3608 = vpop.f32.mrf.mxu0
        %v3609 = vadd.f32 %v3568, %v3608
        %v3610 = vpop.f32.mrf.mxu0
        %v3611 = vpop.f32.mrf.mxu0
        %v3612 = vadd.f32 %v3571, %v3611
        %v3613 = vpop.f32.mrf.mxu0
        %3614 = vdwg.mxu0
        %3615 = vmatprep.subr.bf16.mxu0 0
        %3616 = vmatpush1.bf16.msra.mxu0 %v3330
        %3617 = vmatprep.subr.bf16.mxu0 0
        %3618 = vmatpush1.bf16.msra.mxu0 %v3329
        %3619 = vmatprep.subr.bf16.mxu0 0
        %3620 = vmatpush1.bf16.msra.mxu0 %v3328
        %3621 = vmatprep.subr.bf16.mxu0 0
        %3622 = vmatpush1.bf16.msra.mxu0 %v3327
        %3623 = vmatprep.subr.bf16.mxu0 0
        %3624 = vmatpush1.bf16.msra.mxu0 %v3326
        %3625 = vmatprep.subr.bf16.mxu0 0
        %3626 = vmatpush1.bf16.msra.mxu0 %v3325
        %3627 = vmatprep.subr.bf16.mxu0 0
        %3628 = vmatpush1.bf16.msra.mxu0 %v3324
        %3629 = vmatprep.subr.bf16.mxu0 0
        %3630 = vmatpush1.bf16.msra.mxu0 %v3323
        %3631 = vmatprep.subr.bf16.mxu0 0
        %3632 = vmatpush2.bf16.msra.mxu0 %v3338
        %3633 = vmatprep.subr.bf16.mxu0 0
        %3634 = vmatpush2.bf16.msra.mxu0 %v3337
        %3635 = vmatprep.subr.bf16.mxu0 0
        %3636 = vmatpush2.bf16.msra.mxu0 %v3336
        %3637 = vmatprep.subr.bf16.mxu0 0
        %3638 = vmatpush2.bf16.msra.mxu0 %v3335
        %3639 = vmatprep.subr.bf16.mxu0 0
        %3640 = vmatpush2.bf16.msra.mxu0 %v3334
        %3641 = vmatprep.subr.bf16.mxu0 0
        %3642 = vmatpush2.bf16.msra.mxu0 %v3333
        %3643 = vmatprep.subr.bf16.mxu0 0
        %3644 = vmatpush2.bf16.msra.mxu0 %v3332
        %3645 = vmatprep.subr.bf16.mxu0 0
        %3646 = vmatpush2.bf16.msra.mxu0 %v3331
        %3647 = vmatprep.mubr.bf16.mxu0 %v2673
        %3648 = vmatmul.mubr.bf16.gmra.mxu0 %v2672
        %v3649 = vpop.f32.mrf.mxu0
        %v3650 = vadd.f32 %v3609, %v3649
        %v3651 = vpop.f32.mrf.mxu0
        %v3652 = vpop.f32.mrf.mxu0
        %v3653 = vadd.f32 %v3612, %v3652
        %v3654 = vpop.f32.mrf.mxu0
        %3655 = vdwg.mxu0
        %3656 = vmatprep.subr.bf16.mxu0 0
        %3657 = vmatpush1.bf16.msra.mxu0 %v3346
        %3658 = vmatprep.subr.bf16.mxu0 0
        %3659 = vmatpush1.bf16.msra.mxu0 %v3345
        %3660 = vmatprep.subr.bf16.mxu0 0
        %3661 = vmatpush1.bf16.msra.mxu0 %v3344
        %3662 = vmatprep.subr.bf16.mxu0 0
        %3663 = vmatpush1.bf16.msra.mxu0 %v3343
        %3664 = vmatprep.subr.bf16.mxu0 0
        %3665 = vmatpush1.bf16.msra.mxu0 %v3342
        %3666 = vmatprep.subr.bf16.mxu0 0
        %3667 = vmatpush1.bf16.msra.mxu0 %v3341
        %3668 = vmatprep.subr.bf16.mxu0 0
        %3669 = vmatpush1.bf16.msra.mxu0 %v3340
        %3670 = vmatprep.subr.bf16.mxu0 0
        %3671 = vmatpush1.bf16.msra.mxu0 %v3339
        %3672 = vmatprep.subr.bf16.mxu0 0
        %3673 = vmatpush2.bf16.msra.mxu0 %v3354
        %3674 = vmatprep.subr.bf16.mxu0 0
        %3675 = vmatpush2.bf16.msra.mxu0 %v3353
        %3676 = vmatprep.subr.bf16.mxu0 0
        %3677 = vmatpush2.bf16.msra.mxu0 %v3352
        %3678 = vmatprep.subr.bf16.mxu0 0
        %3679 = vmatpush2.bf16.msra.mxu0 %v3351
        %3680 = vmatprep.subr.bf16.mxu0 0
        %3681 = vmatpush2.bf16.msra.mxu0 %v3350
        %3682 = vmatprep.subr.bf16.mxu0 0
        %3683 = vmatpush2.bf16.msra.mxu0 %v3349
        %3684 = vmatprep.subr.bf16.mxu0 0
        %3685 = vmatpush2.bf16.msra.mxu0 %v3348
        %3686 = vmatprep.subr.bf16.mxu0 0
        %3687 = vmatpush2.bf16.msra.mxu0 %v3347
        %3688 = vmatprep.mubr.bf16.mxu0 %v2675
        %3689 = vmatmul.mubr.bf16.gmra.mxu0 %v2674
        %v3690 = vpop.f32.mrf.mxu0
        %v3691 = vadd.f32 %v3650, %v3690
        %v3692 = vpop.f32.mrf.mxu0
        %v3693 = vpop.f32.mrf.mxu0
        %v3694 = vadd.f32 %v3653, %v3693
        %v3695 = vpop.f32.mrf.mxu0
        %3696 = vdwg.mxu0
        %v3697 = vmax.f32 %v3691, 0.0
        %v3698 = vmax.f32 %v3694, 0.0
        %v3699 = vpack.c.bf16 %v3698, %v3697
        %v3700 = vld [vmem:[%s12] sm:$0xf]
        %v3701 = vld [vmem:[%s12 + $0x4] sm:$0xf]
        %v3702 = vld [vmem:[%s12 + $0x8] sm:$0xf]
        %v3703 = vld [vmem:[%s12 + $0xc] sm:$0xf]
        %v3704 = vld [vmem:[%s12 + $0x10] sm:$0xf]
        %v3705 = vld [vmem:[%s12 + $0x14] sm:$0xf]
        %v3706 = vld [vmem:[%s12 + $0x18] sm:$0xf]
        %v3707 = vld [vmem:[%s12 + $0x1c] sm:$0xf]
        %v3708 = vld [vmem:[%s12 + $0x20] sm:$0xf]
        %v3709 = vld [vmem:[%s12 + $0x24] sm:$0xf]
        %v3710 = vld [vmem:[%s12 + $0x28] sm:$0xf]
        %v3711 = vld [vmem:[%s12 + $0x2c] sm:$0xf]
        %v3712 = vld [vmem:[%s12 + $0x30] sm:$0xf]
        %v3713 = vld [vmem:[%s12 + $0x34] sm:$0xf]
        %v3714 = vld [vmem:[%s12 + $0x38] sm:$0xf]
        %v3715 = vld [vmem:[%s12 + $0x3c] sm:$0xf]
        %v3716 = vld [vmem:[%s13] sm:$0x1]
        %v3718 = vlaneseq
        %v3719 = vshrl.u32 %v3718, 7
        %v3720 = vsub.s32 0, %v3719
        %v3721 = vrot.slane %v3716, %v3720
        %v3739 = vunpack.c.l.b16 %v3700
        %v3740 = vunpack.c.l.b16 %v3701
        %v3741 = vunpack.c.l.b16 %v3702
        %v3742 = vunpack.c.l.b16 %v3703
        %v3743 = vunpack.c.l.b16 %v3704
        %v3744 = vunpack.c.l.b16 %v3705
        %v3745 = vunpack.c.l.b16 %v3706
        %v3746 = vunpack.c.l.b16 %v3707
        %v3747 = vunpack.c.l.b16 %v3708
        %v3748 = vunpack.c.l.b16 %v3709
        %v3749 = vunpack.c.l.b16 %v3710
        %v3750 = vunpack.c.l.b16 %v3711
        %v3751 = vunpack.c.l.b16 %v3712
        %v3752 = vunpack.c.l.b16 %v3713
        %v3753 = vunpack.c.l.b16 %v3714
        %v3754 = vunpack.c.l.b16 %v3715
        %v3755 = vpack.c.b16 %v3740, %v3739
        %v3756 = vpack.c.b16 %v3742, %v3741
        %v3757 = vpack.c.b16 %v3744, %v3743
        %v3758 = vpack.c.b16 %v3746, %v3745
        %v3759 = vpack.c.b16 %v3748, %v3747
        %v3760 = vpack.c.b16 %v3750, %v3749
        %v3761 = vpack.c.b16 %v3752, %v3751
        %v3762 = vpack.c.b16 %v3754, %v3753
        %3771 = vmatprep.subr.bf16.mxu0 0
        %3772 = vmatpush1.bf16.msra.mxu0 %v3762
        %3773 = vmatprep.subr.bf16.mxu0 0
        %3774 = vmatpush1.bf16.msra.mxu0 %v3761
        %3775 = vmatprep.subr.bf16.mxu0 0
        %3776 = vmatpush1.bf16.msra.mxu0 %v3760
        %3777 = vmatprep.subr.bf16.mxu0 0
        %3778 = vmatpush1.bf16.msra.mxu0 %v3759
        %3779 = vmatprep.subr.bf16.mxu0 0
        %3780 = vmatpush1.bf16.msra.mxu0 %v3758
        %3781 = vmatprep.subr.bf16.mxu0 0
        %3782 = vmatpush1.bf16.msra.mxu0 %v3757
        %3783 = vmatprep.subr.bf16.mxu0 0
        %3784 = vmatpush1.bf16.msra.mxu0 %v3756
        %3785 = vmatprep.subr.bf16.mxu0 0
        %3786 = vmatpush1.bf16.msra.mxu0 %v3755
        %3787 = vmatprep.subr.bf16.mxu0 0
        %3788 = vmatpush2.bf16.msra.mxu0 0
        %3789 = vmatprep.subr.bf16.mxu0 0
        %3790 = vmatpush2.bf16.msra.mxu0 0
        %3791 = vmatprep.subr.bf16.mxu0 0
        %3792 = vmatpush2.bf16.msra.mxu0 0
        %3793 = vmatprep.subr.bf16.mxu0 0
        %3794 = vmatpush2.bf16.msra.mxu0 0
        %3795 = vmatprep.subr.bf16.mxu0 0
        %3796 = vmatpush2.bf16.msra.mxu0 0
        %3797 = vmatprep.subr.bf16.mxu0 0
        %3798 = vmatpush2.bf16.msra.mxu0 0
        %3799 = vmatprep.subr.bf16.mxu0 0
        %3800 = vmatpush2.bf16.msra.mxu0 0
        %3801 = vmatprep.subr.bf16.mxu0 0
        %3802 = vmatpush2.bf16.msra.mxu0 0
        %3803 = vmatprep.mubr.bf16.mxu0 0
        %3804 = vmatmul.mubr.bf16.gmra.mxu0 %v3699
        %v3805 = vpop.f32.mrf.mxu0
        %v3806 = vadd.f32 %v3721, %v3805
        %v3807 = vpop.f32.mrf.mxu0
        %v3808 = vpop.f32.mrf.mxu0
        %v3809 = vadd.f32 %v3721, %v3808
        %v3810 = vpop.f32.mrf.mxu0
        %3811 = vdwg.mxu0
        %v3812 = vmax.f32 %v3806, 0.0
        %v3813 = vmax.f32 %v3809, 0.0
        %3814 = vst [vmem:[%s757] sm:$0xff] %v3812
        %3815 = vst [vmem:[%s757 + $0x8] sm:$0xff] %v3813
        %s3816 = sand.u32 %s340, 1
        %s3817 = scalar_lea.sflag [#allocation5], %s3816
        %s3818 = sand.u32 %s340, 1
        %s3819 = smul.addr %s3818, 16
        %s3820 = scalar_lea.vmem [#allocation4], %s3819
        // Predicated region
        $region159: #{duet_v2_distributed.1} parent=149 // pred_check
          %p3821 = pneg %p350
        $region160: #{duet_v2_distributed.1} parent=149 // pred_check_branch
          %3823 = sbr.rel (%p3821) target = $region162
        $region161: #{duet_v2_distributed.1} parent=149 // pred_region
          %s3824 = smul.u32 2, %s28
          %s3826 = ssub.s32 256, 256
          %3827 = vsyncadd %s3817, %s3826
          %s3828 = smul.addr %s3824, 128
          %s3829 = scalar_lea.hbm %s14, %s3828
          %s3830 = sshll.u32 %s3820, 4
          %s3831 = int_to_ptr.vmem [resolvable:$true] %s3830
          %3836 = dma.vmem_to_hbm [thread:$0]  %s3831, 256, %s3829, %s3817, 128, 128, 8
        $region162: #{duet_v2_distributed.1} parent=149 // pred_fallthru
          _
      $region150: #{duet_v2_distributed.1} parent=5 // pred_fallthru
        _
      %p3837 = scmp.le.s32.totalorder 2, %s23
      // Predicated region
      $region163: #{duet_v2_distributed.1} parent=5 // pred_check
        %p3838 = pneg %p3837
      $region164: #{duet_v2_distributed.1} parent=5 // pred_check_branch
        %3840 = sbr.rel (%p3838) target = $region166
      $region165: #{duet_v2_distributed.1} parent=5 // pred_region
        %s3841 = ssub.s32 %s23, 2
        // Predicated region
        $region167: #{duet_v2_distributed.1} parent=165 // pred_check
          %p3842 = pneg %p356
        $region168: #{duet_v2_distributed.1} parent=165 // pred_check_branch
          %3844 = sbr.rel (%p3842) target = $region170
        $region169: #{duet_v2_distributed.1} parent=165 // pred_region
          %s3845 = sand.u32 %s341, 1
          %s3846 = scalar_lea.sflag [#allocation5], %s3845
          %s3847 = sand.u32 %s341, 1
          %s3848 = smul.addr %s3847, 16
          %s3849 = scalar_lea.vmem [#allocation4], %s3848
          %3850 = dma.done %s3846, 256
        $region170: #{duet_v2_distributed.1} parent=165 // pred_fallthru
          _
      $region166: #{duet_v2_distributed.1} parent=5 // pred_fallthru
        _
    $region6: #{duet_v2_distributed.1} parent=1 // loop_footer
      %s27 = sadd.s32 1, %s23
    $region7: #{duet_v2_distributed.1} parent=1 // loop_footer_branch
      %22 = sbr.rel target = $region3
    $region8: #{duet_v2_distributed.1} parent=1 // loop_exit
      _
    %3851 = vsyncpa [#allocation5], 1
    %s3852 = scalar_lea.sflag [#allocation5], 1
    %3853 = vsyncpa %s3852, 1

</llo_original>
